<compile_context>
chip_gen: v7x
topology: tpu7x:2x2x1
jax: 0.10.0
libtpu: 0.0.40
codegen_flags: <defaults>
</compile_context>

<pallas_src>
import functools

import jax
import jax.numpy as jnp
from jax.experimental import pallas as pl
from jax.experimental.pallas import tpu as pltpu

# ---------------------------- static "cfg" ---------------------------------
NUM_CLASSES = 6
CENTER_VARIANCE = 0.1
SIZE_VARIANCE = 0.2
USE_SIGMOID = False                       # cfg.MODEL.BOX_HEAD.USE_SIGMOID
FEATURE_CHANNELS = (32, 64)               # per-level input channels
FEATURE_SIZES = (8, 4)                    # per-level spatial (H == W)
BOXES_PER_LOCATION = (4, 6)               # per-level anchors per cell
BATCH = 2

LANE = 128                                # TPU lane width


def _round_up(x, m):
    return (x + m - 1) // m * m


# ============ fused predictor: im2col 3x3 conv, cls+reg heads ===============
def _fused_head_kernel(p_ref, w_ref, b_ref, o_ref):
    """One feature level (batch folded into rows): single MXU matmul.

    p_ref: (1, Mp, Kp)   im2col patches (zero-padded rows / K columns)
    w_ref: (1, Kp, 128)  fused [cls | reg] weights, zero-padded to 128 lanes
    b_ref: (1, 1, 128)   fused bias, zero-padded
    o_ref: (1, Mp, 128)  lane-dense fused head output
    """
    acc = jnp.dot(p_ref[0], w_ref[0], preferred_element_type=jnp.float32)
    o_ref[0] = acc + b_ref[0]


def fused_head_conv(patches, weights, biases):
    """patches (L, Mp, Kp), weights (L, Kp, 128), biases (L, 1, 128)."""
    L, Mp, Kp = patches.shape
    return pl.pallas_call(
        _fused_head_kernel,
        out_shape=jax.ShapeDtypeStruct((L, Mp, LANE), jnp.float32),
        grid=(L,),
        in_specs=[
            pl.BlockSpec((1, Mp, Kp), lambda l: (l, 0, 0)),
            pl.BlockSpec((1, Kp, LANE), lambda l: (l, 0, 0)),
            pl.BlockSpec((1, 1, LANE), lambda l: (l, 0, 0)),
        ],
        out_specs=pl.BlockSpec((1, Mp, LANE), lambda l: (l, 0, 0)),
        compiler_params=pltpu.CompilerParams(
            dimension_semantics=("parallel",)),     # 2 levels -> 2 TCs on v7x
    )(patches, weights, biases)


def _im2col(x_nhwc):
    """(N,H,W,C) -> (N*H*W, 9*C) patches for a 3x3 SAME / stride-1 conv."""
    N, H, W, C = x_nhwc.shape
    xp = jnp.pad(x_nhwc, ((0, 0), (1, 1), (1, 1), (0, 0)))
    taps = [xp[:, ky:ky + H, kx:kx + W, :]
            for ky in range(3) for kx in range(3)]
    return jnp.concatenate(taps, axis=-1).reshape(N * H * W, 9 * C)


def prepare_level_tensors(features_nchw, params):
    """Stack zero-padded per-level (patches, fused weights, fused biases)."""
    ms, ks, couts = [], [], []
    for x, (wc, _, wr, _) in zip(features_nchw, params):
        N, C, H, W = x.shape
        ms.append(N * H * W)
        ks.append(9 * C)
        couts.append(wc.shape[-1] + wr.shape[-1])
    Mp = _round_up(max(ms), 8)
    Kp = _round_up(max(ks), LANE)
    assert max(couts) <= LANE, "fused head width must fit one 128-lane block"

    p_list, w_list, b_list = [], [], []
    for x_nchw, (wc, bc, wr, br) in zip(features_nchw, params):
        x_nhwc = jnp.transpose(x_nchw, (0, 2, 3, 1))         # NCHW -> NHWC
        patches = _im2col(x_nhwc)                            # (M, K)
        M, K = patches.shape
        p_list.append(jnp.pad(patches, ((0, Mp - M), (0, Kp - K))))

        # HWIO weights -> (9*Cin, Ccls+Creg); zero rows/lanes don't perturb
        # the result, they just keep one uniform MXU tile across levels.
        w = jnp.concatenate([wc, wr], axis=-1).reshape(K, -1)
        w_list.append(jnp.pad(w, ((0, Kp - K), (0, LANE - w.shape[1]))))

        b = jnp.concatenate([bc, br], axis=-1)               # (1, Ccls+Creg)
        b_list.append(jnp.pad(b, ((0, 0), (0, LANE - b.shape[1]))))

    return jnp.stack(p_list), jnp.stack(w_list), jnp.stack(b_list)


# ============== test path: softmax/sigmoid + box decoding ==================
def _decode_kernel(cls_ref, loc_ref, pri_ref, scores_ref, boxes_ref,
                   *, use_sigmoid):
    """Whole batch in one invocation (no grid; arrays are tiny).

    cls_ref : (N, P, num_classes)
    loc_ref : (N, P, 4)   predicted (dx, dy, dw, dh)
    pri_ref : (P, 4)      center-form priors (cx, cy, w, h)
    """
    logits = cls_ref[...]
    if use_sigmoid:
        scores_ref[...] = jax.nn.sigmoid(logits)
    else:
        m = jnp.max(logits, axis=-1, keepdims=True)
        e = jnp.exp(logits - m)                              # EUP
        denom = jnp.sum(e, axis=-1, keepdims=True)
        # EUP approx reciprocal + one Newton step (keeps f32 accuracy).
        r = pl.reciprocal(denom, approx=True)
        r = r * (2.0 - denom * r)
        scores_ref[...] = e * r

    loc = loc_ref[...]                                       # (N, P, 4)
    pri = pri_ref[...]                                       # (P, 4)
    lxy, lwh = loc[..., :2], loc[..., 2:]
    pxy, pwh = pri[None, :, :2], pri[None, :, 2:]
    cxy = lxy * CENTER_VARIANCE * pwh + pxy                  # decoded centers
    wh = jnp.exp(lwh * SIZE_VARIANCE) * pwh                  # decoded sizes
    half = 0.5 * wh
    boxes_ref[...] = jnp.concatenate([cxy - half, cxy + half], axis=-1)


def decode(cls_logits, bbox_pred, priors, use_sigmoid):
    N, P, nc = cls_logits.shape
    return pl.pallas_call(
        functools.partial(_decode_kernel, use_sigmoid=use_sigmoid),
        out_shape=(jax.ShapeDtypeStruct((N, P, nc), jnp.float32),
                   jax.ShapeDtypeStruct((N, P, 4), jnp.float32)),
    )(cls_logits, bbox_pred, priors)


# ============================= glue / params ===============================
def make_params(key):
    params = []
    for cin, bpl in zip(FEATURE_CHANNELS, BOXES_PER_LOCATION):
        key, k1, k2 = jax.random.split(key, 3)
        ccls = bpl * NUM_CLASSES
        creg = bpl * 4
        wc = jax.random.normal(k1, (3, 3, cin, ccls), jnp.float32) * 0.05
        bc = jnp.linspace(-0.1, 0.1, ccls, dtype=jnp.float32).reshape(1, ccls)
        wr = jax.random.normal(k2, (3, 3, cin, creg), jnp.float32) * 0.05
        br = jnp.linspace(-0.05, 0.05, creg, dtype=jnp.float32).reshape(1, creg)
        params.append((wc, bc, wr, br))
    return params


def make_priors():
    """Synthetic PriorBox: center-form priors ordered (h, w, box) per level."""
    all_priors = []
    for fs, bpl in zip(FEATURE_SIZES, BOXES_PER_LOCATION):
        ys, xs = jnp.meshgrid(jnp.arange(fs), jnp.arange(fs), indexing="ij")
        cx = (xs.astype(jnp.float32) + 0.5) / fs
        cy = (ys.astype(jnp.float32) + 0.5) / fs
        per_box = []
        for b in range(bpl):
            s = 0.1 + 0.05 * b
            w = jnp.full((fs, fs), s, jnp.float32)
            h = jnp.full((fs, fs), s * 1.3, jnp.float32)
            per_box.append(jnp.stack([cx, cy, w, h], axis=-1))
        lvl = jnp.stack(per_box, axis=2).reshape(-1, 4)      # (fs*fs*bpl, 4)
        all_priors.append(lvl)
    return jnp.concatenate(all_priors, axis=0)


def ssd_box_head_forward(features_nchw, params, priors):
    """Inference forward (self.training == False).

    features_nchw: list of NCHW feature maps (PyTorch convention).
    Returns ((scores, boxes), cls_logits, bbox_pred).
    """
    N = features_nchw[0].shape[0]

    # Single pallas_call for BOTH feature levels / BOTH conv heads.
    patches, weights, biases = prepare_level_tensors(features_nchw, params)
    head_out = fused_head_conv(patches, weights, biases)     # (L, Mp, 128)

    # Un-pad and reorder to PyTorch's permute(0,2,3,1).view(N,-1,k) layout.
    # Pure layout plumbing -> left to XLA (fused into one tiny fusion).
    cls_list, reg_list = [], []
    for l, (x, bpl) in enumerate(zip(features_nchw, BOXES_PER_LOCATION)):
        _, _, H, W = x.shape
        M = N * H * W
        ccls = bpl * NUM_CLASSES
        creg = bpl * 4
        o = head_out[l, :M, :]                               # (N*H*W, 128)
        cls_list.append(o[:, :ccls].reshape(N, H * W * bpl, NUM_CLASSES))
        reg_list.append(o[:, ccls:ccls + creg].reshape(N, H * W * bpl, 4))

    cls_logits = jnp.concatenate(cls_list, axis=1)           # (N, P, nc)
    bbox_pred = jnp.concatenate(reg_list, axis=1)            # (N, P, 4)

    scores, boxes = decode(cls_logits, bbox_pred, priors, USE_SIGMOID)
    # TODO(synk): PostProcessor (per-image score thresholding + NMS) is
    # data-dependent control flow with no clean Pallas equivalent; returning
    # raw (scores, boxes) detections instead.
    detections = (scores, boxes)
    return detections, cls_logits, bbox_pred


# ------------------------- pure-JAX reference check ------------------------
def _reference(features_nchw, params, priors):
    cls_list, reg_list = [], []
    for x_nchw, (wc, bc, wr, br), bpl in zip(features_nchw, params,
                                             BOXES_PER_LOCATION):
        x_nhwc = jnp.transpose(x_nchw, (0, 2, 3, 1))
        dn = jax.lax.conv_dimension_numbers(x_nhwc.shape, wc.shape,
                                            ("NHWC", "HWIO", "NHWC"))
        c = jax.lax.conv_general_dilated(
            x_nhwc, wc, (1, 1), "SAME", dimension_numbers=dn,
            precision=jax.lax.Precision.HIGHEST) + bc[0]
        r = jax.lax.conv_general_dilated(
            x_nhwc, wr, (1, 1), "SAME", dimension_numbers=dn,
            precision=jax.lax.Precision.HIGHEST) + br[0]
        n, h, w, _ = c.shape
        cls_list.append(c.reshape(n, h * w * bpl, NUM_CLASSES))
        reg_list.append(r.reshape(n, h * w * bpl, 4))
    cls_logits = jnp.concatenate(cls_list, axis=1)
    bbox_pred = jnp.concatenate(reg_list, axis=1)
    scores = (jax.nn.sigmoid(cls_logits) if USE_SIGMOID
              else jax.nn.softmax(cls_logits, axis=2))
    pri = priors[None]
    cxy = bbox_pred[..., :2] * CENTER_VARIANCE * pri[..., 2:] + pri[..., :2]
    wh = jnp.exp(bbox_pred[..., 2:] * SIZE_VARIANCE) * pri[..., 2:]
    boxes = jnp.concatenate([cxy - wh / 2, cxy + wh / 2], axis=-1)
    return scores, boxes, cls_logits, bbox_pred


# ================================== main ===================================
if __name__ == "__main__":
    key = jax.random.PRNGKey(0)
    kf0, kf1, kp = jax.random.split(key, 3)

    features = [
        jax.random.normal(kf0, (BATCH, FEATURE_CHANNELS[0],
                                FEATURE_SIZES[0], FEATURE_SIZES[0]),
                          jnp.float32),
        jax.random.normal(kf1, (BATCH, FEATURE_CHANNELS[1],
                                FEATURE_SIZES[1], FEATURE_SIZES[1]),
                          jnp.float32),
    ]
    params = make_params(kp)
    priors = make_priors()

    forward = jax.jit(ssd_box_head_forward)
    (scores, boxes), cls_logits, bbox_pred = jax.block_until_ready(
        forward(features, params, priors))

    ref_scores, ref_boxes, ref_logits, ref_pred = jax.block_until_ready(
        _reference(features, params, priors))

    P = priors.shape[0]
    assert scores.shape == (BATCH, P, NUM_CLASSES)
    assert boxes.shape == (BATCH, P, 4)
    assert jnp.allclose(cls_logits, ref_logits, atol=1e-3, rtol=1e-3)
    assert jnp.allclose(bbox_pred, ref_pred, atol=1e-3, rtol=1e-3)
    assert jnp.allclose(scores, ref_scores, atol=1e-3, rtol=1e-3)
    assert jnp.allclose(boxes, ref_boxes, atol=1e-3, rtol=1e-3)

    print("KERNEL_OK")
</pallas_src>

<mosaic_0001>
module attributes {stable_mosaic.version = 11 : i64} {
  func.func @_fused_head_kernel(%arg0: i32, %arg1: memref<1x128x640xf32, #tpu.memory_space<vmem>>, %arg2: memref<1x640x128xf32, #tpu.memory_space<vmem>>, %arg3: memref<1x1x128xf32, #tpu.memory_space<vmem>>, %arg4: memref<1x128x128xf32, #tpu.memory_space<vmem>>) attributes {dimension_semantics = [#tpu.dimension_semantics<parallel>], iteration_bounds = array<i64: 2>, scalar_prefetch = 0 : i64, scratch_operands = 0 : i64, tpu.core_type = #tpu.core_type<tc>, window_params = [{transform_indices = @transform_0, window_bounds = array<i64: 1, 128, 640>}, {transform_indices = @transform_1, window_bounds = array<i64: 1, 640, 128>}, {transform_indices = @transform_2, window_bounds = array<i64: 1, 1, 128>}, {transform_indices = @transform_3, window_bounds = array<i64: 1, 128, 128>}]} {
    %c0 = arith.constant 0 : index
    %c0_0 = arith.constant 0 : index
    %c0_1 = arith.constant 0 : index
    %0 = vector.load %arg1[%c0, %c0_0, %c0_1] : memref<1x128x640xf32, #tpu.memory_space<vmem>>, vector<1x128x640xf32>
    %1 = vector.shape_cast %0 : vector<1x128x640xf32> to vector<128x640xf32>
    %c0_2 = arith.constant 0 : index
    %c0_3 = arith.constant 0 : index
    %c0_4 = arith.constant 0 : index
    %2 = vector.load %arg2[%c0_2, %c0_3, %c0_4] : memref<1x640x128xf32, #tpu.memory_space<vmem>>, vector<1x640x128xf32>
    %3 = vector.shape_cast %2 : vector<1x640x128xf32> to vector<640x128xf32>
    %cst = arith.constant dense<0.000000e+00> : vector<128x128xf32>
    %4 = tpu.matmul %1, %3, %cst {dimension_numbers = #tpu.dot_dimension_numbers<[1], [0], [0], [1], [0, 0, 1, 1], [], []>} : vector<128x640xf32>, vector<640x128xf32>, vector<128x128xf32> -> vector<128x128xf32>
    %c0_5 = arith.constant 0 : index
    %c0_6 = arith.constant 0 : index
    %c0_7 = arith.constant 0 : index
    %5 = vector.load %arg3[%c0_5, %c0_6, %c0_7] : memref<1x1x128xf32, #tpu.memory_space<vmem>>, vector<1x1x128xf32>
    %6 = vector.shape_cast %5 : vector<1x1x128xf32> to vector<1x128xf32>
    %7 = vector.broadcast %6 : vector<1x128xf32> to vector<128x128xf32>
    %8 = arith.addf %4, %7 : vector<128x128xf32>
    %c0_8 = arith.constant 0 : index
    %c0_9 = arith.constant 0 : index
    %c0_10 = arith.constant 0 : index
    %9 = vector.load %arg4[%c0_8, %c0_9, %c0_10] : memref<1x128x128xf32, #tpu.memory_space<vmem>>, vector<1x128x128xf32>
    %10 = vector.shape_cast %9 : vector<1x128x128xf32> to vector<128x128xf32>
    %11 = vector.shape_cast %8 : vector<128x128xf32> to vector<1x128x128xf32>
    tpu.vector_store %arg4[%c0_8, %c0_9, %c0_10], %11 {strides = array<i32>} : memref<1x128x128xf32, #tpu.memory_space<vmem>>, vector<1x128x128xf32>,
    return
  }
  func.func @transform_0(%arg0: i32) -> (i32, i32, i32) {
    %c0_i32 = arith.constant 0 : i32
    %c0_i32_0 = arith.constant 0 : i32
    %c0_i32_1 = arith.constant 0 : i32
    return %arg0, %c0_i32, %c0_i32_0 : i32, i32, i32
  }
  func.func @transform_1(%arg0: i32) -> (i32, i32, i32) {
    %c0_i32 = arith.constant 0 : i32
    %c0_i32_0 = arith.constant 0 : i32
    %c0_i32_1 = arith.constant 0 : i32
    return %arg0, %c0_i32, %c0_i32_0 : i32, i32, i32
  }
  func.func @transform_2(%arg0: i32) -> (i32, i32, i32) {
    %c0_i32 = arith.constant 0 : i32
    %c0_i32_0 = arith.constant 0 : i32
    %c0_i32_1 = arith.constant 0 : i32
    return %arg0, %c0_i32, %c0_i32_0 : i32, i32, i32
  }
  func.func @transform_3(%arg0: i32) -> (i32, i32, i32) {
    %c0_i32 = arith.constant 0 : i32
    %c0_i32_0 = arith.constant 0 : i32
    %c0_i32_1 = arith.constant 0 : i32
    return %arg0, %c0_i32, %c0_i32_0 : i32, i32, i32
  }
}

module attributes {stable_mosaic.version = 11 : i64} {
  func.func @_decode_kernel(%arg0: memref<2x352x6xf32, #tpu.memory_space<vmem>>, %arg1: memref<2x352x4xf32, #tpu.memory_space<vmem>>, %arg2: memref<352x4xf32, #tpu.memory_space<vmem>>, %arg3: memref<2x352x6xf32, #tpu.memory_space<vmem>>, %arg4: memref<2x352x4xf32, #tpu.memory_space<vmem>>) attributes {dimension_semantics = [], scalar_prefetch = 0 : i64, scratch_operands = 0 : i64, tpu.core_type = #tpu.core_type<tc>} {
    %c0 = arith.constant 0 : index
    %c0_0 = arith.constant 0 : index
    %c0_1 = arith.constant 0 : index
    %0 = vector.load %arg0[%c0, %c0_0, %c0_1] : memref<2x352x6xf32, #tpu.memory_space<vmem>>, vector<2x352x6xf32>
    %cst = arith.constant dense<0xFF800000> : vector<2x352xf32>
    %1 = vector.multi_reduction <maximumf>, %0, %cst [2] : vector<2x352x6xf32> to vector<2x352xf32>
    %2 = vector.shape_cast %1 : vector<2x352xf32> to vector<2x352x1xf32>
    %3 = vector.broadcast %2 : vector<2x352x1xf32> to vector<2x352x6xf32>
    %4 = arith.subf %0, %3 : vector<2x352x6xf32>
    %5 = math.exp %4 : vector<2x352x6xf32>
    %cst_2 = arith.constant dense<0.000000e+00> : vector<2x352xf32>
    %6 = vector.multi_reduction <add>, %5, %cst_2 [2] : vector<2x352x6xf32> to vector<2x352xf32>
    %7 = vector.shape_cast %6 : vector<2x352xf32> to vector<2x352x1xf32>
    %8 = tpu.reciprocal %7 {approx = true} : vector<2x352x1xf32> -> vector<2x352x1xf32>
    %9 = arith.mulf %7, %8 : vector<2x352x1xf32>
    %cst_3 = arith.constant 2.000000e+00 : f32
    %10 = vector.broadcast %cst_3 : f32 to vector<2x352x1xf32>
    %11 = arith.subf %10, %9 : vector<2x352x1xf32>
    %12 = arith.mulf %8, %11 : vector<2x352x1xf32>
    %13 = vector.broadcast %12 : vector<2x352x1xf32> to vector<2x352x6xf32>
    %14 = arith.mulf %5, %13 : vector<2x352x6xf32>
    %c0_4 = arith.constant 0 : index
    %c0_5 = arith.constant 0 : index
    %c0_6 = arith.constant 0 : index
    %15 = vector.load %arg3[%c0_4, %c0_5, %c0_6] : memref<2x352x6xf32, #tpu.memory_space<vmem>>, vector<2x352x6xf32>
    tpu.vector_store %arg3[%c0_4, %c0_5, %c0_6], %14 {strides = array<i32>} : memref<2x352x6xf32, #tpu.memory_space<vmem>>, vector<2x352x6xf32>,
    %c0_7 = arith.constant 0 : index
    %c0_8 = arith.constant 0 : index
    %c0_9 = arith.constant 0 : index
    %16 = vector.load %arg1[%c0_7, %c0_8, %c0_9] : memref<2x352x4xf32, #tpu.memory_space<vmem>>, vector<2x352x4xf32>
    %c0_10 = arith.constant 0 : index
    %c0_11 = arith.constant 0 : index
    %17 = vector.load %arg2[%c0_10, %c0_11] : memref<352x4xf32, #tpu.memory_space<vmem>>, vector<352x4xf32>
    %18 = vector.extract_strided_slice %16 {offsets = [0, 0, 0], sizes = [2, 352, 2], strides = [1, 1, 1]} : vector<2x352x4xf32> to vector<2x352x2xf32>
    %19 = vector.extract_strided_slice %16 {offsets = [0, 0, 2], sizes = [2, 352, 2], strides = [1, 1, 1]} : vector<2x352x4xf32> to vector<2x352x2xf32>
    %20 = vector.extract_strided_slice %17 {offsets = [0, 0], sizes = [352, 2], strides = [1, 1]} : vector<352x4xf32> to vector<352x2xf32>
    %21 = vector.shape_cast %20 : vector<352x2xf32> to vector<1x352x2xf32>
    %22 = vector.extract_strided_slice %17 {offsets = [0, 2], sizes = [352, 2], strides = [1, 1]} : vector<352x4xf32> to vector<352x2xf32>
    %23 = vector.shape_cast %22 : vector<352x2xf32> to vector<1x352x2xf32>
    %cst_12 = arith.constant 1.000000e-01 : f32
    %24 = vector.broadcast %cst_12 : f32 to vector<2x352x2xf32>
    %25 = arith.mulf %18, %24 : vector<2x352x2xf32>
    %26 = vector.broadcast %23 : vector<1x352x2xf32> to vector<2x352x2xf32>
    %27 = arith.mulf %25, %26 : vector<2x352x2xf32>
    %28 = vector.broadcast %21 : vector<1x352x2xf32> to vector<2x352x2xf32>
    %29 = arith.addf %27, %28 : vector<2x352x2xf32>
    %cst_13 = arith.constant 2.000000e-01 : f32
    %30 = vector.broadcast %cst_13 : f32 to vector<2x352x2xf32>
    %31 = arith.mulf %19, %30 : vector<2x352x2xf32>
    %32 = math.exp %31 : vector<2x352x2xf32>
    %33 = vector.broadcast %23 : vector<1x352x2xf32> to vector<2x352x2xf32>
    %34 = arith.mulf %32, %33 : vector<2x352x2xf32>
    %cst_14 = arith.constant 5.000000e-01 : f32
    %35 = vector.broadcast %cst_14 : f32 to vector<2x352x2xf32>
    %36 = arith.mulf %35, %34 : vector<2x352x2xf32>
    %37 = arith.subf %29, %36 : vector<2x352x2xf32>
    %38 = arith.addf %29, %36 : vector<2x352x2xf32>
    %39 = tpu.concatenate %37, %38 in 2 : vector<2x352x2xf32>, vector<2x352x2xf32> -> vector<2x352x4xf32>
    %c0_15 = arith.constant 0 : index
    %c0_16 = arith.constant 0 : index
    %c0_17 = arith.constant 0 : index
    %40 = vector.load %arg4[%c0_15, %c0_16, %c0_17] : memref<2x352x4xf32, #tpu.memory_space<vmem>>, vector<2x352x4xf32>
    tpu.vector_store %arg4[%c0_15, %c0_16, %c0_17], %39 {strides = array<i32>} : memref<2x352x4xf32, #tpu.memory_space<vmem>>, vector<2x352x4xf32>,
    return
  }
}

</mosaic_0001>

<llo_original>
// kernel: ssd_box_head_forward.2
$region0: #{ssd_box_head_forward.2}
  #allocation0 [shape = 'u32[]', space=smem, size = 0x4, offset = 0x4, fixed_abs, tag = 'smem constant byte address 0x4 - core index']
  #allocation1 [shape = 'u32[144,128]{1,0:T(1,128)}', space=vmem, size = 0x12000, scoped, tag = 'internal scratch']
  %s0 = inlined_call_operand.vmem [shape: f32[2,128,640], index: 0, kind: input, shape index: {}]
  %s1 = inlined_call_operand.vmem [shape: f32[2,640,128], index: 1, kind: input, shape index: {}]
  %s2 = inlined_call_operand.vmem [shape: f32[2,1,128], index: 2, kind: input, shape index: {}]
  %s3 = inlined_call_operand.vmem [shape: f32[2,128,128], index: 3, kind: output, shape index: {}]
  %s4 = sld [smem:[#allocation0]]
  $region45: #{ssd_box_head_forward.2} parent=0
    _
  %s6 = ssub.s32 1, %s4
  %s7 = scalar_select 0, %s6, %s4
  loop: start=0, step=1, limit=4
  $region2: #{ssd_box_head_forward.2} parent=0 // loop_pre_header
    _
  $region3: #{ssd_box_head_forward.2} parent=0 // loop_header
    %s9 = sphi 0, %s13
    %p10 = scmp.ge.s32.totalorder %s9, 4
    %s19 = sphi 0, %s21
    %s22 = sphi 0, %s19
    %s23 = sphi 0, %s22
    %s39 = sphi 0, %s23
    %s45 = sphi 0, %s47
    %s48 = sphi 0, %s45
    %s49 = sphi 0, %s48
    %s65 = sphi 0, %s49
    %s71 = sphi 0, %s73
    %s74 = sphi 0, %s71
    %s75 = sphi 0, %s74
    %s91 = sphi 0, %s75
    %s97 = sphi 0, %s99
    %s100 = sphi 0, %s97
    %s101 = sphi 0, %s100
    %s117 = sphi 0, %s101
  $region4: #{ssd_box_head_forward.2} parent=0 // loop_header_branch
    %12 = sbr.rel (%p10) target = $region8
  $region5: #{ssd_box_head_forward.2} parent=0 // loop_body
    %s14 = ssub.s32 %s9, 1
    %s15 = ssub.s32 %s9, 2
    %s16 = sadd.s32 %s9, 1
    %s17 = ssub.s32 %s9, %s16
    %p18 = scmp.eq.s32.totalorder %s17, 0
    %s20 = sadd.s32 %s19, 1
    %s21 = scalar_select %p18, %s19, %s20
    %p24 = pneg %p18
    %p25 = scmp.eq.s32.totalorder %s9, 1
    %p26 = por %p24, %p25
    %p27 = scmp.ne.s32.totalorder %s19, %s22
    %p28 = scmp.eq.s32.totalorder %s9, 0
    %p29 = por %p27, %p28
    %p30 = scmp.ne.s32.totalorder %s19, %s22
    %p31 = scmp.eq.s32.totalorder %s14, 1
    %p32 = por %p30, %p31
    %p33 = scmp.ne.s32.totalorder %s22, %s23
    %p34 = scmp.eq.s32.totalorder %s14, 0
    %p35 = por %p33, %p34
    %p36 = scmp.ne.s32.totalorder %s22, %s23
    %p37 = scmp.eq.s32.totalorder %s15, 1
    %p38 = por %p36, %p37
    %p40 = scmp.ne.s32.totalorder %s23, %s39
    %p41 = scmp.eq.s32.totalorder %s15, 0
    %p42 = por %p40, %p41
    %s43 = ssub.s32 %s9, %s16
    %p44 = scmp.eq.s32.totalorder %s43, 0
    %s46 = sadd.s32 %s45, 1
    %s47 = scalar_select %p44, %s45, %s46
    %p50 = pneg %p44
    %p51 = scmp.eq.s32.totalorder %s9, 1
    %p52 = por %p50, %p51
    %p53 = scmp.ne.s32.totalorder %s45, %s48
    %p54 = scmp.eq.s32.totalorder %s9, 0
    %p55 = por %p53, %p54
    %p56 = scmp.ne.s32.totalorder %s45, %s48
    %p57 = scmp.eq.s32.totalorder %s14, 1
    %p58 = por %p56, %p57
    %p59 = scmp.ne.s32.totalorder %s48, %s49
    %p60 = scmp.eq.s32.totalorder %s14, 0
    %p61 = por %p59, %p60
    %p62 = scmp.ne.s32.totalorder %s48, %s49
    %p63 = scmp.eq.s32.totalorder %s15, 1
    %p64 = por %p62, %p63
    %p66 = scmp.ne.s32.totalorder %s49, %s65
    %p67 = scmp.eq.s32.totalorder %s15, 0
    %p68 = por %p66, %p67
    %s69 = ssub.s32 %s9, %s16
    %p70 = scmp.eq.s32.totalorder %s69, 0
    %s72 = sadd.s32 %s71, 1
    %s73 = scalar_select %p70, %s71, %s72
    %p76 = pneg %p70
    %p77 = scmp.eq.s32.totalorder %s9, 1
    %p78 = por %p76, %p77
    %p79 = scmp.ne.s32.totalorder %s71, %s74
    %p80 = scmp.eq.s32.totalorder %s9, 0
    %p81 = por %p79, %p80
    %p82 = scmp.ne.s32.totalorder %s71, %s74
    %p83 = scmp.eq.s32.totalorder %s14, 1
    %p84 = por %p82, %p83
    %p85 = scmp.ne.s32.totalorder %s74, %s75
    %p86 = scmp.eq.s32.totalorder %s14, 0
    %p87 = por %p85, %p86
    %p88 = scmp.ne.s32.totalorder %s74, %s75
    %p89 = scmp.eq.s32.totalorder %s15, 1
    %p90 = por %p88, %p89
    %p92 = scmp.ne.s32.totalorder %s75, %s91
    %p93 = scmp.eq.s32.totalorder %s15, 0
    %p94 = por %p92, %p93
    %s95 = ssub.s32 %s9, %s16
    %p96 = scmp.eq.s32.totalorder %s95, 0
    %s98 = sadd.s32 %s97, 1
    %s99 = scalar_select %p96, %s97, %s98
    %p102 = pneg %p96
    %p103 = scmp.eq.s32.totalorder %s9, 1
    %p104 = por %p102, %p103
    %p105 = scmp.ne.s32.totalorder %s97, %s100
    %p106 = scmp.eq.s32.totalorder %s9, 0
    %p107 = por %p105, %p106
    %p108 = scmp.ne.s32.totalorder %s97, %s100
    %p109 = scmp.eq.s32.totalorder %s14, 1
    %p110 = por %p108, %p109
    %p111 = scmp.ne.s32.totalorder %s100, %s101
    %p112 = scmp.eq.s32.totalorder %s14, 0
    %p113 = por %p111, %p112
    %p114 = scmp.ne.s32.totalorder %s100, %s101
    %p115 = scmp.eq.s32.totalorder %s15, 1
    %p116 = por %p114, %p115
    %p118 = scmp.ne.s32.totalorder %s101, %s117
    %p119 = scmp.eq.s32.totalorder %s15, 0
    %p120 = por %p118, %p119
    %p121 = scmp.le.s32.totalorder 1, %s9
    %p122 = scmp.lt.s32.totalorder %s9, 3
    %p123 = pnand %p121, %p122
    %p124 = pneg %p123
    // Predicated region
    $region9: #{ssd_box_head_forward.2} parent=5 // pred_check
      _
    $region10: #{ssd_box_head_forward.2} parent=5 // pred_check_branch
      %126 = sbr.rel (%p123) target = $region12
    $region11: #{ssd_box_head_forward.2} parent=5 // pred_region
      %s127 = ssub.s32 %s9, 1
    $region12: #{ssd_box_head_forward.2} parent=5 // pred_fallthru
      _
    %p128 = scmp.lt.s32.totalorder %s9, 2
    // Predicated region
    $region13: #{ssd_box_head_forward.2} parent=5 // pred_check
      %p129 = pneg %p128
    $region14: #{ssd_box_head_forward.2} parent=5 // pred_check_branch
      %131 = sbr.rel (%p129) target = $region16
    $region15: #{ssd_box_head_forward.2} parent=5 // pred_region
      // Predicated region
      $region17: #{ssd_box_head_forward.2} parent=15 // pred_check
        %p132 = pneg %p29
      $region18: #{ssd_box_head_forward.2} parent=15 // pred_check_branch
        %134 = sbr.rel (%p132) target = $region20
      $region19: #{ssd_box_head_forward.2} parent=15 // pred_region
        %p135 = scmp.lt.s32.totalorder %s9, 1
        %s136 = scalar_select %p135, %s9, 1
        %s137 = smul.addr %s136, 80
        %s138 = smul.addr %s137, 8
        %s139 = scalar_lea.vmem %s0, %s138
      $region20: #{ssd_box_head_forward.2} parent=15 // pred_fallthru
        _
      // Predicated region
      $region21: #{ssd_box_head_forward.2} parent=15 // pred_check
        %p140 = pneg %p55
      $region22: #{ssd_box_head_forward.2} parent=15 // pred_check_branch
        %142 = sbr.rel (%p140) target = $region24
      $region23: #{ssd_box_head_forward.2} parent=15 // pred_region
        %p143 = scmp.lt.s32.totalorder %s9, 1
        %s144 = scalar_select %p143, %s9, 1
        %s145 = smul.addr %s144, 80
        %s146 = smul.addr %s145, 8
        %s147 = scalar_lea.vmem %s1, %s146
      $region24: #{ssd_box_head_forward.2} parent=15 // pred_fallthru
        _
      // Predicated region
      $region25: #{ssd_box_head_forward.2} parent=15 // pred_check
        %p148 = pneg %p81
      $region26: #{ssd_box_head_forward.2} parent=15 // pred_check_branch
        %150 = sbr.rel (%p148) target = $region28
      $region27: #{ssd_box_head_forward.2} parent=15 // pred_region
        %p151 = scmp.lt.s32.totalorder %s9, 1
        %s152 = scalar_select %p151, %s9, 1
        %s153 = scalar_lea.vmem %s2, %s152
      $region28: #{ssd_box_head_forward.2} parent=15 // pred_fallthru
        _
    $region16: #{ssd_box_head_forward.2} parent=5 // pred_fallthru
      _
    %p154 = scmp.le.s32.totalorder 1, %s9
    %p155 = scmp.lt.s32.totalorder %s9, 3
    %p156 = pnand %p154, %p155
    %p157 = pneg %p156
    // Predicated region
    $region29: #{ssd_box_head_forward.2} parent=5 // pred_check
      _
    $region30: #{ssd_box_head_forward.2} parent=5 // pred_check_branch
      %159 = sbr.rel (%p156) target = $region32
    $region31: #{ssd_box_head_forward.2} parent=5 // pred_region
      %s160 = ssub.s32 %s9, 1
      %p161 = scmp.lt.s32.totalorder %s14, 1
      %s162 = scalar_select %p161, %s14, 1
      %s163 = smul.addr %s162, 80
      %s164 = smul.addr %s163, 8
      %s165 = scalar_lea.vmem %s0, %s164
      %p166 = pneg %p35
      %p167 = pneg %p32
      %p168 = scmp.lt.s32.totalorder %s14, 1
      %s169 = scalar_select %p168, %s14, 1
      %s170 = smul.addr %s169, 80
      %s171 = smul.addr %s170, 8
      %s172 = scalar_lea.vmem %s1, %s171
      %p173 = pneg %p61
      %p174 = pneg %p58
      %p175 = scmp.lt.s32.totalorder %s14, 1
      %s176 = scalar_select %p175, %s14, 1
      %s177 = scalar_lea.vmem %s2, %s176
      %p178 = pneg %p87
      %p179 = pneg %p84
      %p180 = pneg %p113
      %p181 = pneg %p110
      %p182 = scmp.lt.s32.totalorder %s14, 1
      %s183 = scalar_select %p182, %s14, 1
      %s184 = smul.addr %s183, 16
      %s185 = smul.addr %s184, 8
      %s186 = scalar_lea.vmem %s3, %s185
      %p187 = scmp.lt.s32.totalorder %s14, 1
      %s188 = scalar_select %p187, %s14, 1
      %s189 = smul.addr %s188, 80
      %s190 = smul.addr %s189, 8
      %s191 = scalar_lea.vmem %s0, %s190
      %p192 = scmp.lt.s32.totalorder %s14, 1
      %s193 = scalar_select %p192, %s14, 1
      %s194 = smul.addr %s193, 80
      %s195 = smul.addr %s194, 8
      %s196 = scalar_lea.vmem %s1, %s195
      %p197 = scmp.lt.s32.totalorder %s14, 1
      %s198 = scalar_select %p197, %s14, 1
      %s199 = scalar_lea.vmem %s2, %s198
      %p200 = scmp.lt.s32.totalorder %s14, 1
      %s201 = scalar_select %p200, %s14, 1
      %s202 = smul.addr %s201, 16
      %s203 = smul.addr %s202, 8
      %s204 = scalar_lea.vmem %s3, %s203
      %v205 = vld [vmem:[%s191] sm:$0xff]
      %v206 = vld [vmem:[%s191 + $0x8] sm:$0xff]
      %v207 = vld [vmem:[%s191 + $0x10] sm:$0xff]
      %v208 = vld [vmem:[%s191 + $0x18] sm:$0xff]
      %v209 = vld [vmem:[%s191 + $0x20] sm:$0xff]
      %v210 = vld [vmem:[%s191 + $0x28] sm:$0xff]
      %v211 = vld [vmem:[%s191 + $0x30] sm:$0xff]
      %v212 = vld [vmem:[%s191 + $0x38] sm:$0xff]
      %v213 = vld [vmem:[%s191 + $0x40] sm:$0xff]
      %v214 = vld [vmem:[%s191 + $0x48] sm:$0xff]
      %v215 = vld [vmem:[%s191 + $0x50] sm:$0xff]
      %v216 = vld [vmem:[%s191 + $0x58] sm:$0xff]
      %v217 = vld [vmem:[%s191 + $0x60] sm:$0xff]
      %v218 = vld [vmem:[%s191 + $0x68] sm:$0xff]
      %v219 = vld [vmem:[%s191 + $0x70] sm:$0xff]
      %v220 = vld [vmem:[%s191 + $0x78] sm:$0xff]
      %v221 = vld [vmem:[%s191 + $0x80] sm:$0xff]
      %v222 = vld [vmem:[%s191 + $0x88] sm:$0xff]
      %v223 = vld [vmem:[%s191 + $0x90] sm:$0xff]
      %v224 = vld [vmem:[%s191 + $0x98] sm:$0xff]
      %v225 = vld [vmem:[%s191 + $0xa0] sm:$0xff]
      %v226 = vld [vmem:[%s191 + $0xa8] sm:$0xff]
      %v227 = vld [vmem:[%s191 + $0xb0] sm:$0xff]
      %v228 = vld [vmem:[%s191 + $0xb8] sm:$0xff]
      %v229 = vld [vmem:[%s191 + $0xc0] sm:$0xff]
      %v230 = vld [vmem:[%s191 + $0xc8] sm:$0xff]
      %v231 = vld [vmem:[%s191 + $0xd0] sm:$0xff]
      %v232 = vld [vmem:[%s191 + $0xd8] sm:$0xff]
      %v233 = vld [vmem:[%s191 + $0xe0] sm:$0xff]
      %v234 = vld [vmem:[%s191 + $0xe8] sm:$0xff]
      %v235 = vld [vmem:[%s191 + $0xf0] sm:$0xff]
      %v236 = vld [vmem:[%s191 + $0xf8] sm:$0xff]
      %v237 = vld [vmem:[%s191 + $0x100] sm:$0xff]
      %v238 = vld [vmem:[%s191 + $0x108] sm:$0xff]
      %v239 = vld [vmem:[%s191 + $0x110] sm:$0xff]
      %v240 = vld [vmem:[%s191 + $0x118] sm:$0xff]
      %v241 = vld [vmem:[%s191 + $0x120] sm:$0xff]
      %v242 = vld [vmem:[%s191 + $0x128] sm:$0xff]
      %v243 = vld [vmem:[%s191 + $0x130] sm:$0xff]
      %v244 = vld [vmem:[%s191 + $0x138] sm:$0xff]
      %v245 = vld [vmem:[%s191 + $0x140] sm:$0xff]
      %v246 = vld [vmem:[%s191 + $0x148] sm:$0xff]
      %v247 = vld [vmem:[%s191 + $0x150] sm:$0xff]
      %v248 = vld [vmem:[%s191 + $0x158] sm:$0xff]
      %v249 = vld [vmem:[%s191 + $0x160] sm:$0xff]
      %v250 = vld [vmem:[%s191 + $0x168] sm:$0xff]
      %v251 = vld [vmem:[%s191 + $0x170] sm:$0xff]
      %v252 = vld [vmem:[%s191 + $0x178] sm:$0xff]
      %v253 = vld [vmem:[%s191 + $0x180] sm:$0xff]
      %v254 = vld [vmem:[%s191 + $0x188] sm:$0xff]
      %v255 = vld [vmem:[%s191 + $0x190] sm:$0xff]
      %v256 = vld [vmem:[%s191 + $0x198] sm:$0xff]
      %v257 = vld [vmem:[%s191 + $0x1a0] sm:$0xff]
      %v258 = vld [vmem:[%s191 + $0x1a8] sm:$0xff]
      %v259 = vld [vmem:[%s191 + $0x1b0] sm:$0xff]
      %v260 = vld [vmem:[%s191 + $0x1b8] sm:$0xff]
      %v261 = vld [vmem:[%s191 + $0x1c0] sm:$0xff]
      %v262 = vld [vmem:[%s191 + $0x1c8] sm:$0xff]
      %v263 = vld [vmem:[%s191 + $0x1d0] sm:$0xff]
      %v264 = vld [vmem:[%s191 + $0x1d8] sm:$0xff]
      %v265 = vld [vmem:[%s191 + $0x1e0] sm:$0xff]
      %v266 = vld [vmem:[%s191 + $0x1e8] sm:$0xff]
      %v267 = vld [vmem:[%s191 + $0x1f0] sm:$0xff]
      %v268 = vld [vmem:[%s191 + $0x1f8] sm:$0xff]
      %v269 = vld [vmem:[%s191 + $0x200] sm:$0xff]
      %v270 = vld [vmem:[%s191 + $0x208] sm:$0xff]
      %v271 = vld [vmem:[%s191 + $0x210] sm:$0xff]
      %v272 = vld [vmem:[%s191 + $0x218] sm:$0xff]
      %v273 = vld [vmem:[%s191 + $0x220] sm:$0xff]
      %v274 = vld [vmem:[%s191 + $0x228] sm:$0xff]
      %v275 = vld [vmem:[%s191 + $0x230] sm:$0xff]
      %v276 = vld [vmem:[%s191 + $0x238] sm:$0xff]
      %v277 = vld [vmem:[%s191 + $0x240] sm:$0xff]
      %v278 = vld [vmem:[%s191 + $0x248] sm:$0xff]
      %v279 = vld [vmem:[%s191 + $0x250] sm:$0xff]
      %v280 = vld [vmem:[%s191 + $0x258] sm:$0xff]
      %v281 = vld [vmem:[%s191 + $0x260] sm:$0xff]
      %v282 = vld [vmem:[%s191 + $0x268] sm:$0xff]
      %v283 = vld [vmem:[%s191 + $0x270] sm:$0xff]
      %v284 = vld [vmem:[%s191 + $0x278] sm:$0xff]
      %v285 = vld [vmem:[%s196] sm:$0xff]
      %v286 = vld [vmem:[%s196 + $0x8] sm:$0xff]
      %v287 = vld [vmem:[%s196 + $0x10] sm:$0xff]
      %v288 = vld [vmem:[%s196 + $0x18] sm:$0xff]
      %v289 = vld [vmem:[%s196 + $0x20] sm:$0xff]
      %v290 = vld [vmem:[%s196 + $0x28] sm:$0xff]
      %v291 = vld [vmem:[%s196 + $0x30] sm:$0xff]
      %v292 = vld [vmem:[%s196 + $0x38] sm:$0xff]
      %v293 = vld [vmem:[%s196 + $0x40] sm:$0xff]
      %v294 = vld [vmem:[%s196 + $0x48] sm:$0xff]
      %v295 = vld [vmem:[%s196 + $0x50] sm:$0xff]
      %v296 = vld [vmem:[%s196 + $0x58] sm:$0xff]
      %v297 = vld [vmem:[%s196 + $0x60] sm:$0xff]
      %v298 = vld [vmem:[%s196 + $0x68] sm:$0xff]
      %v299 = vld [vmem:[%s196 + $0x70] sm:$0xff]
      %v300 = vld [vmem:[%s196 + $0x78] sm:$0xff]
      %v301 = vld [vmem:[%s196 + $0x80] sm:$0xff]
      %v302 = vld [vmem:[%s196 + $0x88] sm:$0xff]
      %v303 = vld [vmem:[%s196 + $0x90] sm:$0xff]
      %v304 = vld [vmem:[%s196 + $0x98] sm:$0xff]
      %v305 = vld [vmem:[%s196 + $0xa0] sm:$0xff]
      %v306 = vld [vmem:[%s196 + $0xa8] sm:$0xff]
      %v307 = vld [vmem:[%s196 + $0xb0] sm:$0xff]
      %v308 = vld [vmem:[%s196 + $0xb8] sm:$0xff]
      %v309 = vld [vmem:[%s196 + $0xc0] sm:$0xff]
      %v310 = vld [vmem:[%s196 + $0xc8] sm:$0xff]
      %v311 = vld [vmem:[%s196 + $0xd0] sm:$0xff]
      %v312 = vld [vmem:[%s196 + $0xd8] sm:$0xff]
      %v313 = vld [vmem:[%s196 + $0xe0] sm:$0xff]
      %v314 = vld [vmem:[%s196 + $0xe8] sm:$0xff]
      %v315 = vld [vmem:[%s196 + $0xf0] sm:$0xff]
      %v316 = vld [vmem:[%s196 + $0xf8] sm:$0xff]
      %v317 = vld [vmem:[%s196 + $0x100] sm:$0xff]
      %v318 = vld [vmem:[%s196 + $0x108] sm:$0xff]
      %v319 = vld [vmem:[%s196 + $0x110] sm:$0xff]
      %v320 = vld [vmem:[%s196 + $0x118] sm:$0xff]
      %v321 = vld [vmem:[%s196 + $0x120] sm:$0xff]
      %v322 = vld [vmem:[%s196 + $0x128] sm:$0xff]
      %v323 = vld [vmem:[%s196 + $0x130] sm:$0xff]
      %v324 = vld [vmem:[%s196 + $0x138] sm:$0xff]
      %v325 = vld [vmem:[%s196 + $0x140] sm:$0xff]
      %v326 = vld [vmem:[%s196 + $0x148] sm:$0xff]
      %v327 = vld [vmem:[%s196 + $0x150] sm:$0xff]
      %v328 = vld [vmem:[%s196 + $0x158] sm:$0xff]
      %v329 = vld [vmem:[%s196 + $0x160] sm:$0xff]
      %v330 = vld [vmem:[%s196 + $0x168] sm:$0xff]
      %v331 = vld [vmem:[%s196 + $0x170] sm:$0xff]
      %v332 = vld [vmem:[%s196 + $0x178] sm:$0xff]
      %v333 = vld [vmem:[%s196 + $0x180] sm:$0xff]
      %v334 = vld [vmem:[%s196 + $0x188] sm:$0xff]
      %v335 = vld [vmem:[%s196 + $0x190] sm:$0xff]
      %v336 = vld [vmem:[%s196 + $0x198] sm:$0xff]
      %v337 = vld [vmem:[%s196 + $0x1a0] sm:$0xff]
      %v338 = vld [vmem:[%s196 + $0x1a8] sm:$0xff]
      %v339 = vld [vmem:[%s196 + $0x1b0] sm:$0xff]
      %v340 = vld [vmem:[%s196 + $0x1b8] sm:$0xff]
      %v341 = vld [vmem:[%s196 + $0x1c0] sm:$0xff]
      %v342 = vld [vmem:[%s196 + $0x1c8] sm:$0xff]
      %v343 = vld [vmem:[%s196 + $0x1d0] sm:$0xff]
      %v344 = vld [vmem:[%s196 + $0x1d8] sm:$0xff]
      %v345 = vld [vmem:[%s196 + $0x1e0] sm:$0xff]
      %v346 = vld [vmem:[%s196 + $0x1e8] sm:$0xff]
      %v347 = vld [vmem:[%s196 + $0x1f0] sm:$0xff]
      %v348 = vld [vmem:[%s196 + $0x1f8] sm:$0xff]
      %v349 = vld [vmem:[%s196 + $0x200] sm:$0xff]
      %v350 = vld [vmem:[%s196 + $0x208] sm:$0xff]
      %v351 = vld [vmem:[%s196 + $0x210] sm:$0xff]
      %v352 = vld [vmem:[%s196 + $0x218] sm:$0xff]
      %v353 = vld [vmem:[%s196 + $0x220] sm:$0xff]
      %v354 = vld [vmem:[%s196 + $0x228] sm:$0xff]
      %v355 = vld [vmem:[%s196 + $0x230] sm:$0xff]
      %v356 = vld [vmem:[%s196 + $0x238] sm:$0xff]
      %v357 = vld [vmem:[%s196 + $0x240] sm:$0xff]
      %v358 = vld [vmem:[%s196 + $0x248] sm:$0xff]
      %v359 = vld [vmem:[%s196 + $0x250] sm:$0xff]
      %v360 = vld [vmem:[%s196 + $0x258] sm:$0xff]
      %v361 = vld [vmem:[%s196 + $0x260] sm:$0xff]
      %v362 = vld [vmem:[%s196 + $0x268] sm:$0xff]
      %v363 = vld [vmem:[%s196 + $0x270] sm:$0xff]
      %v364 = vld [vmem:[%s196 + $0x278] sm:$0xff]
      %v365 = vld [vmem:[%s199] sm:$0x1]
      %v367 = vlaneseq
      %v368 = vshrl.u32 %v367, 7
      %v369 = vsub.s32 0, %v368
      %v370 = vrot.slane %v365, %v369
      %372 = vmatprep.subr.mxu0 0.0
      %373 = vmatpush1.msra.mxu0 %v285
      %374 = vmatprep.subr.mxu0 0.0
      %375 = vmatpush1.msra.mxu0 %v286
      %376 = vmatprep.subr.mxu0 0.0
      %377 = vmatpush1.msra.mxu0 %v287
      %378 = vmatprep.subr.mxu0 0.0
      %379 = vmatpush1.msra.mxu0 %v288
      %380 = vmatprep.subr.mxu0 0.0
      %381 = vmatpush1.msra.mxu0 %v289
      %382 = vmatprep.subr.mxu0 0.0
      %383 = vmatpush1.msra.mxu0 %v290
      %384 = vmatprep.subr.mxu0 0.0
      %385 = vmatpush1.msra.mxu0 %v291
      %386 = vmatprep.subr.mxu0 0.0
      %387 = vmatpush1.msra.mxu0 %v292
      %388 = vmatprep.subr.mxu0 0.0
      %389 = vmatpush1.msra.mxu0 %v293
      %390 = vmatprep.subr.mxu0 0.0
      %391 = vmatpush1.msra.mxu0 %v294
      %392 = vmatprep.subr.mxu0 0.0
      %393 = vmatpush1.msra.mxu0 %v295
      %394 = vmatprep.subr.mxu0 0.0
      %395 = vmatpush1.msra.mxu0 %v296
      %396 = vmatprep.subr.mxu0 0.0
      %397 = vmatpush1.msra.mxu0 %v297
      %398 = vmatprep.subr.mxu0 0.0
      %399 = vmatpush1.msra.mxu0 %v298
      %400 = vmatprep.subr.mxu0 0.0
      %401 = vmatpush1.msra.mxu0 %v299
      %402 = vmatprep.subr.mxu0 0.0
      %403 = vmatpush1.msra.mxu0 %v300
      %404 = vmatprep.subr.mxu0 0.0
      %405 = vmatpush1.msra.mxu0 %v301
      %406 = vmatprep.subr.mxu0 0.0
      %407 = vmatpush1.msra.mxu0 %v302
      %408 = vmatprep.subr.mxu0 0.0
      %409 = vmatpush1.msra.mxu0 %v303
      %410 = vmatprep.subr.mxu0 0.0
      %411 = vmatpush1.msra.mxu0 %v304
      %412 = vmatprep.subr.mxu0 0.0
      %413 = vmatpush1.msra.mxu0 %v305
      %414 = vmatprep.subr.mxu0 0.0
      %415 = vmatpush1.msra.mxu0 %v306
      %416 = vmatprep.subr.mxu0 0.0
      %417 = vmatpush1.msra.mxu0 %v307
      %418 = vmatprep.subr.mxu0 0.0
      %419 = vmatpush1.msra.mxu0 %v308
      %420 = vmatprep.subr.mxu0 0.0
      %421 = vmatpush1.msra.mxu0 %v309
      %422 = vmatprep.subr.mxu0 0.0
      %423 = vmatpush1.msra.mxu0 %v310
      %424 = vmatprep.subr.mxu0 0.0
      %425 = vmatpush1.msra.mxu0 %v311
      %426 = vmatprep.subr.mxu0 0.0
      %427 = vmatpush1.msra.mxu0 %v312
      %428 = vmatprep.subr.mxu0 0.0
      %429 = vmatpush1.msra.mxu0 %v313
      %430 = vmatprep.subr.mxu0 0.0
      %431 = vmatpush1.msra.mxu0 %v314
      %432 = vmatprep.subr.mxu0 0.0
      %433 = vmatpush1.msra.mxu0 %v315
      %434 = vmatprep.subr.mxu0 0.0
      %435 = vmatpush1.msra.mxu0 %v316
      %436 = vmatprep.mubr.f32.mxu0 %v206
      %437 = vmatmul.mubr.f32.gmra.mrb[0].mxu0 %v205
      %v438 = vpop.f32.mrb[0].mxu0
      %v439 = vadd.f32 %v370, %v438
      %v440 = vpop.f32.mrb[0].mxu0
      %441 = vmatprep.mubr.f32.mxu0 %v211
      %442 = vmatmul.mubr.f32.gmra.mrb[0].mxu0 %v210
      %v443 = vpop.f32.mrb[0].mxu0
      %v444 = vadd.f32 %v370, %v443
      %v445 = vpop.f32.mrb[0].mxu0
      %446 = vmatprep.mubr.f32.mxu0 %v216
      %447 = vmatmul.mubr.f32.gmra.mrb[0].mxu0 %v215
      %v448 = vpop.f32.mrb[0].mxu0
      %v449 = vadd.f32 %v370, %v448
      %v450 = vpop.f32.mrb[0].mxu0
      %451 = vmatprep.mubr.f32.mxu0 %v221
      %452 = vmatmul.mubr.f32.gmra.mrb[0].mxu0 %v220
      %v453 = vpop.f32.mrb[0].mxu0
      %v454 = vadd.f32 %v370, %v453
      %v455 = vpop.f32.mrb[0].mxu0
      %456 = vmatprep.mubr.f32.mxu0 %v226
      %457 = vmatmul.mubr.f32.gmra.mrb[0].mxu0 %v225
      %v458 = vpop.f32.mrb[0].mxu0
      %v459 = vadd.f32 %v370, %v458
      %v460 = vpop.f32.mrb[0].mxu0
      %461 = vmatprep.mubr.f32.mxu0 %v231
      %462 = vmatmul.mubr.f32.gmra.mrb[0].mxu0 %v230
      %v463 = vpop.f32.mrb[0].mxu0
      %v464 = vadd.f32 %v370, %v463
      %v465 = vpop.f32.mrb[0].mxu0
      %466 = vmatprep.mubr.f32.mxu0 %v236
      %467 = vmatmul.mubr.f32.gmra.mrb[0].mxu0 %v235
      %v468 = vpop.f32.mrb[0].mxu0
      %v469 = vadd.f32 %v370, %v468
      %v470 = vpop.f32.mrb[0].mxu0
      %471 = vmatprep.mubr.f32.mxu0 %v241
      %472 = vmatmul.mubr.f32.gmra.mrb[0].mxu0 %v240
      %v473 = vpop.f32.mrb[0].mxu0
      %v474 = vadd.f32 %v370, %v473
      %v475 = vpop.f32.mrb[0].mxu0
      %476 = vmatprep.mubr.f32.mxu0 %v246
      %477 = vmatmul.mubr.f32.gmra.mrb[0].mxu0 %v245
      %v478 = vpop.f32.mrb[0].mxu0
      %v479 = vadd.f32 %v370, %v478
      %v480 = vpop.f32.mrb[0].mxu0
      %481 = vmatprep.mubr.f32.mxu0 %v251
      %482 = vmatmul.mubr.f32.gmra.mrb[0].mxu0 %v250
      %v483 = vpop.f32.mrb[0].mxu0
      %v484 = vadd.f32 %v370, %v483
      %v485 = vpop.f32.mrb[0].mxu0
      %486 = vmatprep.mubr.f32.mxu0 %v256
      %487 = vmatmul.mubr.f32.gmra.mrb[0].mxu0 %v255
      %v488 = vpop.f32.mrb[0].mxu0
      %v489 = vadd.f32 %v370, %v488
      %v490 = vpop.f32.mrb[0].mxu0
      %491 = vmatprep.mubr.f32.mxu0 %v261
      %492 = vmatmul.mubr.f32.gmra.mrb[0].mxu0 %v260
      %v493 = vpop.f32.mrb[0].mxu0
      %v494 = vadd.f32 %v370, %v493
      %v495 = vpop.f32.mrb[0].mxu0
      %496 = vmatprep.mubr.f32.mxu0 %v266
      %497 = vmatmul.mubr.f32.gmra.mrb[0].mxu0 %v265
      %v498 = vpop.f32.mrb[0].mxu0
      %v499 = vadd.f32 %v370, %v498
      %v500 = vpop.f32.mrb[0].mxu0
      %501 = vmatprep.mubr.f32.mxu0 %v271
      %502 = vmatmul.mubr.f32.gmra.mrb[0].mxu0 %v270
      %v503 = vpop.f32.mrb[0].mxu0
      %v504 = vadd.f32 %v370, %v503
      %v505 = vpop.f32.mrb[0].mxu0
      %506 = vmatprep.mubr.f32.mxu0 %v276
      %507 = vmatmul.mubr.f32.gmra.mrb[0].mxu0 %v275
      %v508 = vpop.f32.mrb[0].mxu0
      %v509 = vadd.f32 %v370, %v508
      %v510 = vpop.f32.mrb[0].mxu0
      %511 = vmatprep.mubr.f32.mxu0 %v281
      %512 = vmatmul.mubr.f32.gmra.mrb[0].mxu0 %v280
      %v513 = vpop.f32.mrb[0].mxu0
      %v514 = vadd.f32 %v370, %v513
      %v515 = vpop.f32.mrb[0].mxu0
      %516 = vdwg.mxu0
      %517 = vmatprep.subr.mxu0 0.0
      %518 = vmatpush1.msra.mxu0 %v317
      %519 = vmatprep.subr.mxu0 0.0
      %520 = vmatpush1.msra.mxu0 %v318
      %521 = vmatprep.subr.mxu0 0.0
      %522 = vmatpush1.msra.mxu0 %v319
      %523 = vmatprep.subr.mxu0 0.0
      %524 = vmatpush1.msra.mxu0 %v320
      %525 = vmatprep.subr.mxu0 0.0
      %526 = vmatpush1.msra.mxu0 %v321
      %527 = vmatprep.subr.mxu0 0.0
      %528 = vmatpush1.msra.mxu0 %v322
      %529 = vmatprep.subr.mxu0 0.0
      %530 = vmatpush1.msra.mxu0 %v323
      %531 = vmatprep.subr.mxu0 0.0
      %532 = vmatpush1.msra.mxu0 %v324
      %533 = vmatprep.subr.mxu0 0.0
      %534 = vmatpush1.msra.mxu0 %v325
      %535 = vmatprep.subr.mxu0 0.0
      %536 = vmatpush1.msra.mxu0 %v326
      %537 = vmatprep.subr.mxu0 0.0
      %538 = vmatpush1.msra.mxu0 %v327
      %539 = vmatprep.subr.mxu0 0.0
      %540 = vmatpush1.msra.mxu0 %v328
      %541 = vmatprep.subr.mxu0 0.0
      %542 = vmatpush1.msra.mxu0 %v329
      %543 = vmatprep.subr.mxu0 0.0
      %544 = vmatpush1.msra.mxu0 %v330
      %545 = vmatprep.subr.mxu0 0.0
      %546 = vmatpush1.msra.mxu0 %v331
      %547 = vmatprep.subr.mxu0 0.0
      %548 = vmatpush1.msra.mxu0 %v332
      %549 = vmatprep.subr.mxu0 0.0
      %550 = vmatpush1.msra.mxu0 %v333
      %551 = vmatprep.subr.mxu0 0.0
      %552 = vmatpush1.msra.mxu0 %v334
      %553 = vmatprep.subr.mxu0 0.0
      %554 = vmatpush1.msra.mxu0 %v335
      %555 = vmatprep.subr.mxu0 0.0
      %556 = vmatpush1.msra.mxu0 %v336
      %557 = vmatprep.subr.mxu0 0.0
      %558 = vmatpush1.msra.mxu0 %v337
      %559 = vmatprep.subr.mxu0 0.0
      %560 = vmatpush1.msra.mxu0 %v338
      %561 = vmatprep.subr.mxu0 0.0
      %562 = vmatpush1.msra.mxu0 %v339
      %563 = vmatprep.subr.mxu0 0.0
      %564 = vmatpush1.msra.mxu0 %v340
      %565 = vmatprep.subr.mxu0 0.0
      %566 = vmatpush1.msra.mxu0 %v341
      %567 = vmatprep.subr.mxu0 0.0
      %568 = vmatpush1.msra.mxu0 %v342
      %569 = vmatprep.subr.mxu0 0.0
      %570 = vmatpush1.msra.mxu0 %v343
      %571 = vmatprep.subr.mxu0 0.0
      %572 = vmatpush1.msra.mxu0 %v344
      %573 = vmatprep.subr.mxu0 0.0
      %574 = vmatpush1.msra.mxu0 %v345
      %575 = vmatprep.subr.mxu0 0.0
      %576 = vmatpush1.msra.mxu0 %v346
      %577 = vmatprep.subr.mxu0 0.0
      %578 = vmatpush1.msra.mxu0 %v347
      %579 = vmatprep.subr.mxu0 0.0
      %580 = vmatpush1.msra.mxu0 %v348
      %581 = vmatprep.mubr.f32.mxu0 %v208
      %582 = vmatmul.mubr.f32.gmra.mrb[0].mxu0 %v207
      %v583 = vpop.f32.mrb[0].mxu0
      %v584 = vadd.f32 %v439, %v583
      %v585 = vpop.f32.mrb[0].mxu0
      %586 = vmatprep.mubr.f32.mxu0 %v213
      %587 = vmatmul.mubr.f32.gmra.mrb[0].mxu0 %v212
      %v588 = vpop.f32.mrb[0].mxu0
      %v589 = vadd.f32 %v444, %v588
      %v590 = vpop.f32.mrb[0].mxu0
      %591 = vmatprep.mubr.f32.mxu0 %v218
      %592 = vmatmul.mubr.f32.gmra.mrb[0].mxu0 %v217
      %v593 = vpop.f32.mrb[0].mxu0
      %v594 = vadd.f32 %v449, %v593
      %v595 = vpop.f32.mrb[0].mxu0
      %596 = vmatprep.mubr.f32.mxu0 %v223
      %597 = vmatmul.mubr.f32.gmra.mrb[0].mxu0 %v222
      %v598 = vpop.f32.mrb[0].mxu0
      %v599 = vadd.f32 %v454, %v598
      %v600 = vpop.f32.mrb[0].mxu0
      %601 = vmatprep.mubr.f32.mxu0 %v228
      %602 = vmatmul.mubr.f32.gmra.mrb[0].mxu0 %v227
      %v603 = vpop.f32.mrb[0].mxu0
      %v604 = vadd.f32 %v459, %v603
      %v605 = vpop.f32.mrb[0].mxu0
      %606 = vmatprep.mubr.f32.mxu0 %v233
      %607 = vmatmul.mubr.f32.gmra.mrb[0].mxu0 %v232
      %v608 = vpop.f32.mrb[0].mxu0
      %v609 = vadd.f32 %v464, %v608
      %v610 = vpop.f32.mrb[0].mxu0
      %611 = vmatprep.mubr.f32.mxu0 %v238
      %612 = vmatmul.mubr.f32.gmra.mrb[0].mxu0 %v237
      %v613 = vpop.f32.mrb[0].mxu0
      %v614 = vadd.f32 %v469, %v613
      %v615 = vpop.f32.mrb[0].mxu0
      %616 = vmatprep.mubr.f32.mxu0 %v243
      %617 = vmatmul.mubr.f32.gmra.mrb[0].mxu0 %v242
      %v618 = vpop.f32.mrb[0].mxu0
      %v619 = vadd.f32 %v474, %v618
      %v620 = vpop.f32.mrb[0].mxu0
      %621 = vmatprep.mubr.f32.mxu0 %v248
      %622 = vmatmul.mubr.f32.gmra.mrb[0].mxu0 %v247
      %v623 = vpop.f32.mrb[0].mxu0
      %v624 = vadd.f32 %v479, %v623
      %v625 = vpop.f32.mrb[0].mxu0
      %626 = vmatprep.mubr.f32.mxu0 %v253
      %627 = vmatmul.mubr.f32.gmra.mrb[0].mxu0 %v252
      %v628 = vpop.f32.mrb[0].mxu0
      %v629 = vadd.f32 %v484, %v628
      %v630 = vpop.f32.mrb[0].mxu0
      %631 = vmatprep.mubr.f32.mxu0 %v258
      %632 = vmatmul.mubr.f32.gmra.mrb[0].mxu0 %v257
      %v633 = vpop.f32.mrb[0].mxu0
      %v634 = vadd.f32 %v489, %v633
      %v635 = vpop.f32.mrb[0].mxu0
      %636 = vmatprep.mubr.f32.mxu0 %v263
      %637 = vmatmul.mubr.f32.gmra.mrb[0].mxu0 %v262
      %v638 = vpop.f32.mrb[0].mxu0
      %v639 = vadd.f32 %v494, %v638
      %v640 = vpop.f32.mrb[0].mxu0
      %641 = vmatprep.mubr.f32.mxu0 %v268
      %642 = vmatmul.mubr.f32.gmra.mrb[0].mxu0 %v267
      %v643 = vpop.f32.mrb[0].mxu0
      %v644 = vadd.f32 %v499, %v643
      %v645 = vpop.f32.mrb[0].mxu0
      %646 = vmatprep.mubr.f32.mxu0 %v273
      %647 = vmatmul.mubr.f32.gmra.mrb[0].mxu0 %v272
      %v648 = vpop.f32.mrb[0].mxu0
      %v649 = vadd.f32 %v504, %v648
      %v650 = vpop.f32.mrb[0].mxu0
      %651 = vmatprep.mubr.f32.mxu0 %v278
      %652 = vmatmul.mubr.f32.gmra.mrb[0].mxu0 %v277
      %v653 = vpop.f32.mrb[0].mxu0
      %v654 = vadd.f32 %v509, %v653
      %v655 = vpop.f32.mrb[0].mxu0
      %656 = vmatprep.mubr.f32.mxu0 %v283
      %657 = vmatmul.mubr.f32.gmra.mrb[0].mxu0 %v282
      %v658 = vpop.f32.mrb[0].mxu0
      %v659 = vadd.f32 %v514, %v658
      %v660 = vpop.f32.mrb[0].mxu0
      %661 = vdwg.mxu0
      %662 = vmatprep.subr.mxu0 0.0
      %663 = vmatpush1.msra.mxu0 %v349
      %664 = vmatprep.subr.mxu0 0.0
      %665 = vmatpush1.msra.mxu0 %v350
      %666 = vmatprep.subr.mxu0 0.0
      %667 = vmatpush1.msra.mxu0 %v351
      %668 = vmatprep.subr.mxu0 0.0
      %669 = vmatpush1.msra.mxu0 %v352
      %670 = vmatprep.subr.mxu0 0.0
      %671 = vmatpush1.msra.mxu0 %v353
      %672 = vmatprep.subr.mxu0 0.0
      %673 = vmatpush1.msra.mxu0 %v354
      %674 = vmatprep.subr.mxu0 0.0
      %675 = vmatpush1.msra.mxu0 %v355
      %676 = vmatprep.subr.mxu0 0.0
      %677 = vmatpush1.msra.mxu0 %v356
      %678 = vmatprep.subr.mxu0 0.0
      %679 = vmatpush1.msra.mxu0 %v357
      %680 = vmatprep.subr.mxu0 0.0
      %681 = vmatpush1.msra.mxu0 %v358
      %682 = vmatprep.subr.mxu0 0.0
      %683 = vmatpush1.msra.mxu0 %v359
      %684 = vmatprep.subr.mxu0 0.0
      %685 = vmatpush1.msra.mxu0 %v360
      %686 = vmatprep.subr.mxu0 0.0
      %687 = vmatpush1.msra.mxu0 %v361
      %688 = vmatprep.subr.mxu0 0.0
      %689 = vmatpush1.msra.mxu0 %v362
      %690 = vmatprep.subr.mxu0 0.0
      %691 = vmatpush1.msra.mxu0 %v363
      %692 = vmatprep.subr.mxu0 0.0
      %693 = vmatpush1.msra.mxu0 %v364
      %694 = vmatprep.subr.mxu0 0.0
      %695 = vmatpush1.msra.mxu0 0.0
      %696 = vmatprep.subr.mxu0 0.0
      %697 = vmatpush1.msra.mxu0 0.0
      %698 = vmatprep.subr.mxu0 0.0
      %699 = vmatpush1.msra.mxu0 0.0
      %700 = vmatprep.subr.mxu0 0.0
      %701 = vmatpush1.msra.mxu0 0.0
      %702 = vmatprep.subr.mxu0 0.0
      %703 = vmatpush1.msra.mxu0 0.0
      %704 = vmatprep.subr.mxu0 0.0
      %705 = vmatpush1.msra.mxu0 0.0
      %706 = vmatprep.subr.mxu0 0.0
      %707 = vmatpush1.msra.mxu0 0.0
      %708 = vmatprep.subr.mxu0 0.0
      %709 = vmatpush1.msra.mxu0 0.0
      %710 = vmatprep.subr.mxu0 0.0
      %711 = vmatpush1.msra.mxu0 0.0
      %712 = vmatprep.subr.mxu0 0.0
      %713 = vmatpush1.msra.mxu0 0.0
      %714 = vmatprep.subr.mxu0 0.0
      %715 = vmatpush1.msra.mxu0 0.0
      %716 = vmatprep.subr.mxu0 0.0
      %717 = vmatpush1.msra.mxu0 0.0
      %718 = vmatprep.subr.mxu0 0.0
      %719 = vmatpush1.msra.mxu0 0.0
      %720 = vmatprep.subr.mxu0 0.0
      %721 = vmatpush1.msra.mxu0 0.0
      %722 = vmatprep.subr.mxu0 0.0
      %723 = vmatpush1.msra.mxu0 0.0
      %724 = vmatprep.subr.mxu0 0.0
      %725 = vmatpush1.msra.mxu0 0.0
      %726 = vmatprep.mubr.f32.mxu0 0.0
      %727 = vmatmul.mubr.f32.gmra.mrb[0].mxu0 %v209
      %v728 = vpop.f32.mrb[0].mxu0
      %v729 = vadd.f32 %v584, %v728
      %v730 = vpop.f32.mrb[0].mxu0
      %731 = vmatprep.mubr.f32.mxu0 0.0
      %732 = vmatmul.mubr.f32.gmra.mrb[0].mxu0 %v214
      %v733 = vpop.f32.mrb[0].mxu0
      %v734 = vadd.f32 %v589, %v733
      %v735 = vpop.f32.mrb[0].mxu0
      %736 = vmatprep.mubr.f32.mxu0 0.0
      %737 = vmatmul.mubr.f32.gmra.mrb[0].mxu0 %v219
      %v738 = vpop.f32.mrb[0].mxu0
      %v739 = vadd.f32 %v594, %v738
      %v740 = vpop.f32.mrb[0].mxu0
      %741 = vmatprep.mubr.f32.mxu0 0.0
      %742 = vmatmul.mubr.f32.gmra.mrb[0].mxu0 %v224
      %v743 = vpop.f32.mrb[0].mxu0
      %v744 = vadd.f32 %v599, %v743
      %v745 = vpop.f32.mrb[0].mxu0
      %746 = vmatprep.mubr.f32.mxu0 0.0
      %747 = vmatmul.mubr.f32.gmra.mrb[0].mxu0 %v229
      %v748 = vpop.f32.mrb[0].mxu0
      %v749 = vadd.f32 %v604, %v748
      %v750 = vpop.f32.mrb[0].mxu0
      %751 = vmatprep.mubr.f32.mxu0 0.0
      %752 = vmatmul.mubr.f32.gmra.mrb[0].mxu0 %v234
      %v753 = vpop.f32.mrb[0].mxu0
      %v754 = vadd.f32 %v609, %v753
      %v755 = vpop.f32.mrb[0].mxu0
      %756 = vmatprep.mubr.f32.mxu0 0.0
      %757 = vmatmul.mubr.f32.gmra.mrb[0].mxu0 %v239
      %v758 = vpop.f32.mrb[0].mxu0
      %v759 = vadd.f32 %v614, %v758
      %v760 = vpop.f32.mrb[0].mxu0
      %761 = vmatprep.mubr.f32.mxu0 0.0
      %762 = vmatmul.mubr.f32.gmra.mrb[0].mxu0 %v244
      %v763 = vpop.f32.mrb[0].mxu0
      %v764 = vadd.f32 %v619, %v763
      %v765 = vpop.f32.mrb[0].mxu0
      %766 = vmatprep.mubr.f32.mxu0 0.0
      %767 = vmatmul.mubr.f32.gmra.mrb[0].mxu0 %v249
      %v768 = vpop.f32.mrb[0].mxu0
      %v769 = vadd.f32 %v624, %v768
      %v770 = vpop.f32.mrb[0].mxu0
      %771 = vmatprep.mubr.f32.mxu0 0.0
      %772 = vmatmul.mubr.f32.gmra.mrb[0].mxu0 %v254
      %v773 = vpop.f32.mrb[0].mxu0
      %v774 = vadd.f32 %v629, %v773
      %v775 = vpop.f32.mrb[0].mxu0
      %776 = vmatprep.mubr.f32.mxu0 0.0
      %777 = vmatmul.mubr.f32.gmra.mrb[0].mxu0 %v259
      %v778 = vpop.f32.mrb[0].mxu0
      %v779 = vadd.f32 %v634, %v778
      %v780 = vpop.f32.mrb[0].mxu0
      %781 = vmatprep.mubr.f32.mxu0 0.0
      %782 = vmatmul.mubr.f32.gmra.mrb[0].mxu0 %v264
      %v783 = vpop.f32.mrb[0].mxu0
      %v784 = vadd.f32 %v639, %v783
      %v785 = vpop.f32.mrb[0].mxu0
      %786 = vmatprep.mubr.f32.mxu0 0.0
      %787 = vmatmul.mubr.f32.gmra.mrb[0].mxu0 %v269
      %v788 = vpop.f32.mrb[0].mxu0
      %v789 = vadd.f32 %v644, %v788
      %v790 = vpop.f32.mrb[0].mxu0
      %791 = vmatprep.mubr.f32.mxu0 0.0
      %792 = vmatmul.mubr.f32.gmra.mrb[0].mxu0 %v274
      %v793 = vpop.f32.mrb[0].mxu0
      %v794 = vadd.f32 %v649, %v793
      %v795 = vpop.f32.mrb[0].mxu0
      %796 = vmatprep.mubr.f32.mxu0 0.0
      %797 = vmatmul.mubr.f32.gmra.mrb[0].mxu0 %v279
      %v798 = vpop.f32.mrb[0].mxu0
      %v799 = vadd.f32 %v654, %v798
      %v800 = vpop.f32.mrb[0].mxu0
      %801 = vmatprep.mubr.f32.mxu0 0.0
      %802 = vmatmul.mubr.f32.gmra.mrb[0].mxu0 %v284
      %v803 = vpop.f32.mrb[0].mxu0
      %v804 = vadd.f32 %v659, %v803
      %v805 = vpop.f32.mrb[0].mxu0
      %806 = vdwg.mxu0
      %807 = vst [vmem:[%s204] sm:$0xff] %v729
      %808 = vst [vmem:[%s204 + $0x8] sm:$0xff] %v734
      %809 = vst [vmem:[%s204 + $0x10] sm:$0xff] %v739
      %810 = vst [vmem:[%s204 + $0x18] sm:$0xff] %v744
      %811 = vst [vmem:[%s204 + $0x20] sm:$0xff] %v749
      %812 = vst [vmem:[%s204 + $0x28] sm:$0xff] %v754
      %813 = vst [vmem:[%s204 + $0x30] sm:$0xff] %v759
      %814 = vst [vmem:[%s204 + $0x38] sm:$0xff] %v764
      %815 = vst [vmem:[%s204 + $0x40] sm:$0xff] %v769
      %816 = vst [vmem:[%s204 + $0x48] sm:$0xff] %v774
      %817 = vst [vmem:[%s204 + $0x50] sm:$0xff] %v779
      %818 = vst [vmem:[%s204 + $0x58] sm:$0xff] %v784
      %819 = vst [vmem:[%s204 + $0x60] sm:$0xff] %v789
      %820 = vst [vmem:[%s204 + $0x68] sm:$0xff] %v794
      %821 = vst [vmem:[%s204 + $0x70] sm:$0xff] %v799
      %822 = vst [vmem:[%s204 + $0x78] sm:$0xff] %v804
      %p823 = scmp.lt.s32.totalorder %s14, 1
      %s824 = scalar_select %p823, %s14, 1
      %s825 = smul.addr %s824, 16
      %s826 = smul.addr %s825, 8
      %s827 = scalar_lea.vmem %s3, %s826
      // Predicated region
      $region33: #{ssd_box_head_forward.2} parent=31 // pred_check
        %p828 = pneg %p110
      $region34: #{ssd_box_head_forward.2} parent=31 // pred_check_branch
        %830 = sbr.rel (%p828) target = $region36
      $region35: #{ssd_box_head_forward.2} parent=31 // pred_region
        _
      $region36: #{ssd_box_head_forward.2} parent=31 // pred_fallthru
        _
    $region32: #{ssd_box_head_forward.2} parent=5 // pred_fallthru
      _
    %p831 = scmp.le.s32.totalorder 2, %s9
    // Predicated region
    $region37: #{ssd_box_head_forward.2} parent=5 // pred_check
      %p832 = pneg %p831
    $region38: #{ssd_box_head_forward.2} parent=5 // pred_check_branch
      %834 = sbr.rel (%p832) target = $region40
    $region39: #{ssd_box_head_forward.2} parent=5 // pred_region
      %s835 = ssub.s32 %s9, 2
      // Predicated region
      $region41: #{ssd_box_head_forward.2} parent=39 // pred_check
        %p836 = pneg %p116
      $region42: #{ssd_box_head_forward.2} parent=39 // pred_check_branch
        %838 = sbr.rel (%p836) target = $region44
      $region43: #{ssd_box_head_forward.2} parent=39 // pred_region
        %p839 = scmp.lt.s32.totalorder %s15, 1
        %s840 = scalar_select %p839, %s15, 1
        %s841 = smul.addr %s840, 16
        %s842 = smul.addr %s841, 8
        %s843 = scalar_lea.vmem %s3, %s842
      $region44: #{ssd_box_head_forward.2} parent=39 // pred_fallthru
        _
    $region40: #{ssd_box_head_forward.2} parent=5 // pred_fallthru
      _
  $region6: #{ssd_box_head_forward.2} parent=0 // loop_footer
    %s13 = sadd.s32 1, %s9
  $region7: #{ssd_box_head_forward.2} parent=0 // loop_footer_branch
    %8 = sbr.rel target = $region3
  $region8: #{ssd_box_head_forward.2} parent=0 // loop_exit
    _

// kernel: ssd_box_head_forward.3
$region0: #{ssd_box_head_forward.3}
  #allocation0 [shape = 'u32[]', space=smem, size = 0x4, offset = 0x4, fixed_abs, tag = 'smem constant byte address 0x4 - core index']
  #allocation1 [shape = 'u32[144,128]{1,0:T(1,128)}', space=vmem, size = 0x12000, scoped, tag = 'internal scratch']
  %s0 = inlined_call_operand.vmem [shape: f32[2,352,6], index: 0, kind: input, shape index: {}]
  %s1 = inlined_call_operand.vmem [shape: f32[2,352,4], index: 1, kind: input, shape index: {}]
  %s2 = inlined_call_operand.vmem [shape: f32[352,4], index: 2, kind: input, shape index: {}]
  %s3 = inlined_call_operand.vmem [shape: f32[2,352,6], index: 3, kind: output, shape index: {0}]
  %s4 = inlined_call_operand.vmem [shape: f32[2,352,4], index: 4, kind: output, shape index: {1}]
  %5 = xla_tuple %s3, %s4
  %s6 = sld [smem:[#allocation0]]
  $region30: #{ssd_box_head_forward.3} parent=0
    _
  %s8 = ssub.s32 1, %s6
  %s9 = scalar_select 0, %s8, %s6
  // Predicated region
  $region2: #{ssd_box_head_forward.3} parent=0 // pred_check
    _
  $region3: #{ssd_box_head_forward.3} parent=0 // pred_check_branch
    %11 = sbr.rel (0) target = $region5
  $region4: #{ssd_box_head_forward.3} parent=0 // pred_region
    _
  $region5: #{ssd_box_head_forward.3} parent=0 // pred_fallthru
    _
  // Predicated region
  $region6: #{ssd_box_head_forward.3} parent=0 // pred_check
    _
  $region7: #{ssd_box_head_forward.3} parent=0 // pred_check_branch
    %13 = sbr.rel (0) target = $region9
  $region8: #{ssd_box_head_forward.3} parent=0 // pred_region
    _
  $region9: #{ssd_box_head_forward.3} parent=0 // pred_fallthru
    _
  // Predicated region
  $region10: #{ssd_box_head_forward.3} parent=0 // pred_check
    _
  $region11: #{ssd_box_head_forward.3} parent=0 // pred_check_branch
    %15 = sbr.rel (0) target = $region13
  $region12: #{ssd_box_head_forward.3} parent=0 // pred_region
    _
  $region13: #{ssd_box_head_forward.3} parent=0 // pred_fallthru
    _
  %v16 = vld [vmem:[%s0] sm:$0xff]
  %v17 = vld [vmem:[%s0 + $0x8] sm:$0xff]
  %v18 = vld [vmem:[%s0 + $0x10] sm:$0xff]
  %v19 = vld [vmem:[%s0 + $0x18] sm:$0xff]
  %v20 = vld [vmem:[%s0 + $0x20] sm:$0xff]
  %v21 = vld [vmem:[%s0 + $0x28] sm:$0xff]
  %v22 = vld [vmem:[%s0 + $0x30] sm:$0xff]
  %v23 = vld [vmem:[%s0 + $0x38] sm:$0xff]
  %v24 = vld [vmem:[%s0 + $0x40] sm:$0xff]
  %v25 = vld [vmem:[%s0 + $0x48] sm:$0xff]
  %v26 = vld [vmem:[%s0 + $0x50] sm:$0xff]
  %v27 = vld [vmem:[%s0 + $0x58] sm:$0xff]
  %v28 = vld [vmem:[%s0 + $0x60] sm:$0xff]
  %v29 = vld [vmem:[%s0 + $0x68] sm:$0xff]
  %v30 = vld [vmem:[%s0 + $0x70] sm:$0xff]
  %v31 = vld [vmem:[%s0 + $0x78] sm:$0xff]
  %v32 = vld [vmem:[%s0 + $0x80] sm:$0xff]
  %v33 = vld [vmem:[%s0 + $0x88] sm:$0xff]
  %v34 = vld [vmem:[%s0 + $0x90] sm:$0xff]
  %v35 = vld [vmem:[%s0 + $0x98] sm:$0xff]
  %v36 = vld [vmem:[%s0 + $0xa0] sm:$0xff]
  %v37 = vld [vmem:[%s0 + $0xa8] sm:$0xff]
  %v38 = vld [vmem:[%s0 + $0xb0] sm:$0xff]
  %v39 = vld [vmem:[%s0 + $0xb8] sm:$0xff]
  %v40 = vld [vmem:[%s0 + $0xc0] sm:$0xff]
  %v41 = vld [vmem:[%s0 + $0xc8] sm:$0xff]
  %v42 = vld [vmem:[%s0 + $0xd0] sm:$0xff]
  %v43 = vld [vmem:[%s0 + $0xd8] sm:$0xff]
  %v44 = vld [vmem:[%s0 + $0xe0] sm:$0xff]
  %v45 = vld [vmem:[%s0 + $0xe8] sm:$0xff]
  %v46 = vld [vmem:[%s0 + $0xf0] sm:$0xff]
  %v47 = vld [vmem:[%s0 + $0xf8] sm:$0xff]
  %v48 = vld [vmem:[%s0 + $0x100] sm:$0xff]
  %v49 = vld [vmem:[%s0 + $0x108] sm:$0xff]
  %v50 = vld [vmem:[%s0 + $0x110] sm:$0xff]
  %v51 = vld [vmem:[%s0 + $0x118] sm:$0xff]
  %v52 = vld [vmem:[%s0 + $0x120] sm:$0xff]
  %v53 = vld [vmem:[%s0 + $0x128] sm:$0xff]
  %v54 = vld [vmem:[%s0 + $0x130] sm:$0xff]
  %v55 = vld [vmem:[%s0 + $0x138] sm:$0xff]
  %v56 = vld [vmem:[%s0 + $0x140] sm:$0xff]
  %v57 = vld [vmem:[%s0 + $0x148] sm:$0xff]
  %v58 = vld [vmem:[%s0 + $0x150] sm:$0xff]
  %v59 = vld [vmem:[%s0 + $0x158] sm:$0xff]
  %v60 = vld [vmem:[%s0 + $0x160] sm:$0xff]
  %v61 = vld [vmem:[%s0 + $0x168] sm:$0xff]
  %v62 = vld [vmem:[%s0 + $0x170] sm:$0xff]
  %v63 = vld [vmem:[%s0 + $0x178] sm:$0xff]
  %v64 = vld [vmem:[%s0 + $0x180] sm:$0xff]
  %v65 = vld [vmem:[%s0 + $0x188] sm:$0xff]
  %v66 = vld [vmem:[%s0 + $0x190] sm:$0xff]
  %v67 = vld [vmem:[%s0 + $0x198] sm:$0xff]
  %v68 = vld [vmem:[%s0 + $0x1a0] sm:$0xff]
  %v69 = vld [vmem:[%s0 + $0x1a8] sm:$0xff]
  %v70 = vld [vmem:[%s0 + $0x1b0] sm:$0xff]
  %v71 = vld [vmem:[%s0 + $0x1b8] sm:$0xff]
  %v72 = vld [vmem:[%s0 + $0x1c0] sm:$0xff]
  %v73 = vld [vmem:[%s0 + $0x1c8] sm:$0xff]
  %v74 = vld [vmem:[%s0 + $0x1d0] sm:$0xff]
  %v75 = vld [vmem:[%s0 + $0x1d8] sm:$0xff]
  %v76 = vld [vmem:[%s0 + $0x1e0] sm:$0xff]
  %v77 = vld [vmem:[%s0 + $0x1e8] sm:$0xff]
  %v78 = vld [vmem:[%s0 + $0x1f0] sm:$0xff]
  %v79 = vld [vmem:[%s0 + $0x1f8] sm:$0xff]
  %v80 = vld [vmem:[%s0 + $0x200] sm:$0xff]
  %v81 = vld [vmem:[%s0 + $0x208] sm:$0xff]
  %v82 = vld [vmem:[%s0 + $0x210] sm:$0xff]
  %v83 = vld [vmem:[%s0 + $0x218] sm:$0xff]
  %v84 = vld [vmem:[%s0 + $0x220] sm:$0xff]
  %v85 = vld [vmem:[%s0 + $0x228] sm:$0xff]
  %v86 = vld [vmem:[%s0 + $0x230] sm:$0xff]
  %v87 = vld [vmem:[%s0 + $0x238] sm:$0xff]
  %v88 = vld [vmem:[%s0 + $0x240] sm:$0xff]
  %v89 = vld [vmem:[%s0 + $0x248] sm:$0xff]
  %v90 = vld [vmem:[%s0 + $0x250] sm:$0xff]
  %v91 = vld [vmem:[%s0 + $0x258] sm:$0xff]
  %v92 = vld [vmem:[%s0 + $0x260] sm:$0xff]
  %v93 = vld [vmem:[%s0 + $0x268] sm:$0xff]
  %v94 = vld [vmem:[%s0 + $0x270] sm:$0xff]
  %v95 = vld [vmem:[%s0 + $0x278] sm:$0xff]
  %v96 = vld [vmem:[%s0 + $0x280] sm:$0xff]
  %v97 = vld [vmem:[%s0 + $0x288] sm:$0xff]
  %v98 = vld [vmem:[%s0 + $0x290] sm:$0xff]
  %v99 = vld [vmem:[%s0 + $0x298] sm:$0xff]
  %v100 = vld [vmem:[%s0 + $0x2a0] sm:$0xff]
  %v101 = vld [vmem:[%s0 + $0x2a8] sm:$0xff]
  %v102 = vld [vmem:[%s0 + $0x2b0] sm:$0xff]
  %v103 = vld [vmem:[%s0 + $0x2b8] sm:$0xff]
  %vm104 = vcmask 48128
  %v105 = vsel %vm104, %v16, -inf
  %106 = vmax.xlane.f32.xlu0 %v105
  %v107 = vpop.xlane.xlu0 %106
  %v108 = vsel %vm104, %v17, -inf
  %109 = vmax.xlane.f32.xlu0 %v108
  %v110 = vpop.xlane.xlu0 %109
  %v111 = vsel %vm104, %v18, -inf
  %112 = vmax.xlane.f32.xlu0 %v111
  %v113 = vpop.xlane.xlu0 %112
  %v114 = vsel %vm104, %v19, -inf
  %115 = vmax.xlane.f32.xlu0 %v114
  %v116 = vpop.xlane.xlu0 %115
  %v117 = vsel %vm104, %v20, -inf
  %118 = vmax.xlane.f32.xlu0 %v117
  %v119 = vpop.xlane.xlu0 %118
  %v120 = vsel %vm104, %v21, -inf
  %121 = vmax.xlane.f32.xlu0 %v120
  %v122 = vpop.xlane.xlu0 %121
  %v123 = vsel %vm104, %v22, -inf
  %124 = vmax.xlane.f32.xlu0 %v123
  %v125 = vpop.xlane.xlu0 %124
  %v126 = vsel %vm104, %v23, -inf
  %127 = vmax.xlane.f32.xlu0 %v126
  %v128 = vpop.xlane.xlu0 %127
  %v129 = vsel %vm104, %v24, -inf
  %130 = vmax.xlane.f32.xlu0 %v129
  %v131 = vpop.xlane.xlu0 %130
  %v132 = vsel %vm104, %v25, -inf
  %133 = vmax.xlane.f32.xlu0 %v132
  %v134 = vpop.xlane.xlu0 %133
  %v135 = vsel %vm104, %v26, -inf
  %136 = vmax.xlane.f32.xlu0 %v135
  %v137 = vpop.xlane.xlu0 %136
  %v138 = vsel %vm104, %v27, -inf
  %139 = vmax.xlane.f32.xlu0 %v138
  %v140 = vpop.xlane.xlu0 %139
  %v141 = vsel %vm104, %v28, -inf
  %142 = vmax.xlane.f32.xlu0 %v141
  %v143 = vpop.xlane.xlu0 %142
  %v144 = vsel %vm104, %v29, -inf
  %145 = vmax.xlane.f32.xlu0 %v144
  %v146 = vpop.xlane.xlu0 %145
  %v147 = vsel %vm104, %v30, -inf
  %148 = vmax.xlane.f32.xlu0 %v147
  %v149 = vpop.xlane.xlu0 %148
  %v150 = vsel %vm104, %v31, -inf
  %151 = vmax.xlane.f32.xlu0 %v150
  %v152 = vpop.xlane.xlu0 %151
  %v153 = vsel %vm104, %v32, -inf
  %154 = vmax.xlane.f32.xlu0 %v153
  %v155 = vpop.xlane.xlu0 %154
  %v156 = vsel %vm104, %v33, -inf
  %157 = vmax.xlane.f32.xlu0 %v156
  %v158 = vpop.xlane.xlu0 %157
  %v159 = vsel %vm104, %v34, -inf
  %160 = vmax.xlane.f32.xlu0 %v159
  %v161 = vpop.xlane.xlu0 %160
  %v162 = vsel %vm104, %v35, -inf
  %163 = vmax.xlane.f32.xlu0 %v162
  %v164 = vpop.xlane.xlu0 %163
  %v165 = vsel %vm104, %v36, -inf
  %166 = vmax.xlane.f32.xlu0 %v165
  %v167 = vpop.xlane.xlu0 %166
  %v168 = vsel %vm104, %v37, -inf
  %169 = vmax.xlane.f32.xlu0 %v168
  %v170 = vpop.xlane.xlu0 %169
  %v171 = vsel %vm104, %v38, -inf
  %172 = vmax.xlane.f32.xlu0 %v171
  %v173 = vpop.xlane.xlu0 %172
  %v174 = vsel %vm104, %v39, -inf
  %175 = vmax.xlane.f32.xlu0 %v174
  %v176 = vpop.xlane.xlu0 %175
  %v177 = vsel %vm104, %v40, -inf
  %178 = vmax.xlane.f32.xlu0 %v177
  %v179 = vpop.xlane.xlu0 %178
  %v180 = vsel %vm104, %v41, -inf
  %181 = vmax.xlane.f32.xlu0 %v180
  %v182 = vpop.xlane.xlu0 %181
  %v183 = vsel %vm104, %v42, -inf
  %184 = vmax.xlane.f32.xlu0 %v183
  %v185 = vpop.xlane.xlu0 %184
  %v186 = vsel %vm104, %v43, -inf
  %187 = vmax.xlane.f32.xlu0 %v186
  %v188 = vpop.xlane.xlu0 %187
  %v189 = vsel %vm104, %v44, -inf
  %190 = vmax.xlane.f32.xlu0 %v189
  %v191 = vpop.xlane.xlu0 %190
  %v192 = vsel %vm104, %v45, -inf
  %193 = vmax.xlane.f32.xlu0 %v192
  %v194 = vpop.xlane.xlu0 %193
  %v195 = vsel %vm104, %v46, -inf
  %196 = vmax.xlane.f32.xlu0 %v195
  %v197 = vpop.xlane.xlu0 %196
  %v198 = vsel %vm104, %v47, -inf
  %199 = vmax.xlane.f32.xlu0 %v198
  %v200 = vpop.xlane.xlu0 %199
  %v201 = vsel %vm104, %v48, -inf
  %202 = vmax.xlane.f32.xlu0 %v201
  %v203 = vpop.xlane.xlu0 %202
  %v204 = vsel %vm104, %v49, -inf
  %205 = vmax.xlane.f32.xlu0 %v204
  %v206 = vpop.xlane.xlu0 %205
  %v207 = vsel %vm104, %v50, -inf
  %208 = vmax.xlane.f32.xlu0 %v207
  %v209 = vpop.xlane.xlu0 %208
  %v210 = vsel %vm104, %v51, -inf
  %211 = vmax.xlane.f32.xlu0 %v210
  %v212 = vpop.xlane.xlu0 %211
  %v213 = vsel %vm104, %v52, -inf
  %214 = vmax.xlane.f32.xlu0 %v213
  %v215 = vpop.xlane.xlu0 %214
  %v216 = vsel %vm104, %v53, -inf
  %217 = vmax.xlane.f32.xlu0 %v216
  %v218 = vpop.xlane.xlu0 %217
  %v219 = vsel %vm104, %v54, -inf
  %220 = vmax.xlane.f32.xlu0 %v219
  %v221 = vpop.xlane.xlu0 %220
  %v222 = vsel %vm104, %v55, -inf
  %223 = vmax.xlane.f32.xlu0 %v222
  %v224 = vpop.xlane.xlu0 %223
  %v225 = vsel %vm104, %v56, -inf
  %226 = vmax.xlane.f32.xlu0 %v225
  %v227 = vpop.xlane.xlu0 %226
  %v228 = vsel %vm104, %v57, -inf
  %229 = vmax.xlane.f32.xlu0 %v228
  %v230 = vpop.xlane.xlu0 %229
  %v231 = vsel %vm104, %v58, -inf
  %232 = vmax.xlane.f32.xlu0 %v231
  %v233 = vpop.xlane.xlu0 %232
  %v234 = vsel %vm104, %v59, -inf
  %235 = vmax.xlane.f32.xlu0 %v234
  %v236 = vpop.xlane.xlu0 %235
  %v237 = vsel %vm104, %v60, -inf
  %238 = vmax.xlane.f32.xlu0 %v237
  %v239 = vpop.xlane.xlu0 %238
  %v240 = vsel %vm104, %v61, -inf
  %241 = vmax.xlane.f32.xlu0 %v240
  %v242 = vpop.xlane.xlu0 %241
  %v243 = vsel %vm104, %v62, -inf
  %244 = vmax.xlane.f32.xlu0 %v243
  %v245 = vpop.xlane.xlu0 %244
  %v246 = vsel %vm104, %v63, -inf
  %247 = vmax.xlane.f32.xlu0 %v246
  %v248 = vpop.xlane.xlu0 %247
  %v249 = vsel %vm104, %v64, -inf
  %250 = vmax.xlane.f32.xlu0 %v249
  %v251 = vpop.xlane.xlu0 %250
  %v252 = vsel %vm104, %v65, -inf
  %253 = vmax.xlane.f32.xlu0 %v252
  %v254 = vpop.xlane.xlu0 %253
  %v255 = vsel %vm104, %v66, -inf
  %256 = vmax.xlane.f32.xlu0 %v255
  %v257 = vpop.xlane.xlu0 %256
  %v258 = vsel %vm104, %v67, -inf
  %259 = vmax.xlane.f32.xlu0 %v258
  %v260 = vpop.xlane.xlu0 %259
  %v261 = vsel %vm104, %v68, -inf
  %262 = vmax.xlane.f32.xlu0 %v261
  %v263 = vpop.xlane.xlu0 %262
  %v264 = vsel %vm104, %v69, -inf
  %265 = vmax.xlane.f32.xlu0 %v264
  %v266 = vpop.xlane.xlu0 %265
  %v267 = vsel %vm104, %v70, -inf
  %268 = vmax.xlane.f32.xlu0 %v267
  %v269 = vpop.xlane.xlu0 %268
  %v270 = vsel %vm104, %v71, -inf
  %271 = vmax.xlane.f32.xlu0 %v270
  %v272 = vpop.xlane.xlu0 %271
  %v273 = vsel %vm104, %v72, -inf
  %274 = vmax.xlane.f32.xlu0 %v273
  %v275 = vpop.xlane.xlu0 %274
  %v276 = vsel %vm104, %v73, -inf
  %277 = vmax.xlane.f32.xlu0 %v276
  %v278 = vpop.xlane.xlu0 %277
  %v279 = vsel %vm104, %v74, -inf
  %280 = vmax.xlane.f32.xlu0 %v279
  %v281 = vpop.xlane.xlu0 %280
  %v282 = vsel %vm104, %v75, -inf
  %283 = vmax.xlane.f32.xlu0 %v282
  %v284 = vpop.xlane.xlu0 %283
  %v285 = vsel %vm104, %v76, -inf
  %286 = vmax.xlane.f32.xlu0 %v285
  %v287 = vpop.xlane.xlu0 %286
  %v288 = vsel %vm104, %v77, -inf
  %289 = vmax.xlane.f32.xlu0 %v288
  %v290 = vpop.xlane.xlu0 %289
  %v291 = vsel %vm104, %v78, -inf
  %292 = vmax.xlane.f32.xlu0 %v291
  %v293 = vpop.xlane.xlu0 %292
  %v294 = vsel %vm104, %v79, -inf
  %295 = vmax.xlane.f32.xlu0 %v294
  %v296 = vpop.xlane.xlu0 %295
  %v297 = vsel %vm104, %v80, -inf
  %298 = vmax.xlane.f32.xlu0 %v297
  %v299 = vpop.xlane.xlu0 %298
  %v300 = vsel %vm104, %v81, -inf
  %301 = vmax.xlane.f32.xlu0 %v300
  %v302 = vpop.xlane.xlu0 %301
  %v303 = vsel %vm104, %v82, -inf
  %304 = vmax.xlane.f32.xlu0 %v303
  %v305 = vpop.xlane.xlu0 %304
  %v306 = vsel %vm104, %v83, -inf
  %307 = vmax.xlane.f32.xlu0 %v306
  %v308 = vpop.xlane.xlu0 %307
  %v309 = vsel %vm104, %v84, -inf
  %310 = vmax.xlane.f32.xlu0 %v309
  %v311 = vpop.xlane.xlu0 %310
  %v312 = vsel %vm104, %v85, -inf
  %313 = vmax.xlane.f32.xlu0 %v312
  %v314 = vpop.xlane.xlu0 %313
  %v315 = vsel %vm104, %v86, -inf
  %316 = vmax.xlane.f32.xlu0 %v315
  %v317 = vpop.xlane.xlu0 %316
  %v318 = vsel %vm104, %v87, -inf
  %319 = vmax.xlane.f32.xlu0 %v318
  %v320 = vpop.xlane.xlu0 %319
  %v321 = vsel %vm104, %v88, -inf
  %322 = vmax.xlane.f32.xlu0 %v321
  %v323 = vpop.xlane.xlu0 %322
  %v324 = vsel %vm104, %v89, -inf
  %325 = vmax.xlane.f32.xlu0 %v324
  %v326 = vpop.xlane.xlu0 %325
  %v327 = vsel %vm104, %v90, -inf
  %328 = vmax.xlane.f32.xlu0 %v327
  %v329 = vpop.xlane.xlu0 %328
  %v330 = vsel %vm104, %v91, -inf
  %331 = vmax.xlane.f32.xlu0 %v330
  %v332 = vpop.xlane.xlu0 %331
  %v333 = vsel %vm104, %v92, -inf
  %334 = vmax.xlane.f32.xlu0 %v333
  %v335 = vpop.xlane.xlu0 %334
  %v336 = vsel %vm104, %v93, -inf
  %337 = vmax.xlane.f32.xlu0 %v336
  %v338 = vpop.xlane.xlu0 %337
  %v339 = vsel %vm104, %v94, -inf
  %340 = vmax.xlane.f32.xlu0 %v339
  %v341 = vpop.xlane.xlu0 %340
  %v342 = vsel %vm104, %v95, -inf
  %343 = vmax.xlane.f32.xlu0 %v342
  %v344 = vpop.xlane.xlu0 %343
  %v345 = vsel %vm104, %v96, -inf
  %346 = vmax.xlane.f32.xlu0 %v345
  %v347 = vpop.xlane.xlu0 %346
  %v348 = vsel %vm104, %v97, -inf
  %349 = vmax.xlane.f32.xlu0 %v348
  %v350 = vpop.xlane.xlu0 %349
  %v351 = vsel %vm104, %v98, -inf
  %352 = vmax.xlane.f32.xlu0 %v351
  %v353 = vpop.xlane.xlu0 %352
  %v354 = vsel %vm104, %v99, -inf
  %355 = vmax.xlane.f32.xlu0 %v354
  %v356 = vpop.xlane.xlu0 %355
  %v357 = vsel %vm104, %v100, -inf
  %358 = vmax.xlane.f32.xlu0 %v357
  %v359 = vpop.xlane.xlu0 %358
  %v360 = vsel %vm104, %v101, -inf
  %361 = vmax.xlane.f32.xlu0 %v360
  %v362 = vpop.xlane.xlu0 %361
  %v363 = vsel %vm104, %v102, -inf
  %364 = vmax.xlane.f32.xlu0 %v363
  %v365 = vpop.xlane.xlu0 %364
  %v366 = vsel %vm104, %v103, -inf
  %367 = vmax.xlane.f32.xlu0 %v366
  %v368 = vpop.xlane.xlu0 %367
  %v369 = vsub.f32 %v16, %v107
  %v370 = vsub.f32 %v17, %v110
  %v371 = vsub.f32 %v18, %v113
  %v372 = vsub.f32 %v19, %v116
  %v373 = vsub.f32 %v20, %v119
  %v374 = vsub.f32 %v21, %v122
  %v375 = vsub.f32 %v22, %v125
  %v376 = vsub.f32 %v23, %v128
  %v377 = vsub.f32 %v24, %v131
  %v378 = vsub.f32 %v25, %v134
  %v379 = vsub.f32 %v26, %v137
  %v380 = vsub.f32 %v27, %v140
  %v381 = vsub.f32 %v28, %v143
  %v382 = vsub.f32 %v29, %v146
  %v383 = vsub.f32 %v30, %v149
  %v384 = vsub.f32 %v31, %v152
  %v385 = vsub.f32 %v32, %v155
  %v386 = vsub.f32 %v33, %v158
  %v387 = vsub.f32 %v34, %v161
  %v388 = vsub.f32 %v35, %v164
  %v389 = vsub.f32 %v36, %v167
  %v390 = vsub.f32 %v37, %v170
  %v391 = vsub.f32 %v38, %v173
  %v392 = vsub.f32 %v39, %v176
  %v393 = vsub.f32 %v40, %v179
  %v394 = vsub.f32 %v41, %v182
  %v395 = vsub.f32 %v42, %v185
  %v396 = vsub.f32 %v43, %v188
  %v397 = vsub.f32 %v44, %v191
  %v398 = vsub.f32 %v45, %v194
  %v399 = vsub.f32 %v46, %v197
  %v400 = vsub.f32 %v47, %v200
  %v401 = vsub.f32 %v48, %v203
  %v402 = vsub.f32 %v49, %v206
  %v403 = vsub.f32 %v50, %v209
  %v404 = vsub.f32 %v51, %v212
  %v405 = vsub.f32 %v52, %v215
  %v406 = vsub.f32 %v53, %v218
  %v407 = vsub.f32 %v54, %v221
  %v408 = vsub.f32 %v55, %v224
  %v409 = vsub.f32 %v56, %v227
  %v410 = vsub.f32 %v57, %v230
  %v411 = vsub.f32 %v58, %v233
  %v412 = vsub.f32 %v59, %v236
  %v413 = vsub.f32 %v60, %v239
  %v414 = vsub.f32 %v61, %v242
  %v415 = vsub.f32 %v62, %v245
  %v416 = vsub.f32 %v63, %v248
  %v417 = vsub.f32 %v64, %v251
  %v418 = vsub.f32 %v65, %v254
  %v419 = vsub.f32 %v66, %v257
  %v420 = vsub.f32 %v67, %v260
  %v421 = vsub.f32 %v68, %v263
  %v422 = vsub.f32 %v69, %v266
  %v423 = vsub.f32 %v70, %v269
  %v424 = vsub.f32 %v71, %v272
  %v425 = vsub.f32 %v72, %v275
  %v426 = vsub.f32 %v73, %v278
  %v427 = vsub.f32 %v74, %v281
  %v428 = vsub.f32 %v75, %v284
  %v429 = vsub.f32 %v76, %v287
  %v430 = vsub.f32 %v77, %v290
  %v431 = vsub.f32 %v78, %v293
  %v432 = vsub.f32 %v79, %v296
  %v433 = vsub.f32 %v80, %v299
  %v434 = vsub.f32 %v81, %v302
  %v435 = vsub.f32 %v82, %v305
  %v436 = vsub.f32 %v83, %v308
  %v437 = vsub.f32 %v84, %v311
  %v438 = vsub.f32 %v85, %v314
  %v439 = vsub.f32 %v86, %v317
  %v440 = vsub.f32 %v87, %v320
  %v441 = vsub.f32 %v88, %v323
  %v442 = vsub.f32 %v89, %v326
  %v443 = vsub.f32 %v90, %v329
  %v444 = vsub.f32 %v91, %v332
  %v445 = vsub.f32 %v92, %v335
  %v446 = vsub.f32 %v93, %v338
  %v447 = vsub.f32 %v94, %v341
  %v448 = vsub.f32 %v95, %v344
  %v449 = vsub.f32 %v96, %v347
  %v450 = vsub.f32 %v97, %v350
  %v451 = vsub.f32 %v98, %v353
  %v452 = vsub.f32 %v99, %v356
  %v453 = vsub.f32 %v100, %v359
  %v454 = vsub.f32 %v101, %v362
  %v455 = vsub.f32 %v102, %v365
  %v456 = vsub.f32 %v103, %v368
  %v457 = vmul.f32 %v369, 1.442695
  %v458 = vpow.pop %v457
  %v459 = vmul.f32 %v370, 1.442695
  %v460 = vpow.pop %v459
  %v461 = vmul.f32 %v371, 1.442695
  %v462 = vpow.pop %v461
  %v463 = vmul.f32 %v372, 1.442695
  %v464 = vpow.pop %v463
  %v465 = vmul.f32 %v373, 1.442695
  %v466 = vpow.pop %v465
  %v467 = vmul.f32 %v374, 1.442695
  %v468 = vpow.pop %v467
  %v469 = vmul.f32 %v375, 1.442695
  %v470 = vpow.pop %v469
  %v471 = vmul.f32 %v376, 1.442695
  %v472 = vpow.pop %v471
  %v473 = vmul.f32 %v377, 1.442695
  %v474 = vpow.pop %v473
  %v475 = vmul.f32 %v378, 1.442695
  %v476 = vpow.pop %v475
  %v477 = vmul.f32 %v379, 1.442695
  %v478 = vpow.pop %v477
  %v479 = vmul.f32 %v380, 1.442695
  %v480 = vpow.pop %v479
  %v481 = vmul.f32 %v381, 1.442695
  %v482 = vpow.pop %v481
  %v483 = vmul.f32 %v382, 1.442695
  %v484 = vpow.pop %v483
  %v485 = vmul.f32 %v383, 1.442695
  %v486 = vpow.pop %v485
  %v487 = vmul.f32 %v384, 1.442695
  %v488 = vpow.pop %v487
  %v489 = vmul.f32 %v385, 1.442695
  %v490 = vpow.pop %v489
  %v491 = vmul.f32 %v386, 1.442695
  %v492 = vpow.pop %v491
  %v493 = vmul.f32 %v387, 1.442695
  %v494 = vpow.pop %v493
  %v495 = vmul.f32 %v388, 1.442695
  %v496 = vpow.pop %v495
  %v497 = vmul.f32 %v389, 1.442695
  %v498 = vpow.pop %v497
  %v499 = vmul.f32 %v390, 1.442695
  %v500 = vpow.pop %v499
  %v501 = vmul.f32 %v391, 1.442695
  %v502 = vpow.pop %v501
  %v503 = vmul.f32 %v392, 1.442695
  %v504 = vpow.pop %v503
  %v505 = vmul.f32 %v393, 1.442695
  %v506 = vpow.pop %v505
  %v507 = vmul.f32 %v394, 1.442695
  %v508 = vpow.pop %v507
  %v509 = vmul.f32 %v395, 1.442695
  %v510 = vpow.pop %v509
  %v511 = vmul.f32 %v396, 1.442695
  %v512 = vpow.pop %v511
  %v513 = vmul.f32 %v397, 1.442695
  %v514 = vpow.pop %v513
  %v515 = vmul.f32 %v398, 1.442695
  %v516 = vpow.pop %v515
  %v517 = vmul.f32 %v399, 1.442695
  %v518 = vpow.pop %v517
  %v519 = vmul.f32 %v400, 1.442695
  %v520 = vpow.pop %v519
  %v521 = vmul.f32 %v401, 1.442695
  %v522 = vpow.pop %v521
  %v523 = vmul.f32 %v402, 1.442695
  %v524 = vpow.pop %v523
  %v525 = vmul.f32 %v403, 1.442695
  %v526 = vpow.pop %v525
  %v527 = vmul.f32 %v404, 1.442695
  %v528 = vpow.pop %v527
  %v529 = vmul.f32 %v405, 1.442695
  %v530 = vpow.pop %v529
  %v531 = vmul.f32 %v406, 1.442695
  %v532 = vpow.pop %v531
  %v533 = vmul.f32 %v407, 1.442695
  %v534 = vpow.pop %v533
  %v535 = vmul.f32 %v408, 1.442695
  %v536 = vpow.pop %v535
  %v537 = vmul.f32 %v409, 1.442695
  %v538 = vpow.pop %v537
  %v539 = vmul.f32 %v410, 1.442695
  %v540 = vpow.pop %v539
  %v541 = vmul.f32 %v411, 1.442695
  %v542 = vpow.pop %v541
  %v543 = vmul.f32 %v412, 1.442695
  %v544 = vpow.pop %v543
  %v545 = vmul.f32 %v413, 1.442695
  %v546 = vpow.pop %v545
  %v547 = vmul.f32 %v414, 1.442695
  %v548 = vpow.pop %v547
  %v549 = vmul.f32 %v415, 1.442695
  %v550 = vpow.pop %v549
  %v551 = vmul.f32 %v416, 1.442695
  %v552 = vpow.pop %v551
  %v553 = vmul.f32 %v417, 1.442695
  %v554 = vpow.pop %v553
  %v555 = vmul.f32 %v418, 1.442695
  %v556 = vpow.pop %v555
  %v557 = vmul.f32 %v419, 1.442695
  %v558 = vpow.pop %v557
  %v559 = vmul.f32 %v420, 1.442695
  %v560 = vpow.pop %v559
  %v561 = vmul.f32 %v421, 1.442695
  %v562 = vpow.pop %v561
  %v563 = vmul.f32 %v422, 1.442695
  %v564 = vpow.pop %v563
  %v565 = vmul.f32 %v423, 1.442695
  %v566 = vpow.pop %v565
  %v567 = vmul.f32 %v424, 1.442695
  %v568 = vpow.pop %v567
  %v569 = vmul.f32 %v425, 1.442695
  %v570 = vpow.pop %v569
  %v571 = vmul.f32 %v426, 1.442695
  %v572 = vpow.pop %v571
  %v573 = vmul.f32 %v427, 1.442695
  %v574 = vpow.pop %v573
  %v575 = vmul.f32 %v428, 1.442695
  %v576 = vpow.pop %v575
  %v577 = vmul.f32 %v429, 1.442695
  %v578 = vpow.pop %v577
  %v579 = vmul.f32 %v430, 1.442695
  %v580 = vpow.pop %v579
  %v581 = vmul.f32 %v431, 1.442695
  %v582 = vpow.pop %v581
  %v583 = vmul.f32 %v432, 1.442695
  %v584 = vpow.pop %v583
  %v585 = vmul.f32 %v433, 1.442695
  %v586 = vpow.pop %v585
  %v587 = vmul.f32 %v434, 1.442695
  %v588 = vpow.pop %v587
  %v589 = vmul.f32 %v435, 1.442695
  %v590 = vpow.pop %v589
  %v591 = vmul.f32 %v436, 1.442695
  %v592 = vpow.pop %v591
  %v593 = vmul.f32 %v437, 1.442695
  %v594 = vpow.pop %v593
  %v595 = vmul.f32 %v438, 1.442695
  %v596 = vpow.pop %v595
  %v597 = vmul.f32 %v439, 1.442695
  %v598 = vpow.pop %v597
  %v599 = vmul.f32 %v440, 1.442695
  %v600 = vpow.pop %v599
  %v601 = vmul.f32 %v441, 1.442695
  %v602 = vpow.pop %v601
  %v603 = vmul.f32 %v442, 1.442695
  %v604 = vpow.pop %v603
  %v605 = vmul.f32 %v443, 1.442695
  %v606 = vpow.pop %v605
  %v607 = vmul.f32 %v444, 1.442695
  %v608 = vpow.pop %v607
  %v609 = vmul.f32 %v445, 1.442695
  %v610 = vpow.pop %v609
  %v611 = vmul.f32 %v446, 1.442695
  %v612 = vpow.pop %v611
  %v613 = vmul.f32 %v447, 1.442695
  %v614 = vpow.pop %v613
  %v615 = vmul.f32 %v448, 1.442695
  %v616 = vpow.pop %v615
  %v617 = vmul.f32 %v449, 1.442695
  %v618 = vpow.pop %v617
  %v619 = vmul.f32 %v450, 1.442695
  %v620 = vpow.pop %v619
  %v621 = vmul.f32 %v451, 1.442695
  %v622 = vpow.pop %v621
  %v623 = vmul.f32 %v452, 1.442695
  %v624 = vpow.pop %v623
  %v625 = vmul.f32 %v453, 1.442695
  %v626 = vpow.pop %v625
  %v627 = vmul.f32 %v454, 1.442695
  %v628 = vpow.pop %v627
  %v629 = vmul.f32 %v455, 1.442695
  %v630 = vpow.pop %v629
  %v631 = vmul.f32 %v456, 1.442695
  %v632 = vpow.pop %v631
  %v633 = vsel %vm104, %v458, 0.0
  %634 = vadd.xlane.f32.xlu0 %v633
  %v635 = vpop.xlane.xlu0 %634
  %v636 = vsel %vm104, %v460, 0.0
  %637 = vadd.xlane.f32.xlu0 %v636
  %v638 = vpop.xlane.xlu0 %637
  %v639 = vsel %vm104, %v462, 0.0
  %640 = vadd.xlane.f32.xlu0 %v639
  %v641 = vpop.xlane.xlu0 %640
  %v642 = vsel %vm104, %v464, 0.0
  %643 = vadd.xlane.f32.xlu0 %v642
  %v644 = vpop.xlane.xlu0 %643
  %v645 = vsel %vm104, %v466, 0.0
  %646 = vadd.xlane.f32.xlu0 %v645
  %v647 = vpop.xlane.xlu0 %646
  %v648 = vsel %vm104, %v468, 0.0
  %649 = vadd.xlane.f32.xlu0 %v648
  %v650 = vpop.xlane.xlu0 %649
  %v651 = vsel %vm104, %v470, 0.0
  %652 = vadd.xlane.f32.xlu0 %v651
  %v653 = vpop.xlane.xlu0 %652
  %v654 = vsel %vm104, %v472, 0.0
  %655 = vadd.xlane.f32.xlu0 %v654
  %v656 = vpop.xlane.xlu0 %655
  %v657 = vsel %vm104, %v474, 0.0
  %658 = vadd.xlane.f32.xlu0 %v657
  %v659 = vpop.xlane.xlu0 %658
  %v660 = vsel %vm104, %v476, 0.0
  %661 = vadd.xlane.f32.xlu0 %v660
  %v662 = vpop.xlane.xlu0 %661
  %v663 = vsel %vm104, %v478, 0.0
  %664 = vadd.xlane.f32.xlu0 %v663
  %v665 = vpop.xlane.xlu0 %664
  %v666 = vsel %vm104, %v480, 0.0
  %667 = vadd.xlane.f32.xlu0 %v666
  %v668 = vpop.xlane.xlu0 %667
  %v669 = vsel %vm104, %v482, 0.0
  %670 = vadd.xlane.f32.xlu0 %v669
  %v671 = vpop.xlane.xlu0 %670
  %v672 = vsel %vm104, %v484, 0.0
  %673 = vadd.xlane.f32.xlu0 %v672
  %v674 = vpop.xlane.xlu0 %673
  %v675 = vsel %vm104, %v486, 0.0
  %676 = vadd.xlane.f32.xlu0 %v675
  %v677 = vpop.xlane.xlu0 %676
  %v678 = vsel %vm104, %v488, 0.0
  %679 = vadd.xlane.f32.xlu0 %v678
  %v680 = vpop.xlane.xlu0 %679
  %v681 = vsel %vm104, %v490, 0.0
  %682 = vadd.xlane.f32.xlu0 %v681
  %v683 = vpop.xlane.xlu0 %682
  %v684 = vsel %vm104, %v492, 0.0
  %685 = vadd.xlane.f32.xlu0 %v684
  %v686 = vpop.xlane.xlu0 %685
  %v687 = vsel %vm104, %v494, 0.0
  %688 = vadd.xlane.f32.xlu0 %v687
  %v689 = vpop.xlane.xlu0 %688
  %v690 = vsel %vm104, %v496, 0.0
  %691 = vadd.xlane.f32.xlu0 %v690
  %v692 = vpop.xlane.xlu0 %691
  %v693 = vsel %vm104, %v498, 0.0
  %694 = vadd.xlane.f32.xlu0 %v693
  %v695 = vpop.xlane.xlu0 %694
  %v696 = vsel %vm104, %v500, 0.0
  %697 = vadd.xlane.f32.xlu0 %v696
  %v698 = vpop.xlane.xlu0 %697
  %v699 = vsel %vm104, %v502, 0.0
  %700 = vadd.xlane.f32.xlu0 %v699
  %v701 = vpop.xlane.xlu0 %700
  %v702 = vsel %vm104, %v504, 0.0
  %703 = vadd.xlane.f32.xlu0 %v702
  %v704 = vpop.xlane.xlu0 %703
  %v705 = vsel %vm104, %v506, 0.0
  %706 = vadd.xlane.f32.xlu0 %v705
  %v707 = vpop.xlane.xlu0 %706
  %v708 = vsel %vm104, %v508, 0.0
  %709 = vadd.xlane.f32.xlu0 %v708
  %v710 = vpop.xlane.xlu0 %709
  %v711 = vsel %vm104, %v510, 0.0
  %712 = vadd.xlane.f32.xlu0 %v711
  %v713 = vpop.xlane.xlu0 %712
  %v714 = vsel %vm104, %v512, 0.0
  %715 = vadd.xlane.f32.xlu0 %v714
  %v716 = vpop.xlane.xlu0 %715
  %v717 = vsel %vm104, %v514, 0.0
  %718 = vadd.xlane.f32.xlu0 %v717
  %v719 = vpop.xlane.xlu0 %718
  %v720 = vsel %vm104, %v516, 0.0
  %721 = vadd.xlane.f32.xlu0 %v720
  %v722 = vpop.xlane.xlu0 %721
  %v723 = vsel %vm104, %v518, 0.0
  %724 = vadd.xlane.f32.xlu0 %v723
  %v725 = vpop.xlane.xlu0 %724
  %v726 = vsel %vm104, %v520, 0.0
  %727 = vadd.xlane.f32.xlu0 %v726
  %v728 = vpop.xlane.xlu0 %727
  %v729 = vsel %vm104, %v522, 0.0
  %730 = vadd.xlane.f32.xlu0 %v729
  %v731 = vpop.xlane.xlu0 %730
  %v732 = vsel %vm104, %v524, 0.0
  %733 = vadd.xlane.f32.xlu0 %v732
  %v734 = vpop.xlane.xlu0 %733
  %v735 = vsel %vm104, %v526, 0.0
  %736 = vadd.xlane.f32.xlu0 %v735
  %v737 = vpop.xlane.xlu0 %736
  %v738 = vsel %vm104, %v528, 0.0
  %739 = vadd.xlane.f32.xlu0 %v738
  %v740 = vpop.xlane.xlu0 %739
  %v741 = vsel %vm104, %v530, 0.0
  %742 = vadd.xlane.f32.xlu0 %v741
  %v743 = vpop.xlane.xlu0 %742
  %v744 = vsel %vm104, %v532, 0.0
  %745 = vadd.xlane.f32.xlu0 %v744
  %v746 = vpop.xlane.xlu0 %745
  %v747 = vsel %vm104, %v534, 0.0
  %748 = vadd.xlane.f32.xlu0 %v747
  %v749 = vpop.xlane.xlu0 %748
  %v750 = vsel %vm104, %v536, 0.0
  %751 = vadd.xlane.f32.xlu0 %v750
  %v752 = vpop.xlane.xlu0 %751
  %v753 = vsel %vm104, %v538, 0.0
  %754 = vadd.xlane.f32.xlu0 %v753
  %v755 = vpop.xlane.xlu0 %754
  %v756 = vsel %vm104, %v540, 0.0
  %757 = vadd.xlane.f32.xlu0 %v756
  %v758 = vpop.xlane.xlu0 %757
  %v759 = vsel %vm104, %v542, 0.0
  %760 = vadd.xlane.f32.xlu0 %v759
  %v761 = vpop.xlane.xlu0 %760
  %v762 = vsel %vm104, %v544, 0.0
  %763 = vadd.xlane.f32.xlu0 %v762
  %v764 = vpop.xlane.xlu0 %763
  %v765 = vsel %vm104, %v546, 0.0
  %766 = vadd.xlane.f32.xlu0 %v765
  %v767 = vpop.xlane.xlu0 %766
  %v768 = vsel %vm104, %v548, 0.0
  %769 = vadd.xlane.f32.xlu0 %v768
  %v770 = vpop.xlane.xlu0 %769
  %v771 = vsel %vm104, %v550, 0.0
  %772 = vadd.xlane.f32.xlu0 %v771
  %v773 = vpop.xlane.xlu0 %772
  %v774 = vsel %vm104, %v552, 0.0
  %775 = vadd.xlane.f32.xlu0 %v774
  %v776 = vpop.xlane.xlu0 %775
  %v777 = vsel %vm104, %v554, 0.0
  %778 = vadd.xlane.f32.xlu0 %v777
  %v779 = vpop.xlane.xlu0 %778
  %v780 = vsel %vm104, %v556, 0.0
  %781 = vadd.xlane.f32.xlu0 %v780
  %v782 = vpop.xlane.xlu0 %781
  %v783 = vsel %vm104, %v558, 0.0
  %784 = vadd.xlane.f32.xlu0 %v783
  %v785 = vpop.xlane.xlu0 %784
  %v786 = vsel %vm104, %v560, 0.0
  %787 = vadd.xlane.f32.xlu0 %v786
  %v788 = vpop.xlane.xlu0 %787
  %v789 = vsel %vm104, %v562, 0.0
  %790 = vadd.xlane.f32.xlu0 %v789
  %v791 = vpop.xlane.xlu0 %790
  %v792 = vsel %vm104, %v564, 0.0
  %793 = vadd.xlane.f32.xlu0 %v792
  %v794 = vpop.xlane.xlu0 %793
  %v795 = vsel %vm104, %v566, 0.0
  %796 = vadd.xlane.f32.xlu0 %v795
  %v797 = vpop.xlane.xlu0 %796
  %v798 = vsel %vm104, %v568, 0.0
  %799 = vadd.xlane.f32.xlu0 %v798
  %v800 = vpop.xlane.xlu0 %799
  %v801 = vsel %vm104, %v570, 0.0
  %802 = vadd.xlane.f32.xlu0 %v801
  %v803 = vpop.xlane.xlu0 %802
  %v804 = vsel %vm104, %v572, 0.0
  %805 = vadd.xlane.f32.xlu0 %v804
  %v806 = vpop.xlane.xlu0 %805
  %v807 = vsel %vm104, %v574, 0.0
  %808 = vadd.xlane.f32.xlu0 %v807
  %v809 = vpop.xlane.xlu0 %808
  %v810 = vsel %vm104, %v576, 0.0
  %811 = vadd.xlane.f32.xlu0 %v810
  %v812 = vpop.xlane.xlu0 %811
  %v813 = vsel %vm104, %v578, 0.0
  %814 = vadd.xlane.f32.xlu0 %v813
  %v815 = vpop.xlane.xlu0 %814
  %v816 = vsel %vm104, %v580, 0.0
  %817 = vadd.xlane.f32.xlu0 %v816
  %v818 = vpop.xlane.xlu0 %817
  %v819 = vsel %vm104, %v582, 0.0
  %820 = vadd.xlane.f32.xlu0 %v819
  %v821 = vpop.xlane.xlu0 %820
  %v822 = vsel %vm104, %v584, 0.0
  %823 = vadd.xlane.f32.xlu0 %v822
  %v824 = vpop.xlane.xlu0 %823
  %v825 = vsel %vm104, %v586, 0.0
  %826 = vadd.xlane.f32.xlu0 %v825
  %v827 = vpop.xlane.xlu0 %826
  %v828 = vsel %vm104, %v588, 0.0
  %829 = vadd.xlane.f32.xlu0 %v828
  %v830 = vpop.xlane.xlu0 %829
  %v831 = vsel %vm104, %v590, 0.0
  %832 = vadd.xlane.f32.xlu0 %v831
  %v833 = vpop.xlane.xlu0 %832
  %v834 = vsel %vm104, %v592, 0.0
  %835 = vadd.xlane.f32.xlu0 %v834
  %v836 = vpop.xlane.xlu0 %835
  %v837 = vsel %vm104, %v594, 0.0
  %838 = vadd.xlane.f32.xlu0 %v837
  %v839 = vpop.xlane.xlu0 %838
  %v840 = vsel %vm104, %v596, 0.0
  %841 = vadd.xlane.f32.xlu0 %v840
  %v842 = vpop.xlane.xlu0 %841
  %v843 = vsel %vm104, %v598, 0.0
  %844 = vadd.xlane.f32.xlu0 %v843
  %v845 = vpop.xlane.xlu0 %844
  %v846 = vsel %vm104, %v600, 0.0
  %847 = vadd.xlane.f32.xlu0 %v846
  %v848 = vpop.xlane.xlu0 %847
  %v849 = vsel %vm104, %v602, 0.0
  %850 = vadd.xlane.f32.xlu0 %v849
  %v851 = vpop.xlane.xlu0 %850
  %v852 = vsel %vm104, %v604, 0.0
  %853 = vadd.xlane.f32.xlu0 %v852
  %v854 = vpop.xlane.xlu0 %853
  %v855 = vsel %vm104, %v606, 0.0
  %856 = vadd.xlane.f32.xlu0 %v855
  %v857 = vpop.xlane.xlu0 %856
  %v858 = vsel %vm104, %v608, 0.0
  %859 = vadd.xlane.f32.xlu0 %v858
  %v860 = vpop.xlane.xlu0 %859
  %v861 = vsel %vm104, %v610, 0.0
  %862 = vadd.xlane.f32.xlu0 %v861
  %v863 = vpop.xlane.xlu0 %862
  %v864 = vsel %vm104, %v612, 0.0
  %865 = vadd.xlane.f32.xlu0 %v864
  %v866 = vpop.xlane.xlu0 %865
  %v867 = vsel %vm104, %v614, 0.0
  %868 = vadd.xlane.f32.xlu0 %v867
  %v869 = vpop.xlane.xlu0 %868
  %v870 = vsel %vm104, %v616, 0.0
  %871 = vadd.xlane.f32.xlu0 %v870
  %v872 = vpop.xlane.xlu0 %871
  %v873 = vsel %vm104, %v618, 0.0
  %874 = vadd.xlane.f32.xlu0 %v873
  %v875 = vpop.xlane.xlu0 %874
  %v876 = vsel %vm104, %v620, 0.0
  %877 = vadd.xlane.f32.xlu0 %v876
  %v878 = vpop.xlane.xlu0 %877
  %v879 = vsel %vm104, %v622, 0.0
  %880 = vadd.xlane.f32.xlu0 %v879
  %v881 = vpop.xlane.xlu0 %880
  %v882 = vsel %vm104, %v624, 0.0
  %883 = vadd.xlane.f32.xlu0 %v882
  %v884 = vpop.xlane.xlu0 %883
  %v885 = vsel %vm104, %v626, 0.0
  %886 = vadd.xlane.f32.xlu0 %v885
  %v887 = vpop.xlane.xlu0 %886
  %v888 = vsel %vm104, %v628, 0.0
  %889 = vadd.xlane.f32.xlu0 %v888
  %v890 = vpop.xlane.xlu0 %889
  %v891 = vsel %vm104, %v630, 0.0
  %892 = vadd.xlane.f32.xlu0 %v891
  %v893 = vpop.xlane.xlu0 %892
  %v894 = vsel %vm104, %v632, 0.0
  %895 = vadd.xlane.f32.xlu0 %v894
  %v896 = vpop.xlane.xlu0 %895
  %v897 = vrcp.pop %v635
  %v898 = vrcp.pop %v638
  %v899 = vrcp.pop %v641
  %v900 = vrcp.pop %v644
  %v901 = vrcp.pop %v647
  %v902 = vrcp.pop %v650
  %v903 = vrcp.pop %v653
  %v904 = vrcp.pop %v656
  %v905 = vrcp.pop %v659
  %v906 = vrcp.pop %v662
  %v907 = vrcp.pop %v665
  %v908 = vrcp.pop %v668
  %v909 = vrcp.pop %v671
  %v910 = vrcp.pop %v674
  %v911 = vrcp.pop %v677
  %v912 = vrcp.pop %v680
  %v913 = vrcp.pop %v683
  %v914 = vrcp.pop %v686
  %v915 = vrcp.pop %v689
  %v916 = vrcp.pop %v692
  %v917 = vrcp.pop %v695
  %v918 = vrcp.pop %v698
  %v919 = vrcp.pop %v701
  %v920 = vrcp.pop %v704
  %v921 = vrcp.pop %v707
  %v922 = vrcp.pop %v710
  %v923 = vrcp.pop %v713
  %v924 = vrcp.pop %v716
  %v925 = vrcp.pop %v719
  %v926 = vrcp.pop %v722
  %v927 = vrcp.pop %v725
  %v928 = vrcp.pop %v728
  %v929 = vrcp.pop %v731
  %v930 = vrcp.pop %v734
  %v931 = vrcp.pop %v737
  %v932 = vrcp.pop %v740
  %v933 = vrcp.pop %v743
  %v934 = vrcp.pop %v746
  %v935 = vrcp.pop %v749
  %v936 = vrcp.pop %v752
  %v937 = vrcp.pop %v755
  %v938 = vrcp.pop %v758
  %v939 = vrcp.pop %v761
  %v940 = vrcp.pop %v764
  %v941 = vrcp.pop %v767
  %v942 = vrcp.pop %v770
  %v943 = vrcp.pop %v773
  %v944 = vrcp.pop %v776
  %v945 = vrcp.pop %v779
  %v946 = vrcp.pop %v782
  %v947 = vrcp.pop %v785
  %v948 = vrcp.pop %v788
  %v949 = vrcp.pop %v791
  %v950 = vrcp.pop %v794
  %v951 = vrcp.pop %v797
  %v952 = vrcp.pop %v800
  %v953 = vrcp.pop %v803
  %v954 = vrcp.pop %v806
  %v955 = vrcp.pop %v809
  %v956 = vrcp.pop %v812
  %v957 = vrcp.pop %v815
  %v958 = vrcp.pop %v818
  %v959 = vrcp.pop %v821
  %v960 = vrcp.pop %v824
  %v961 = vrcp.pop %v827
  %v962 = vrcp.pop %v830
  %v963 = vrcp.pop %v833
  %v964 = vrcp.pop %v836
  %v965 = vrcp.pop %v839
  %v966 = vrcp.pop %v842
  %v967 = vrcp.pop %v845
  %v968 = vrcp.pop %v848
  %v969 = vrcp.pop %v851
  %v970 = vrcp.pop %v854
  %v971 = vrcp.pop %v857
  %v972 = vrcp.pop %v860
  %v973 = vrcp.pop %v863
  %v974 = vrcp.pop %v866
  %v975 = vrcp.pop %v869
  %v976 = vrcp.pop %v872
  %v977 = vrcp.pop %v875
  %v978 = vrcp.pop %v878
  %v979 = vrcp.pop %v881
  %v980 = vrcp.pop %v884
  %v981 = vrcp.pop %v887
  %v982 = vrcp.pop %v890
  %v983 = vrcp.pop %v893
  %v984 = vrcp.pop %v896
  %v985 = vmul.f32 %v635, %v897
  %v986 = vmul.f32 %v638, %v898
  %v987 = vmul.f32 %v641, %v899
  %v988 = vmul.f32 %v644, %v900
  %v989 = vmul.f32 %v647, %v901
  %v990 = vmul.f32 %v650, %v902
  %v991 = vmul.f32 %v653, %v903
  %v992 = vmul.f32 %v656, %v904
  %v993 = vmul.f32 %v659, %v905
  %v994 = vmul.f32 %v662, %v906
  %v995 = vmul.f32 %v665, %v907
  %v996 = vmul.f32 %v668, %v908
  %v997 = vmul.f32 %v671, %v909
  %v998 = vmul.f32 %v674, %v910
  %v999 = vmul.f32 %v677, %v911
  %v1000 = vmul.f32 %v680, %v912
  %v1001 = vmul.f32 %v683, %v913
  %v1002 = vmul.f32 %v686, %v914
  %v1003 = vmul.f32 %v689, %v915
  %v1004 = vmul.f32 %v692, %v916
  %v1005 = vmul.f32 %v695, %v917
  %v1006 = vmul.f32 %v698, %v918
  %v1007 = vmul.f32 %v701, %v919
  %v1008 = vmul.f32 %v704, %v920
  %v1009 = vmul.f32 %v707, %v921
  %v1010 = vmul.f32 %v710, %v922
  %v1011 = vmul.f32 %v713, %v923
  %v1012 = vmul.f32 %v716, %v924
  %v1013 = vmul.f32 %v719, %v925
  %v1014 = vmul.f32 %v722, %v926
  %v1015 = vmul.f32 %v725, %v927
  %v1016 = vmul.f32 %v728, %v928
  %v1017 = vmul.f32 %v731, %v929
  %v1018 = vmul.f32 %v734, %v930
  %v1019 = vmul.f32 %v737, %v931
  %v1020 = vmul.f32 %v740, %v932
  %v1021 = vmul.f32 %v743, %v933
  %v1022 = vmul.f32 %v746, %v934
  %v1023 = vmul.f32 %v749, %v935
  %v1024 = vmul.f32 %v752, %v936
  %v1025 = vmul.f32 %v755, %v937
  %v1026 = vmul.f32 %v758, %v938
  %v1027 = vmul.f32 %v761, %v939
  %v1028 = vmul.f32 %v764, %v940
  %v1029 = vmul.f32 %v767, %v941
  %v1030 = vmul.f32 %v770, %v942
  %v1031 = vmul.f32 %v773, %v943
  %v1032 = vmul.f32 %v776, %v944
  %v1033 = vmul.f32 %v779, %v945
  %v1034 = vmul.f32 %v782, %v946
  %v1035 = vmul.f32 %v785, %v947
  %v1036 = vmul.f32 %v788, %v948
  %v1037 = vmul.f32 %v791, %v949
  %v1038 = vmul.f32 %v794, %v950
  %v1039 = vmul.f32 %v797, %v951
  %v1040 = vmul.f32 %v800, %v952
  %v1041 = vmul.f32 %v803, %v953
  %v1042 = vmul.f32 %v806, %v954
  %v1043 = vmul.f32 %v809, %v955
  %v1044 = vmul.f32 %v812, %v956
  %v1045 = vmul.f32 %v815, %v957
  %v1046 = vmul.f32 %v818, %v958
  %v1047 = vmul.f32 %v821, %v959
  %v1048 = vmul.f32 %v824, %v960
  %v1049 = vmul.f32 %v827, %v961
  %v1050 = vmul.f32 %v830, %v962
  %v1051 = vmul.f32 %v833, %v963
  %v1052 = vmul.f32 %v836, %v964
  %v1053 = vmul.f32 %v839, %v965
  %v1054 = vmul.f32 %v842, %v966
  %v1055 = vmul.f32 %v845, %v967
  %v1056 = vmul.f32 %v848, %v968
  %v1057 = vmul.f32 %v851, %v969
  %v1058 = vmul.f32 %v854, %v970
  %v1059 = vmul.f32 %v857, %v971
  %v1060 = vmul.f32 %v860, %v972
  %v1061 = vmul.f32 %v863, %v973
  %v1062 = vmul.f32 %v866, %v974
  %v1063 = vmul.f32 %v869, %v975
  %v1064 = vmul.f32 %v872, %v976
  %v1065 = vmul.f32 %v875, %v977
  %v1066 = vmul.f32 %v878, %v978
  %v1067 = vmul.f32 %v881, %v979
  %v1068 = vmul.f32 %v884, %v980
  %v1069 = vmul.f32 %v887, %v981
  %v1070 = vmul.f32 %v890, %v982
  %v1071 = vmul.f32 %v893, %v983
  %v1072 = vmul.f32 %v896, %v984
  %v1073 = vsub.f32 2.0, %v985
  %v1074 = vsub.f32 2.0, %v986
  %v1075 = vsub.f32 2.0, %v987
  %v1076 = vsub.f32 2.0, %v988
  %v1077 = vsub.f32 2.0, %v989
  %v1078 = vsub.f32 2.0, %v990
  %v1079 = vsub.f32 2.0, %v991
  %v1080 = vsub.f32 2.0, %v992
  %v1081 = vsub.f32 2.0, %v993
  %v1082 = vsub.f32 2.0, %v994
  %v1083 = vsub.f32 2.0, %v995
  %v1084 = vsub.f32 2.0, %v996
  %v1085 = vsub.f32 2.0, %v997
  %v1086 = vsub.f32 2.0, %v998
  %v1087 = vsub.f32 2.0, %v999
  %v1088 = vsub.f32 2.0, %v1000
  %v1089 = vsub.f32 2.0, %v1001
  %v1090 = vsub.f32 2.0, %v1002
  %v1091 = vsub.f32 2.0, %v1003
  %v1092 = vsub.f32 2.0, %v1004
  %v1093 = vsub.f32 2.0, %v1005
  %v1094 = vsub.f32 2.0, %v1006
  %v1095 = vsub.f32 2.0, %v1007
  %v1096 = vsub.f32 2.0, %v1008
  %v1097 = vsub.f32 2.0, %v1009
  %v1098 = vsub.f32 2.0, %v1010
  %v1099 = vsub.f32 2.0, %v1011
  %v1100 = vsub.f32 2.0, %v1012
  %v1101 = vsub.f32 2.0, %v1013
  %v1102 = vsub.f32 2.0, %v1014
  %v1103 = vsub.f32 2.0, %v1015
  %v1104 = vsub.f32 2.0, %v1016
  %v1105 = vsub.f32 2.0, %v1017
  %v1106 = vsub.f32 2.0, %v1018
  %v1107 = vsub.f32 2.0, %v1019
  %v1108 = vsub.f32 2.0, %v1020
  %v1109 = vsub.f32 2.0, %v1021
  %v1110 = vsub.f32 2.0, %v1022
  %v1111 = vsub.f32 2.0, %v1023
  %v1112 = vsub.f32 2.0, %v1024
  %v1113 = vsub.f32 2.0, %v1025
  %v1114 = vsub.f32 2.0, %v1026
  %v1115 = vsub.f32 2.0, %v1027
  %v1116 = vsub.f32 2.0, %v1028
  %v1117 = vsub.f32 2.0, %v1029
  %v1118 = vsub.f32 2.0, %v1030
  %v1119 = vsub.f32 2.0, %v1031
  %v1120 = vsub.f32 2.0, %v1032
  %v1121 = vsub.f32 2.0, %v1033
  %v1122 = vsub.f32 2.0, %v1034
  %v1123 = vsub.f32 2.0, %v1035
  %v1124 = vsub.f32 2.0, %v1036
  %v1125 = vsub.f32 2.0, %v1037
  %v1126 = vsub.f32 2.0, %v1038
  %v1127 = vsub.f32 2.0, %v1039
  %v1128 = vsub.f32 2.0, %v1040
  %v1129 = vsub.f32 2.0, %v1041
  %v1130 = vsub.f32 2.0, %v1042
  %v1131 = vsub.f32 2.0, %v1043
  %v1132 = vsub.f32 2.0, %v1044
  %v1133 = vsub.f32 2.0, %v1045
  %v1134 = vsub.f32 2.0, %v1046
  %v1135 = vsub.f32 2.0, %v1047
  %v1136 = vsub.f32 2.0, %v1048
  %v1137 = vsub.f32 2.0, %v1049
  %v1138 = vsub.f32 2.0, %v1050
  %v1139 = vsub.f32 2.0, %v1051
  %v1140 = vsub.f32 2.0, %v1052
  %v1141 = vsub.f32 2.0, %v1053
  %v1142 = vsub.f32 2.0, %v1054
  %v1143 = vsub.f32 2.0, %v1055
  %v1144 = vsub.f32 2.0, %v1056
  %v1145 = vsub.f32 2.0, %v1057
  %v1146 = vsub.f32 2.0, %v1058
  %v1147 = vsub.f32 2.0, %v1059
  %v1148 = vsub.f32 2.0, %v1060
  %v1149 = vsub.f32 2.0, %v1061
  %v1150 = vsub.f32 2.0, %v1062
  %v1151 = vsub.f32 2.0, %v1063
  %v1152 = vsub.f32 2.0, %v1064
  %v1153 = vsub.f32 2.0, %v1065
  %v1154 = vsub.f32 2.0, %v1066
  %v1155 = vsub.f32 2.0, %v1067
  %v1156 = vsub.f32 2.0, %v1068
  %v1157 = vsub.f32 2.0, %v1069
  %v1158 = vsub.f32 2.0, %v1070
  %v1159 = vsub.f32 2.0, %v1071
  %v1160 = vsub.f32 2.0, %v1072
  %v1161 = vmul.f32 %v897, %v1073
  %v1162 = vmul.f32 %v898, %v1074
  %v1163 = vmul.f32 %v899, %v1075
  %v1164 = vmul.f32 %v900, %v1076
  %v1165 = vmul.f32 %v901, %v1077
  %v1166 = vmul.f32 %v902, %v1078
  %v1167 = vmul.f32 %v903, %v1079
  %v1168 = vmul.f32 %v904, %v1080
  %v1169 = vmul.f32 %v905, %v1081
  %v1170 = vmul.f32 %v906, %v1082
  %v1171 = vmul.f32 %v907, %v1083
  %v1172 = vmul.f32 %v908, %v1084
  %v1173 = vmul.f32 %v909, %v1085
  %v1174 = vmul.f32 %v910, %v1086
  %v1175 = vmul.f32 %v911, %v1087
  %v1176 = vmul.f32 %v912, %v1088
  %v1177 = vmul.f32 %v913, %v1089
  %v1178 = vmul.f32 %v914, %v1090
  %v1179 = vmul.f32 %v915, %v1091
  %v1180 = vmul.f32 %v916, %v1092
  %v1181 = vmul.f32 %v917, %v1093
  %v1182 = vmul.f32 %v918, %v1094
  %v1183 = vmul.f32 %v919, %v1095
  %v1184 = vmul.f32 %v920, %v1096
  %v1185 = vmul.f32 %v921, %v1097
  %v1186 = vmul.f32 %v922, %v1098
  %v1187 = vmul.f32 %v923, %v1099
  %v1188 = vmul.f32 %v924, %v1100
  %v1189 = vmul.f32 %v925, %v1101
  %v1190 = vmul.f32 %v926, %v1102
  %v1191 = vmul.f32 %v927, %v1103
  %v1192 = vmul.f32 %v928, %v1104
  %v1193 = vmul.f32 %v929, %v1105
  %v1194 = vmul.f32 %v930, %v1106
  %v1195 = vmul.f32 %v931, %v1107
  %v1196 = vmul.f32 %v932, %v1108
  %v1197 = vmul.f32 %v933, %v1109
  %v1198 = vmul.f32 %v934, %v1110
  %v1199 = vmul.f32 %v935, %v1111
  %v1200 = vmul.f32 %v936, %v1112
  %v1201 = vmul.f32 %v937, %v1113
  %v1202 = vmul.f32 %v938, %v1114
  %v1203 = vmul.f32 %v939, %v1115
  %v1204 = vmul.f32 %v940, %v1116
  %v1205 = vmul.f32 %v941, %v1117
  %v1206 = vmul.f32 %v942, %v1118
  %v1207 = vmul.f32 %v943, %v1119
  %v1208 = vmul.f32 %v944, %v1120
  %v1209 = vmul.f32 %v945, %v1121
  %v1210 = vmul.f32 %v946, %v1122
  %v1211 = vmul.f32 %v947, %v1123
  %v1212 = vmul.f32 %v948, %v1124
  %v1213 = vmul.f32 %v949, %v1125
  %v1214 = vmul.f32 %v950, %v1126
  %v1215 = vmul.f32 %v951, %v1127
  %v1216 = vmul.f32 %v952, %v1128
  %v1217 = vmul.f32 %v953, %v1129
  %v1218 = vmul.f32 %v954, %v1130
  %v1219 = vmul.f32 %v955, %v1131
  %v1220 = vmul.f32 %v956, %v1132
  %v1221 = vmul.f32 %v957, %v1133
  %v1222 = vmul.f32 %v958, %v1134
  %v1223 = vmul.f32 %v959, %v1135
  %v1224 = vmul.f32 %v960, %v1136
  %v1225 = vmul.f32 %v961, %v1137
  %v1226 = vmul.f32 %v962, %v1138
  %v1227 = vmul.f32 %v963, %v1139
  %v1228 = vmul.f32 %v964, %v1140
  %v1229 = vmul.f32 %v965, %v1141
  %v1230 = vmul.f32 %v966, %v1142
  %v1231 = vmul.f32 %v967, %v1143
  %v1232 = vmul.f32 %v968, %v1144
  %v1233 = vmul.f32 %v969, %v1145
  %v1234 = vmul.f32 %v970, %v1146
  %v1235 = vmul.f32 %v971, %v1147
  %v1236 = vmul.f32 %v972, %v1148
  %v1237 = vmul.f32 %v973, %v1149
  %v1238 = vmul.f32 %v974, %v1150
  %v1239 = vmul.f32 %v975, %v1151
  %v1240 = vmul.f32 %v976, %v1152
  %v1241 = vmul.f32 %v977, %v1153
  %v1242 = vmul.f32 %v978, %v1154
  %v1243 = vmul.f32 %v979, %v1155
  %v1244 = vmul.f32 %v980, %v1156
  %v1245 = vmul.f32 %v981, %v1157
  %v1246 = vmul.f32 %v982, %v1158
  %v1247 = vmul.f32 %v983, %v1159
  %v1248 = vmul.f32 %v984, %v1160
  %v1249 = vmul.f32 %v458, %v1161
  %v1250 = vmul.f32 %v460, %v1162
  %v1251 = vmul.f32 %v462, %v1163
  %v1252 = vmul.f32 %v464, %v1164
  %v1253 = vmul.f32 %v466, %v1165
  %v1254 = vmul.f32 %v468, %v1166
  %v1255 = vmul.f32 %v470, %v1167
  %v1256 = vmul.f32 %v472, %v1168
  %v1257 = vmul.f32 %v474, %v1169
  %v1258 = vmul.f32 %v476, %v1170
  %v1259 = vmul.f32 %v478, %v1171
  %v1260 = vmul.f32 %v480, %v1172
  %v1261 = vmul.f32 %v482, %v1173
  %v1262 = vmul.f32 %v484, %v1174
  %v1263 = vmul.f32 %v486, %v1175
  %v1264 = vmul.f32 %v488, %v1176
  %v1265 = vmul.f32 %v490, %v1177
  %v1266 = vmul.f32 %v492, %v1178
  %v1267 = vmul.f32 %v494, %v1179
  %v1268 = vmul.f32 %v496, %v1180
  %v1269 = vmul.f32 %v498, %v1181
  %v1270 = vmul.f32 %v500, %v1182
  %v1271 = vmul.f32 %v502, %v1183
  %v1272 = vmul.f32 %v504, %v1184
  %v1273 = vmul.f32 %v506, %v1185
  %v1274 = vmul.f32 %v508, %v1186
  %v1275 = vmul.f32 %v510, %v1187
  %v1276 = vmul.f32 %v512, %v1188
  %v1277 = vmul.f32 %v514, %v1189
  %v1278 = vmul.f32 %v516, %v1190
  %v1279 = vmul.f32 %v518, %v1191
  %v1280 = vmul.f32 %v520, %v1192
  %v1281 = vmul.f32 %v522, %v1193
  %v1282 = vmul.f32 %v524, %v1194
  %v1283 = vmul.f32 %v526, %v1195
  %v1284 = vmul.f32 %v528, %v1196
  %v1285 = vmul.f32 %v530, %v1197
  %v1286 = vmul.f32 %v532, %v1198
  %v1287 = vmul.f32 %v534, %v1199
  %v1288 = vmul.f32 %v536, %v1200
  %v1289 = vmul.f32 %v538, %v1201
  %v1290 = vmul.f32 %v540, %v1202
  %v1291 = vmul.f32 %v542, %v1203
  %v1292 = vmul.f32 %v544, %v1204
  %v1293 = vmul.f32 %v546, %v1205
  %v1294 = vmul.f32 %v548, %v1206
  %v1295 = vmul.f32 %v550, %v1207
  %v1296 = vmul.f32 %v552, %v1208
  %v1297 = vmul.f32 %v554, %v1209
  %v1298 = vmul.f32 %v556, %v1210
  %v1299 = vmul.f32 %v558, %v1211
  %v1300 = vmul.f32 %v560, %v1212
  %v1301 = vmul.f32 %v562, %v1213
  %v1302 = vmul.f32 %v564, %v1214
  %v1303 = vmul.f32 %v566, %v1215
  %v1304 = vmul.f32 %v568, %v1216
  %v1305 = vmul.f32 %v570, %v1217
  %v1306 = vmul.f32 %v572, %v1218
  %v1307 = vmul.f32 %v574, %v1219
  %v1308 = vmul.f32 %v576, %v1220
  %v1309 = vmul.f32 %v578, %v1221
  %v1310 = vmul.f32 %v580, %v1222
  %v1311 = vmul.f32 %v582, %v1223
  %v1312 = vmul.f32 %v584, %v1224
  %v1313 = vmul.f32 %v586, %v1225
  %v1314 = vmul.f32 %v588, %v1226
  %v1315 = vmul.f32 %v590, %v1227
  %v1316 = vmul.f32 %v592, %v1228
  %v1317 = vmul.f32 %v594, %v1229
  %v1318 = vmul.f32 %v596, %v1230
  %v1319 = vmul.f32 %v598, %v1231
  %v1320 = vmul.f32 %v600, %v1232
  %v1321 = vmul.f32 %v602, %v1233
  %v1322 = vmul.f32 %v604, %v1234
  %v1323 = vmul.f32 %v606, %v1235
  %v1324 = vmul.f32 %v608, %v1236
  %v1325 = vmul.f32 %v610, %v1237
  %v1326 = vmul.f32 %v612, %v1238
  %v1327 = vmul.f32 %v614, %v1239
  %v1328 = vmul.f32 %v616, %v1240
  %v1329 = vmul.f32 %v618, %v1241
  %v1330 = vmul.f32 %v620, %v1242
  %v1331 = vmul.f32 %v622, %v1243
  %v1332 = vmul.f32 %v624, %v1244
  %v1333 = vmul.f32 %v626, %v1245
  %v1334 = vmul.f32 %v628, %v1246
  %v1335 = vmul.f32 %v630, %v1247
  %v1336 = vmul.f32 %v632, %v1248
  %1337 = vst.msk [vmem:[%s3] sm:$0xff] %vm104, %v1249
  %1338 = vst.msk [vmem:[%s3 + $0x8] sm:$0xff] %vm104, %v1250
  %1339 = vst.msk [vmem:[%s3 + $0x10] sm:$0xff] %vm104, %v1251
  %1340 = vst.msk [vmem:[%s3 + $0x18] sm:$0xff] %vm104, %v1252
  %1341 = vst.msk [vmem:[%s3 + $0x20] sm:$0xff] %vm104, %v1253
  %1342 = vst.msk [vmem:[%s3 + $0x28] sm:$0xff] %vm104, %v1254
  %1343 = vst.msk [vmem:[%s3 + $0x30] sm:$0xff] %vm104, %v1255
  %1344 = vst.msk [vmem:[%s3 + $0x38] sm:$0xff] %vm104, %v1256
  %1345 = vst.msk [vmem:[%s3 + $0x40] sm:$0xff] %vm104, %v1257
  %1346 = vst.msk [vmem:[%s3 + $0x48] sm:$0xff] %vm104, %v1258
  %1347 = vst.msk [vmem:[%s3 + $0x50] sm:$0xff] %vm104, %v1259
  %1348 = vst.msk [vmem:[%s3 + $0x58] sm:$0xff] %vm104, %v1260
  %1349 = vst.msk [vmem:[%s3 + $0x60] sm:$0xff] %vm104, %v1261
  %1350 = vst.msk [vmem:[%s3 + $0x68] sm:$0xff] %vm104, %v1262
  %1351 = vst.msk [vmem:[%s3 + $0x70] sm:$0xff] %vm104, %v1263
  %1352 = vst.msk [vmem:[%s3 + $0x78] sm:$0xff] %vm104, %v1264
  %1353 = vst.msk [vmem:[%s3 + $0x80] sm:$0xff] %vm104, %v1265
  %1354 = vst.msk [vmem:[%s3 + $0x88] sm:$0xff] %vm104, %v1266
  %1355 = vst.msk [vmem:[%s3 + $0x90] sm:$0xff] %vm104, %v1267
  %1356 = vst.msk [vmem:[%s3 + $0x98] sm:$0xff] %vm104, %v1268
  %1357 = vst.msk [vmem:[%s3 + $0xa0] sm:$0xff] %vm104, %v1269
  %1358 = vst.msk [vmem:[%s3 + $0xa8] sm:$0xff] %vm104, %v1270
  %1359 = vst.msk [vmem:[%s3 + $0xb0] sm:$0xff] %vm104, %v1271
  %1360 = vst.msk [vmem:[%s3 + $0xb8] sm:$0xff] %vm104, %v1272
  %1361 = vst.msk [vmem:[%s3 + $0xc0] sm:$0xff] %vm104, %v1273
  %1362 = vst.msk [vmem:[%s3 + $0xc8] sm:$0xff] %vm104, %v1274
  %1363 = vst.msk [vmem:[%s3 + $0xd0] sm:$0xff] %vm104, %v1275
  %1364 = vst.msk [vmem:[%s3 + $0xd8] sm:$0xff] %vm104, %v1276
  %1365 = vst.msk [vmem:[%s3 + $0xe0] sm:$0xff] %vm104, %v1277
  %1366 = vst.msk [vmem:[%s3 + $0xe8] sm:$0xff] %vm104, %v1278
  %1367 = vst.msk [vmem:[%s3 + $0xf0] sm:$0xff] %vm104, %v1279
  %1368 = vst.msk [vmem:[%s3 + $0xf8] sm:$0xff] %vm104, %v1280
  %1369 = vst.msk [vmem:[%s3 + $0x100] sm:$0xff] %vm104, %v1281
  %1370 = vst.msk [vmem:[%s3 + $0x108] sm:$0xff] %vm104, %v1282
  %1371 = vst.msk [vmem:[%s3 + $0x110] sm:$0xff] %vm104, %v1283
  %1372 = vst.msk [vmem:[%s3 + $0x118] sm:$0xff] %vm104, %v1284
  %1373 = vst.msk [vmem:[%s3 + $0x120] sm:$0xff] %vm104, %v1285
  %1374 = vst.msk [vmem:[%s3 + $0x128] sm:$0xff] %vm104, %v1286
  %1375 = vst.msk [vmem:[%s3 + $0x130] sm:$0xff] %vm104, %v1287
  %1376 = vst.msk [vmem:[%s3 + $0x138] sm:$0xff] %vm104, %v1288
  %1377 = vst.msk [vmem:[%s3 + $0x140] sm:$0xff] %vm104, %v1289
  %1378 = vst.msk [vmem:[%s3 + $0x148] sm:$0xff] %vm104, %v1290
  %1379 = vst.msk [vmem:[%s3 + $0x150] sm:$0xff] %vm104, %v1291
  %1380 = vst.msk [vmem:[%s3 + $0x158] sm:$0xff] %vm104, %v1292
  %1381 = vst.msk [vmem:[%s3 + $0x160] sm:$0xff] %vm104, %v1293
  %1382 = vst.msk [vmem:[%s3 + $0x168] sm:$0xff] %vm104, %v1294
  %1383 = vst.msk [vmem:[%s3 + $0x170] sm:$0xff] %vm104, %v1295
  %1384 = vst.msk [vmem:[%s3 + $0x178] sm:$0xff] %vm104, %v1296
  %1385 = vst.msk [vmem:[%s3 + $0x180] sm:$0xff] %vm104, %v1297
  %1386 = vst.msk [vmem:[%s3 + $0x188] sm:$0xff] %vm104, %v1298
  %1387 = vst.msk [vmem:[%s3 + $0x190] sm:$0xff] %vm104, %v1299
  %1388 = vst.msk [vmem:[%s3 + $0x198] sm:$0xff] %vm104, %v1300
  %1389 = vst.msk [vmem:[%s3 + $0x1a0] sm:$0xff] %vm104, %v1301
  %1390 = vst.msk [vmem:[%s3 + $0x1a8] sm:$0xff] %vm104, %v1302
  %1391 = vst.msk [vmem:[%s3 + $0x1b0] sm:$0xff] %vm104, %v1303
  %1392 = vst.msk [vmem:[%s3 + $0x1b8] sm:$0xff] %vm104, %v1304
  %1393 = vst.msk [vmem:[%s3 + $0x1c0] sm:$0xff] %vm104, %v1305
  %1394 = vst.msk [vmem:[%s3 + $0x1c8] sm:$0xff] %vm104, %v1306
  %1395 = vst.msk [vmem:[%s3 + $0x1d0] sm:$0xff] %vm104, %v1307
  %1396 = vst.msk [vmem:[%s3 + $0x1d8] sm:$0xff] %vm104, %v1308
  %1397 = vst.msk [vmem:[%s3 + $0x1e0] sm:$0xff] %vm104, %v1309
  %1398 = vst.msk [vmem:[%s3 + $0x1e8] sm:$0xff] %vm104, %v1310
  %1399 = vst.msk [vmem:[%s3 + $0x1f0] sm:$0xff] %vm104, %v1311
  %1400 = vst.msk [vmem:[%s3 + $0x1f8] sm:$0xff] %vm104, %v1312
  %1401 = vst.msk [vmem:[%s3 + $0x200] sm:$0xff] %vm104, %v1313
  %1402 = vst.msk [vmem:[%s3 + $0x208] sm:$0xff] %vm104, %v1314
  %1403 = vst.msk [vmem:[%s3 + $0x210] sm:$0xff] %vm104, %v1315
  %1404 = vst.msk [vmem:[%s3 + $0x218] sm:$0xff] %vm104, %v1316
  %1405 = vst.msk [vmem:[%s3 + $0x220] sm:$0xff] %vm104, %v1317
  %1406 = vst.msk [vmem:[%s3 + $0x228] sm:$0xff] %vm104, %v1318
  %1407 = vst.msk [vmem:[%s3 + $0x230] sm:$0xff] %vm104, %v1319
  %1408 = vst.msk [vmem:[%s3 + $0x238] sm:$0xff] %vm104, %v1320
  %1409 = vst.msk [vmem:[%s3 + $0x240] sm:$0xff] %vm104, %v1321
  %1410 = vst.msk [vmem:[%s3 + $0x248] sm:$0xff] %vm104, %v1322
  %1411 = vst.msk [vmem:[%s3 + $0x250] sm:$0xff] %vm104, %v1323
  %1412 = vst.msk [vmem:[%s3 + $0x258] sm:$0xff] %vm104, %v1324
  %1413 = vst.msk [vmem:[%s3 + $0x260] sm:$0xff] %vm104, %v1325
  %1414 = vst.msk [vmem:[%s3 + $0x268] sm:$0xff] %vm104, %v1326
  %1415 = vst.msk [vmem:[%s3 + $0x270] sm:$0xff] %vm104, %v1327
  %1416 = vst.msk [vmem:[%s3 + $0x278] sm:$0xff] %vm104, %v1328
  %1417 = vst.msk [vmem:[%s3 + $0x280] sm:$0xff] %vm104, %v1329
  %1418 = vst.msk [vmem:[%s3 + $0x288] sm:$0xff] %vm104, %v1330
  %1419 = vst.msk [vmem:[%s3 + $0x290] sm:$0xff] %vm104, %v1331
  %1420 = vst.msk [vmem:[%s3 + $0x298] sm:$0xff] %vm104, %v1332
  %1421 = vst.msk [vmem:[%s3 + $0x2a0] sm:$0xff] %vm104, %v1333
  %1422 = vst.msk [vmem:[%s3 + $0x2a8] sm:$0xff] %vm104, %v1334
  %1423 = vst.msk [vmem:[%s3 + $0x2b0] sm:$0xff] %vm104, %v1335
  %1424 = vst.msk [vmem:[%s3 + $0x2b8] sm:$0xff] %vm104, %v1336
  %v1425 = vld [vmem:[%s1] sm:$0xff]
  %v1426 = vld [vmem:[%s1 + $0x8] sm:$0xff]
  %v1427 = vld [vmem:[%s1 + $0x10] sm:$0xff]
  %v1428 = vld [vmem:[%s1 + $0x18] sm:$0xff]
  %v1429 = vld [vmem:[%s1 + $0x20] sm:$0xff]
  %v1430 = vld [vmem:[%s1 + $0x28] sm:$0xff]
  %v1431 = vld [vmem:[%s1 + $0x30] sm:$0xff]
  %v1432 = vld [vmem:[%s1 + $0x38] sm:$0xff]
  %v1433 = vld [vmem:[%s1 + $0x40] sm:$0xff]
  %v1434 = vld [vmem:[%s1 + $0x48] sm:$0xff]
  %v1435 = vld [vmem:[%s1 + $0x50] sm:$0xff]
  %v1436 = vld [vmem:[%s1 + $0x58] sm:$0xff]
  %v1437 = vld [vmem:[%s1 + $0x60] sm:$0xff]
  %v1438 = vld [vmem:[%s1 + $0x68] sm:$0xff]
  %v1439 = vld [vmem:[%s1 + $0x70] sm:$0xff]
  %v1440 = vld [vmem:[%s1 + $0x78] sm:$0xff]
  %v1441 = vld [vmem:[%s1 + $0x80] sm:$0xff]
  %v1442 = vld [vmem:[%s1 + $0x88] sm:$0xff]
  %v1443 = vld [vmem:[%s1 + $0x90] sm:$0xff]
  %v1444 = vld [vmem:[%s1 + $0x98] sm:$0xff]
  %v1445 = vld [vmem:[%s1 + $0xa0] sm:$0xff]
  %v1446 = vld [vmem:[%s1 + $0xa8] sm:$0xff]
  %v1447 = vld [vmem:[%s1 + $0xb0] sm:$0xff]
  %v1448 = vld [vmem:[%s1 + $0xb8] sm:$0xff]
  %v1449 = vld [vmem:[%s1 + $0xc0] sm:$0xff]
  %v1450 = vld [vmem:[%s1 + $0xc8] sm:$0xff]
  %v1451 = vld [vmem:[%s1 + $0xd0] sm:$0xff]
  %v1452 = vld [vmem:[%s1 + $0xd8] sm:$0xff]
  %v1453 = vld [vmem:[%s1 + $0xe0] sm:$0xff]
  %v1454 = vld [vmem:[%s1 + $0xe8] sm:$0xff]
  %v1455 = vld [vmem:[%s1 + $0xf0] sm:$0xff]
  %v1456 = vld [vmem:[%s1 + $0xf8] sm:$0xff]
  %v1457 = vld [vmem:[%s1 + $0x100] sm:$0xff]
  %v1458 = vld [vmem:[%s1 + $0x108] sm:$0xff]
  %v1459 = vld [vmem:[%s1 + $0x110] sm:$0xff]
  %v1460 = vld [vmem:[%s1 + $0x118] sm:$0xff]
  %v1461 = vld [vmem:[%s1 + $0x120] sm:$0xff]
  %v1462 = vld [vmem:[%s1 + $0x128] sm:$0xff]
  %v1463 = vld [vmem:[%s1 + $0x130] sm:$0xff]
  %v1464 = vld [vmem:[%s1 + $0x138] sm:$0xff]
  %v1465 = vld [vmem:[%s1 + $0x140] sm:$0xff]
  %v1466 = vld [vmem:[%s1 + $0x148] sm:$0xff]
  %v1467 = vld [vmem:[%s1 + $0x150] sm:$0xff]
  %v1468 = vld [vmem:[%s1 + $0x158] sm:$0xff]
  %v1469 = vld [vmem:[%s1 + $0x160] sm:$0xff]
  %v1470 = vld [vmem:[%s1 + $0x168] sm:$0xff]
  %v1471 = vld [vmem:[%s1 + $0x170] sm:$0xff]
  %v1472 = vld [vmem:[%s1 + $0x178] sm:$0xff]
  %v1473 = vld [vmem:[%s1 + $0x180] sm:$0xff]
  %v1474 = vld [vmem:[%s1 + $0x188] sm:$0xff]
  %v1475 = vld [vmem:[%s1 + $0x190] sm:$0xff]
  %v1476 = vld [vmem:[%s1 + $0x198] sm:$0xff]
  %v1477 = vld [vmem:[%s1 + $0x1a0] sm:$0xff]
  %v1478 = vld [vmem:[%s1 + $0x1a8] sm:$0xff]
  %v1479 = vld [vmem:[%s1 + $0x1b0] sm:$0xff]
  %v1480 = vld [vmem:[%s1 + $0x1b8] sm:$0xff]
  %v1481 = vld [vmem:[%s1 + $0x1c0] sm:$0xff]
  %v1482 = vld [vmem:[%s1 + $0x1c8] sm:$0xff]
  %v1483 = vld [vmem:[%s1 + $0x1d0] sm:$0xff]
  %v1484 = vld [vmem:[%s1 + $0x1d8] sm:$0xff]
  %v1485 = vld [vmem:[%s1 + $0x1e0] sm:$0xff]
  %v1486 = vld [vmem:[%s1 + $0x1e8] sm:$0xff]
  %v1487 = vld [vmem:[%s1 + $0x1f0] sm:$0xff]
  %v1488 = vld [vmem:[%s1 + $0x1f8] sm:$0xff]
  %v1489 = vld [vmem:[%s1 + $0x200] sm:$0xff]
  %v1490 = vld [vmem:[%s1 + $0x208] sm:$0xff]
  %v1491 = vld [vmem:[%s1 + $0x210] sm:$0xff]
  %v1492 = vld [vmem:[%s1 + $0x218] sm:$0xff]
  %v1493 = vld [vmem:[%s1 + $0x220] sm:$0xff]
  %v1494 = vld [vmem:[%s1 + $0x228] sm:$0xff]
  %v1495 = vld [vmem:[%s1 + $0x230] sm:$0xff]
  %v1496 = vld [vmem:[%s1 + $0x238] sm:$0xff]
  %v1497 = vld [vmem:[%s1 + $0x240] sm:$0xff]
  %v1498 = vld [vmem:[%s1 + $0x248] sm:$0xff]
  %v1499 = vld [vmem:[%s1 + $0x250] sm:$0xff]
  %v1500 = vld [vmem:[%s1 + $0x258] sm:$0xff]
  %v1501 = vld [vmem:[%s1 + $0x260] sm:$0xff]
  %v1502 = vld [vmem:[%s1 + $0x268] sm:$0xff]
  %v1503 = vld [vmem:[%s1 + $0x270] sm:$0xff]
  %v1504 = vld [vmem:[%s1 + $0x278] sm:$0xff]
  %v1505 = vld [vmem:[%s1 + $0x280] sm:$0xff]
  %v1506 = vld [vmem:[%s1 + $0x288] sm:$0xff]
  %v1507 = vld [vmem:[%s1 + $0x290] sm:$0xff]
  %v1508 = vld [vmem:[%s1 + $0x298] sm:$0xff]
  %v1509 = vld [vmem:[%s1 + $0x2a0] sm:$0xff]
  %v1510 = vld [vmem:[%s1 + $0x2a8] sm:$0xff]
  %v1511 = vld [vmem:[%s1 + $0x2b0] sm:$0xff]
  %v1512 = vld [vmem:[%s1 + $0x2b8] sm:$0xff]
  %v1513 = vld [vmem:[%s2] sm:$0xff]
  %v1514 = vld [vmem:[%s2 + $0x8] sm:$0xff]
  %v1515 = vld [vmem:[%s2 + $0x10] sm:$0xff]
  %v1516 = vld [vmem:[%s2 + $0x18] sm:$0xff]
  %v1517 = vld [vmem:[%s2 + $0x20] sm:$0xff]
  %v1518 = vld [vmem:[%s2 + $0x28] sm:$0xff]
  %v1519 = vld [vmem:[%s2 + $0x30] sm:$0xff]
  %v1520 = vld [vmem:[%s2 + $0x38] sm:$0xff]
  %v1521 = vld [vmem:[%s2 + $0x40] sm:$0xff]
  %v1522 = vld [vmem:[%s2 + $0x48] sm:$0xff]
  %v1523 = vld [vmem:[%s2 + $0x50] sm:$0xff]
  %v1524 = vld [vmem:[%s2 + $0x58] sm:$0xff]
  %v1525 = vld [vmem:[%s2 + $0x60] sm:$0xff]
  %v1526 = vld [vmem:[%s2 + $0x68] sm:$0xff]
  %v1527 = vld [vmem:[%s2 + $0x70] sm:$0xff]
  %v1528 = vld [vmem:[%s2 + $0x78] sm:$0xff]
  %v1529 = vld [vmem:[%s2 + $0x80] sm:$0xff]
  %v1530 = vld [vmem:[%s2 + $0x88] sm:$0xff]
  %v1531 = vld [vmem:[%s2 + $0x90] sm:$0xff]
  %v1532 = vld [vmem:[%s2 + $0x98] sm:$0xff]
  %v1533 = vld [vmem:[%s2 + $0xa0] sm:$0xff]
  %v1534 = vld [vmem:[%s2 + $0xa8] sm:$0xff]
  %v1535 = vld [vmem:[%s2 + $0xb0] sm:$0xff]
  %v1536 = vld [vmem:[%s2 + $0xb8] sm:$0xff]
  %v1537 = vld [vmem:[%s2 + $0xc0] sm:$0xff]
  %v1538 = vld [vmem:[%s2 + $0xc8] sm:$0xff]
  %v1539 = vld [vmem:[%s2 + $0xd0] sm:$0xff]
  %v1540 = vld [vmem:[%s2 + $0xd8] sm:$0xff]
  %v1541 = vld [vmem:[%s2 + $0xe0] sm:$0xff]
  %v1542 = vld [vmem:[%s2 + $0xe8] sm:$0xff]
  %v1543 = vld [vmem:[%s2 + $0xf0] sm:$0xff]
  %v1544 = vld [vmem:[%s2 + $0xf8] sm:$0xff]
  %v1545 = vld [vmem:[%s2 + $0x100] sm:$0xff]
  %v1546 = vld [vmem:[%s2 + $0x108] sm:$0xff]
  %v1547 = vld [vmem:[%s2 + $0x110] sm:$0xff]
  %v1548 = vld [vmem:[%s2 + $0x118] sm:$0xff]
  %v1549 = vld [vmem:[%s2 + $0x120] sm:$0xff]
  %v1550 = vld [vmem:[%s2 + $0x128] sm:$0xff]
  %v1551 = vld [vmem:[%s2 + $0x130] sm:$0xff]
  %v1552 = vld [vmem:[%s2 + $0x138] sm:$0xff]
  %v1553 = vld [vmem:[%s2 + $0x140] sm:$0xff]
  %v1554 = vld [vmem:[%s2 + $0x148] sm:$0xff]
  %v1555 = vld [vmem:[%s2 + $0x150] sm:$0xff]
  %v1556 = vld [vmem:[%s2 + $0x158] sm:$0xff]
  %v1557 = vmul.f32 %v1425, 0.1
  %v1558 = vmul.f32 %v1426, 0.1
  %v1559 = vmul.f32 %v1427, 0.1
  %v1560 = vmul.f32 %v1428, 0.1
  %v1561 = vmul.f32 %v1429, 0.1
  %v1562 = vmul.f32 %v1430, 0.1
  %v1563 = vmul.f32 %v1431, 0.1
  %v1564 = vmul.f32 %v1432, 0.1
  %v1565 = vmul.f32 %v1433, 0.1
  %v1566 = vmul.f32 %v1434, 0.1
  %v1567 = vmul.f32 %v1435, 0.1
  %v1568 = vmul.f32 %v1436, 0.1
  %v1569 = vmul.f32 %v1437, 0.1
  %v1570 = vmul.f32 %v1438, 0.1
  %v1571 = vmul.f32 %v1439, 0.1
  %v1572 = vmul.f32 %v1440, 0.1
  %v1573 = vmul.f32 %v1441, 0.1
  %v1574 = vmul.f32 %v1442, 0.1
  %v1575 = vmul.f32 %v1443, 0.1
  %v1576 = vmul.f32 %v1444, 0.1
  %v1577 = vmul.f32 %v1445, 0.1
  %v1578 = vmul.f32 %v1446, 0.1
  %v1579 = vmul.f32 %v1447, 0.1
  %v1580 = vmul.f32 %v1448, 0.1
  %v1581 = vmul.f32 %v1449, 0.1
  %v1582 = vmul.f32 %v1450, 0.1
  %v1583 = vmul.f32 %v1451, 0.1
  %v1584 = vmul.f32 %v1452, 0.1
  %v1585 = vmul.f32 %v1453, 0.1
  %v1586 = vmul.f32 %v1454, 0.1
  %v1587 = vmul.f32 %v1455, 0.1
  %v1588 = vmul.f32 %v1456, 0.1
  %v1589 = vmul.f32 %v1457, 0.1
  %v1590 = vmul.f32 %v1458, 0.1
  %v1591 = vmul.f32 %v1459, 0.1
  %v1592 = vmul.f32 %v1460, 0.1
  %v1593 = vmul.f32 %v1461, 0.1
  %v1594 = vmul.f32 %v1462, 0.1
  %v1595 = vmul.f32 %v1463, 0.1
  %v1596 = vmul.f32 %v1464, 0.1
  %v1597 = vmul.f32 %v1465, 0.1
  %v1598 = vmul.f32 %v1466, 0.1
  %v1599 = vmul.f32 %v1467, 0.1
  %v1600 = vmul.f32 %v1468, 0.1
  %v1601 = vmul.f32 %v1469, 0.1
  %v1602 = vmul.f32 %v1470, 0.1
  %v1603 = vmul.f32 %v1471, 0.1
  %v1604 = vmul.f32 %v1472, 0.1
  %v1605 = vmul.f32 %v1473, 0.1
  %v1606 = vmul.f32 %v1474, 0.1
  %v1607 = vmul.f32 %v1475, 0.1
  %v1608 = vmul.f32 %v1476, 0.1
  %v1609 = vmul.f32 %v1477, 0.1
  %v1610 = vmul.f32 %v1478, 0.1
  %v1611 = vmul.f32 %v1479, 0.1
  %v1612 = vmul.f32 %v1480, 0.1
  %v1613 = vmul.f32 %v1481, 0.1
  %v1614 = vmul.f32 %v1482, 0.1
  %v1615 = vmul.f32 %v1483, 0.1
  %v1616 = vmul.f32 %v1484, 0.1
  %v1617 = vmul.f32 %v1485, 0.1
  %v1618 = vmul.f32 %v1486, 0.1
  %v1619 = vmul.f32 %v1487, 0.1
  %v1620 = vmul.f32 %v1488, 0.1
  %v1621 = vmul.f32 %v1489, 0.1
  %v1622 = vmul.f32 %v1490, 0.1
  %v1623 = vmul.f32 %v1491, 0.1
  %v1624 = vmul.f32 %v1492, 0.1
  %v1625 = vmul.f32 %v1493, 0.1
  %v1626 = vmul.f32 %v1494, 0.1
  %v1627 = vmul.f32 %v1495, 0.1
  %v1628 = vmul.f32 %v1496, 0.1
  %v1629 = vmul.f32 %v1497, 0.1
  %v1630 = vmul.f32 %v1498, 0.1
  %v1631 = vmul.f32 %v1499, 0.1
  %v1632 = vmul.f32 %v1500, 0.1
  %v1633 = vmul.f32 %v1501, 0.1
  %v1634 = vmul.f32 %v1502, 0.1
  %v1635 = vmul.f32 %v1503, 0.1
  %v1636 = vmul.f32 %v1504, 0.1
  %v1637 = vmul.f32 %v1505, 0.1
  %v1638 = vmul.f32 %v1506, 0.1
  %v1639 = vmul.f32 %v1507, 0.1
  %v1640 = vmul.f32 %v1508, 0.1
  %v1641 = vmul.f32 %v1509, 0.1
  %v1642 = vmul.f32 %v1510, 0.1
  %v1643 = vmul.f32 %v1511, 0.1
  %v1644 = vmul.f32 %v1512, 0.1
  %1689 = vrot.lane.b32.xlu0 %v1513, 126
  %v1690 = vpop.permute.xlu0 %1689
  %1691 = vrot.lane.b32.xlu0 %v1514, 126
  %v1692 = vpop.permute.xlu0 %1691
  %1693 = vrot.lane.b32.xlu0 %v1515, 126
  %v1694 = vpop.permute.xlu0 %1693
  %1695 = vrot.lane.b32.xlu0 %v1516, 126
  %v1696 = vpop.permute.xlu0 %1695
  %1697 = vrot.lane.b32.xlu0 %v1517, 126
  %v1698 = vpop.permute.xlu0 %1697
  %1699 = vrot.lane.b32.xlu0 %v1518, 126
  %v1700 = vpop.permute.xlu0 %1699
  %1701 = vrot.lane.b32.xlu0 %v1519, 126
  %v1702 = vpop.permute.xlu0 %1701
  %1703 = vrot.lane.b32.xlu0 %v1520, 126
  %v1704 = vpop.permute.xlu0 %1703
  %1705 = vrot.lane.b32.xlu0 %v1521, 126
  %v1706 = vpop.permute.xlu0 %1705
  %1707 = vrot.lane.b32.xlu0 %v1522, 126
  %v1708 = vpop.permute.xlu0 %1707
  %1709 = vrot.lane.b32.xlu0 %v1523, 126
  %v1710 = vpop.permute.xlu0 %1709
  %1711 = vrot.lane.b32.xlu0 %v1524, 126
  %v1712 = vpop.permute.xlu0 %1711
  %1713 = vrot.lane.b32.xlu0 %v1525, 126
  %v1714 = vpop.permute.xlu0 %1713
  %1715 = vrot.lane.b32.xlu0 %v1526, 126
  %v1716 = vpop.permute.xlu0 %1715
  %1717 = vrot.lane.b32.xlu0 %v1527, 126
  %v1718 = vpop.permute.xlu0 %1717
  %1719 = vrot.lane.b32.xlu0 %v1528, 126
  %v1720 = vpop.permute.xlu0 %1719
  %1721 = vrot.lane.b32.xlu0 %v1529, 126
  %v1722 = vpop.permute.xlu0 %1721
  %1723 = vrot.lane.b32.xlu0 %v1530, 126
  %v1724 = vpop.permute.xlu0 %1723
  %1725 = vrot.lane.b32.xlu0 %v1531, 126
  %v1726 = vpop.permute.xlu0 %1725
  %1727 = vrot.lane.b32.xlu0 %v1532, 126
  %v1728 = vpop.permute.xlu0 %1727
  %1729 = vrot.lane.b32.xlu0 %v1533, 126
  %v1730 = vpop.permute.xlu0 %1729
  %1731 = vrot.lane.b32.xlu0 %v1534, 126
  %v1732 = vpop.permute.xlu0 %1731
  %1733 = vrot.lane.b32.xlu0 %v1535, 126
  %v1734 = vpop.permute.xlu0 %1733
  %1735 = vrot.lane.b32.xlu0 %v1536, 126
  %v1736 = vpop.permute.xlu0 %1735
  %1737 = vrot.lane.b32.xlu0 %v1537, 126
  %v1738 = vpop.permute.xlu0 %1737
  %1739 = vrot.lane.b32.xlu0 %v1538, 126
  %v1740 = vpop.permute.xlu0 %1739
  %1741 = vrot.lane.b32.xlu0 %v1539, 126
  %v1742 = vpop.permute.xlu0 %1741
  %1743 = vrot.lane.b32.xlu0 %v1540, 126
  %v1744 = vpop.permute.xlu0 %1743
  %1745 = vrot.lane.b32.xlu0 %v1541, 126
  %v1746 = vpop.permute.xlu0 %1745
  %1747 = vrot.lane.b32.xlu0 %v1542, 126
  %v1748 = vpop.permute.xlu0 %1747
  %1749 = vrot.lane.b32.xlu0 %v1543, 126
  %v1750 = vpop.permute.xlu0 %1749
  %1751 = vrot.lane.b32.xlu0 %v1544, 126
  %v1752 = vpop.permute.xlu0 %1751
  %1753 = vrot.lane.b32.xlu0 %v1545, 126
  %v1754 = vpop.permute.xlu0 %1753
  %1755 = vrot.lane.b32.xlu0 %v1546, 126
  %v1756 = vpop.permute.xlu0 %1755
  %1757 = vrot.lane.b32.xlu0 %v1547, 126
  %v1758 = vpop.permute.xlu0 %1757
  %1759 = vrot.lane.b32.xlu0 %v1548, 126
  %v1760 = vpop.permute.xlu0 %1759
  %1761 = vrot.lane.b32.xlu0 %v1549, 126
  %v1762 = vpop.permute.xlu0 %1761
  %1763 = vrot.lane.b32.xlu0 %v1550, 126
  %v1764 = vpop.permute.xlu0 %1763
  %1765 = vrot.lane.b32.xlu0 %v1551, 126
  %v1766 = vpop.permute.xlu0 %1765
  %1767 = vrot.lane.b32.xlu0 %v1552, 126
  %v1768 = vpop.permute.xlu0 %1767
  %1769 = vrot.lane.b32.xlu0 %v1553, 126
  %v1770 = vpop.permute.xlu0 %1769
  %1771 = vrot.lane.b32.xlu0 %v1554, 126
  %v1772 = vpop.permute.xlu0 %1771
  %1773 = vrot.lane.b32.xlu0 %v1555, 126
  %v1774 = vpop.permute.xlu0 %1773
  %1775 = vrot.lane.b32.xlu0 %v1556, 126
  %v1776 = vpop.permute.xlu0 %1775
  %v1821 = vmul.f32 %v1557, %v1690
  %v1822 = vmul.f32 %v1558, %v1692
  %v1823 = vmul.f32 %v1559, %v1694
  %v1824 = vmul.f32 %v1560, %v1696
  %v1825 = vmul.f32 %v1561, %v1698
  %v1826 = vmul.f32 %v1562, %v1700
  %v1827 = vmul.f32 %v1563, %v1702
  %v1828 = vmul.f32 %v1564, %v1704
  %v1829 = vmul.f32 %v1565, %v1706
  %v1830 = vmul.f32 %v1566, %v1708
  %v1831 = vmul.f32 %v1567, %v1710
  %v1832 = vmul.f32 %v1568, %v1712
  %v1833 = vmul.f32 %v1569, %v1714
  %v1834 = vmul.f32 %v1570, %v1716
  %v1835 = vmul.f32 %v1571, %v1718
  %v1836 = vmul.f32 %v1572, %v1720
  %v1837 = vmul.f32 %v1573, %v1722
  %v1838 = vmul.f32 %v1574, %v1724
  %v1839 = vmul.f32 %v1575, %v1726
  %v1840 = vmul.f32 %v1576, %v1728
  %v1841 = vmul.f32 %v1577, %v1730
  %v1842 = vmul.f32 %v1578, %v1732
  %v1843 = vmul.f32 %v1579, %v1734
  %v1844 = vmul.f32 %v1580, %v1736
  %v1845 = vmul.f32 %v1581, %v1738
  %v1846 = vmul.f32 %v1582, %v1740
  %v1847 = vmul.f32 %v1583, %v1742
  %v1848 = vmul.f32 %v1584, %v1744
  %v1849 = vmul.f32 %v1585, %v1746
  %v1850 = vmul.f32 %v1586, %v1748
  %v1851 = vmul.f32 %v1587, %v1750
  %v1852 = vmul.f32 %v1588, %v1752
  %v1853 = vmul.f32 %v1589, %v1754
  %v1854 = vmul.f32 %v1590, %v1756
  %v1855 = vmul.f32 %v1591, %v1758
  %v1856 = vmul.f32 %v1592, %v1760
  %v1857 = vmul.f32 %v1593, %v1762
  %v1858 = vmul.f32 %v1594, %v1764
  %v1859 = vmul.f32 %v1595, %v1766
  %v1860 = vmul.f32 %v1596, %v1768
  %v1861 = vmul.f32 %v1597, %v1770
  %v1862 = vmul.f32 %v1598, %v1772
  %v1863 = vmul.f32 %v1599, %v1774
  %v1864 = vmul.f32 %v1600, %v1776
  %v1865 = vmul.f32 %v1601, %v1690
  %v1866 = vmul.f32 %v1602, %v1692
  %v1867 = vmul.f32 %v1603, %v1694
  %v1868 = vmul.f32 %v1604, %v1696
  %v1869 = vmul.f32 %v1605, %v1698
  %v1870 = vmul.f32 %v1606, %v1700
  %v1871 = vmul.f32 %v1607, %v1702
  %v1872 = vmul.f32 %v1608, %v1704
  %v1873 = vmul.f32 %v1609, %v1706
  %v1874 = vmul.f32 %v1610, %v1708
  %v1875 = vmul.f32 %v1611, %v1710
  %v1876 = vmul.f32 %v1612, %v1712
  %v1877 = vmul.f32 %v1613, %v1714
  %v1878 = vmul.f32 %v1614, %v1716
  %v1879 = vmul.f32 %v1615, %v1718
  %v1880 = vmul.f32 %v1616, %v1720
  %v1881 = vmul.f32 %v1617, %v1722
  %v1882 = vmul.f32 %v1618, %v1724
  %v1883 = vmul.f32 %v1619, %v1726
  %v1884 = vmul.f32 %v1620, %v1728
  %v1885 = vmul.f32 %v1621, %v1730
  %v1886 = vmul.f32 %v1622, %v1732
  %v1887 = vmul.f32 %v1623, %v1734
  %v1888 = vmul.f32 %v1624, %v1736
  %v1889 = vmul.f32 %v1625, %v1738
  %v1890 = vmul.f32 %v1626, %v1740
  %v1891 = vmul.f32 %v1627, %v1742
  %v1892 = vmul.f32 %v1628, %v1744
  %v1893 = vmul.f32 %v1629, %v1746
  %v1894 = vmul.f32 %v1630, %v1748
  %v1895 = vmul.f32 %v1631, %v1750
  %v1896 = vmul.f32 %v1632, %v1752
  %v1897 = vmul.f32 %v1633, %v1754
  %v1898 = vmul.f32 %v1634, %v1756
  %v1899 = vmul.f32 %v1635, %v1758
  %v1900 = vmul.f32 %v1636, %v1760
  %v1901 = vmul.f32 %v1637, %v1762
  %v1902 = vmul.f32 %v1638, %v1764
  %v1903 = vmul.f32 %v1639, %v1766
  %v1904 = vmul.f32 %v1640, %v1768
  %v1905 = vmul.f32 %v1641, %v1770
  %v1906 = vmul.f32 %v1642, %v1772
  %v1907 = vmul.f32 %v1643, %v1774
  %v1908 = vmul.f32 %v1644, %v1776
  %v1909 = vadd.f32 %v1821, %v1513
  %v1910 = vadd.f32 %v1822, %v1514
  %v1911 = vadd.f32 %v1823, %v1515
  %v1912 = vadd.f32 %v1824, %v1516
  %v1913 = vadd.f32 %v1825, %v1517
  %v1914 = vadd.f32 %v1826, %v1518
  %v1915 = vadd.f32 %v1827, %v1519
  %v1916 = vadd.f32 %v1828, %v1520
  %v1917 = vadd.f32 %v1829, %v1521
  %v1918 = vadd.f32 %v1830, %v1522
  %v1919 = vadd.f32 %v1831, %v1523
  %v1920 = vadd.f32 %v1832, %v1524
  %v1921 = vadd.f32 %v1833, %v1525
  %v1922 = vadd.f32 %v1834, %v1526
  %v1923 = vadd.f32 %v1835, %v1527
  %v1924 = vadd.f32 %v1836, %v1528
  %v1925 = vadd.f32 %v1837, %v1529
  %v1926 = vadd.f32 %v1838, %v1530
  %v1927 = vadd.f32 %v1839, %v1531
  %v1928 = vadd.f32 %v1840, %v1532
  %v1929 = vadd.f32 %v1841, %v1533
  %v1930 = vadd.f32 %v1842, %v1534
  %v1931 = vadd.f32 %v1843, %v1535
  %v1932 = vadd.f32 %v1844, %v1536
  %v1933 = vadd.f32 %v1845, %v1537
  %v1934 = vadd.f32 %v1846, %v1538
  %v1935 = vadd.f32 %v1847, %v1539
  %v1936 = vadd.f32 %v1848, %v1540
  %v1937 = vadd.f32 %v1849, %v1541
  %v1938 = vadd.f32 %v1850, %v1542
  %v1939 = vadd.f32 %v1851, %v1543
  %v1940 = vadd.f32 %v1852, %v1544
  %v1941 = vadd.f32 %v1853, %v1545
  %v1942 = vadd.f32 %v1854, %v1546
  %v1943 = vadd.f32 %v1855, %v1547
  %v1944 = vadd.f32 %v1856, %v1548
  %v1945 = vadd.f32 %v1857, %v1549
  %v1946 = vadd.f32 %v1858, %v1550
  %v1947 = vadd.f32 %v1859, %v1551
  %v1948 = vadd.f32 %v1860, %v1552
  %v1949 = vadd.f32 %v1861, %v1553
  %v1950 = vadd.f32 %v1862, %v1554
  %v1951 = vadd.f32 %v1863, %v1555
  %v1952 = vadd.f32 %v1864, %v1556
  %v1953 = vadd.f32 %v1865, %v1513
  %v1954 = vadd.f32 %v1866, %v1514
  %v1955 = vadd.f32 %v1867, %v1515
  %v1956 = vadd.f32 %v1868, %v1516
  %v1957 = vadd.f32 %v1869, %v1517
  %v1958 = vadd.f32 %v1870, %v1518
  %v1959 = vadd.f32 %v1871, %v1519
  %v1960 = vadd.f32 %v1872, %v1520
  %v1961 = vadd.f32 %v1873, %v1521
  %v1962 = vadd.f32 %v1874, %v1522
  %v1963 = vadd.f32 %v1875, %v1523
  %v1964 = vadd.f32 %v1876, %v1524
  %v1965 = vadd.f32 %v1877, %v1525
  %v1966 = vadd.f32 %v1878, %v1526
  %v1967 = vadd.f32 %v1879, %v1527
  %v1968 = vadd.f32 %v1880, %v1528
  %v1969 = vadd.f32 %v1881, %v1529
  %v1970 = vadd.f32 %v1882, %v1530
  %v1971 = vadd.f32 %v1883, %v1531
  %v1972 = vadd.f32 %v1884, %v1532
  %v1973 = vadd.f32 %v1885, %v1533
  %v1974 = vadd.f32 %v1886, %v1534
  %v1975 = vadd.f32 %v1887, %v1535
  %v1976 = vadd.f32 %v1888, %v1536
  %v1977 = vadd.f32 %v1889, %v1537
  %v1978 = vadd.f32 %v1890, %v1538
  %v1979 = vadd.f32 %v1891, %v1539
  %v1980 = vadd.f32 %v1892, %v1540
  %v1981 = vadd.f32 %v1893, %v1541
  %v1982 = vadd.f32 %v1894, %v1542
  %v1983 = vadd.f32 %v1895, %v1543
  %v1984 = vadd.f32 %v1896, %v1544
  %v1985 = vadd.f32 %v1897, %v1545
  %v1986 = vadd.f32 %v1898, %v1546
  %v1987 = vadd.f32 %v1899, %v1547
  %v1988 = vadd.f32 %v1900, %v1548
  %v1989 = vadd.f32 %v1901, %v1549
  %v1990 = vadd.f32 %v1902, %v1550
  %v1991 = vadd.f32 %v1903, %v1551
  %v1992 = vadd.f32 %v1904, %v1552
  %v1993 = vadd.f32 %v1905, %v1553
  %v1994 = vadd.f32 %v1906, %v1554
  %v1995 = vadd.f32 %v1907, %v1555
  %v1996 = vadd.f32 %v1908, %v1556
  %v1997 = vmul.f32 %v1425, 0.2
  %v1998 = vmul.f32 %v1426, 0.2
  %v1999 = vmul.f32 %v1427, 0.2
  %v2000 = vmul.f32 %v1428, 0.2
  %v2001 = vmul.f32 %v1429, 0.2
  %v2002 = vmul.f32 %v1430, 0.2
  %v2003 = vmul.f32 %v1431, 0.2
  %v2004 = vmul.f32 %v1432, 0.2
  %v2005 = vmul.f32 %v1433, 0.2
  %v2006 = vmul.f32 %v1434, 0.2
  %v2007 = vmul.f32 %v1435, 0.2
  %v2008 = vmul.f32 %v1436, 0.2
  %v2009 = vmul.f32 %v1437, 0.2
  %v2010 = vmul.f32 %v1438, 0.2
  %v2011 = vmul.f32 %v1439, 0.2
  %v2012 = vmul.f32 %v1440, 0.2
  %v2013 = vmul.f32 %v1441, 0.2
  %v2014 = vmul.f32 %v1442, 0.2
  %v2015 = vmul.f32 %v1443, 0.2
  %v2016 = vmul.f32 %v1444, 0.2
  %v2017 = vmul.f32 %v1445, 0.2
  %v2018 = vmul.f32 %v1446, 0.2
  %v2019 = vmul.f32 %v1447, 0.2
  %v2020 = vmul.f32 %v1448, 0.2
  %v2021 = vmul.f32 %v1449, 0.2
  %v2022 = vmul.f32 %v1450, 0.2
  %v2023 = vmul.f32 %v1451, 0.2
  %v2024 = vmul.f32 %v1452, 0.2
  %v2025 = vmul.f32 %v1453, 0.2
  %v2026 = vmul.f32 %v1454, 0.2
  %v2027 = vmul.f32 %v1455, 0.2
  %v2028 = vmul.f32 %v1456, 0.2
  %v2029 = vmul.f32 %v1457, 0.2
  %v2030 = vmul.f32 %v1458, 0.2
  %v2031 = vmul.f32 %v1459, 0.2
  %v2032 = vmul.f32 %v1460, 0.2
  %v2033 = vmul.f32 %v1461, 0.2
  %v2034 = vmul.f32 %v1462, 0.2
  %v2035 = vmul.f32 %v1463, 0.2
  %v2036 = vmul.f32 %v1464, 0.2
  %v2037 = vmul.f32 %v1465, 0.2
  %v2038 = vmul.f32 %v1466, 0.2
  %v2039 = vmul.f32 %v1467, 0.2
  %v2040 = vmul.f32 %v1468, 0.2
  %v2041 = vmul.f32 %v1469, 0.2
  %v2042 = vmul.f32 %v1470, 0.2
  %v2043 = vmul.f32 %v1471, 0.2
  %v2044 = vmul.f32 %v1472, 0.2
  %v2045 = vmul.f32 %v1473, 0.2
  %v2046 = vmul.f32 %v1474, 0.2
  %v2047 = vmul.f32 %v1475, 0.2
  %v2048 = vmul.f32 %v1476, 0.2
  %v2049 = vmul.f32 %v1477, 0.2
  %v2050 = vmul.f32 %v1478, 0.2
  %v2051 = vmul.f32 %v1479, 0.2
  %v2052 = vmul.f32 %v1480, 0.2
  %v2053 = vmul.f32 %v1481, 0.2
  %v2054 = vmul.f32 %v1482, 0.2
  %v2055 = vmul.f32 %v1483, 0.2
  %v2056 = vmul.f32 %v1484, 0.2
  %v2057 = vmul.f32 %v1485, 0.2
  %v2058 = vmul.f32 %v1486, 0.2
  %v2059 = vmul.f32 %v1487, 0.2
  %v2060 = vmul.f32 %v1488, 0.2
  %v2061 = vmul.f32 %v1489, 0.2
  %v2062 = vmul.f32 %v1490, 0.2
  %v2063 = vmul.f32 %v1491, 0.2
  %v2064 = vmul.f32 %v1492, 0.2
  %v2065 = vmul.f32 %v1493, 0.2
  %v2066 = vmul.f32 %v1494, 0.2
  %v2067 = vmul.f32 %v1495, 0.2
  %v2068 = vmul.f32 %v1496, 0.2
  %v2069 = vmul.f32 %v1497, 0.2
  %v2070 = vmul.f32 %v1498, 0.2
  %v2071 = vmul.f32 %v1499, 0.2
  %v2072 = vmul.f32 %v1500, 0.2
  %v2073 = vmul.f32 %v1501, 0.2
  %v2074 = vmul.f32 %v1502, 0.2
  %v2075 = vmul.f32 %v1503, 0.2
  %v2076 = vmul.f32 %v1504, 0.2
  %v2077 = vmul.f32 %v1505, 0.2
  %v2078 = vmul.f32 %v1506, 0.2
  %v2079 = vmul.f32 %v1507, 0.2
  %v2080 = vmul.f32 %v1508, 0.2
  %v2081 = vmul.f32 %v1509, 0.2
  %v2082 = vmul.f32 %v1510, 0.2
  %v2083 = vmul.f32 %v1511, 0.2
  %v2084 = vmul.f32 %v1512, 0.2
  %v2085 = vmul.f32 %v1997, 1.442695
  %v2086 = vpow.pop %v2085
  %v2087 = vmul.f32 %v1998, 1.442695
  %v2088 = vpow.pop %v2087
  %v2089 = vmul.f32 %v1999, 1.442695
  %v2090 = vpow.pop %v2089
  %v2091 = vmul.f32 %v2000, 1.442695
  %v2092 = vpow.pop %v2091
  %v2093 = vmul.f32 %v2001, 1.442695
  %v2094 = vpow.pop %v2093
  %v2095 = vmul.f32 %v2002, 1.442695
  %v2096 = vpow.pop %v2095
  %v2097 = vmul.f32 %v2003, 1.442695
  %v2098 = vpow.pop %v2097
  %v2099 = vmul.f32 %v2004, 1.442695
  %v2100 = vpow.pop %v2099
  %v2101 = vmul.f32 %v2005, 1.442695
  %v2102 = vpow.pop %v2101
  %v2103 = vmul.f32 %v2006, 1.442695
  %v2104 = vpow.pop %v2103
  %v2105 = vmul.f32 %v2007, 1.442695
  %v2106 = vpow.pop %v2105
  %v2107 = vmul.f32 %v2008, 1.442695
  %v2108 = vpow.pop %v2107
  %v2109 = vmul.f32 %v2009, 1.442695
  %v2110 = vpow.pop %v2109
  %v2111 = vmul.f32 %v2010, 1.442695
  %v2112 = vpow.pop %v2111
  %v2113 = vmul.f32 %v2011, 1.442695
  %v2114 = vpow.pop %v2113
  %v2115 = vmul.f32 %v2012, 1.442695
  %v2116 = vpow.pop %v2115
  %v2117 = vmul.f32 %v2013, 1.442695
  %v2118 = vpow.pop %v2117
  %v2119 = vmul.f32 %v2014, 1.442695
  %v2120 = vpow.pop %v2119
  %v2121 = vmul.f32 %v2015, 1.442695
  %v2122 = vpow.pop %v2121
  %v2123 = vmul.f32 %v2016, 1.442695
  %v2124 = vpow.pop %v2123
  %v2125 = vmul.f32 %v2017, 1.442695
  %v2126 = vpow.pop %v2125
  %v2127 = vmul.f32 %v2018, 1.442695
  %v2128 = vpow.pop %v2127
  %v2129 = vmul.f32 %v2019, 1.442695
  %v2130 = vpow.pop %v2129
  %v2131 = vmul.f32 %v2020, 1.442695
  %v2132 = vpow.pop %v2131
  %v2133 = vmul.f32 %v2021, 1.442695
  %v2134 = vpow.pop %v2133
  %v2135 = vmul.f32 %v2022, 1.442695
  %v2136 = vpow.pop %v2135
  %v2137 = vmul.f32 %v2023, 1.442695
  %v2138 = vpow.pop %v2137
  %v2139 = vmul.f32 %v2024, 1.442695
  %v2140 = vpow.pop %v2139
  %v2141 = vmul.f32 %v2025, 1.442695
  %v2142 = vpow.pop %v2141
  %v2143 = vmul.f32 %v2026, 1.442695
  %v2144 = vpow.pop %v2143
  %v2145 = vmul.f32 %v2027, 1.442695
  %v2146 = vpow.pop %v2145
  %v2147 = vmul.f32 %v2028, 1.442695
  %v2148 = vpow.pop %v2147
  %v2149 = vmul.f32 %v2029, 1.442695
  %v2150 = vpow.pop %v2149
  %v2151 = vmul.f32 %v2030, 1.442695
  %v2152 = vpow.pop %v2151
  %v2153 = vmul.f32 %v2031, 1.442695
  %v2154 = vpow.pop %v2153
  %v2155 = vmul.f32 %v2032, 1.442695
  %v2156 = vpow.pop %v2155
  %v2157 = vmul.f32 %v2033, 1.442695
  %v2158 = vpow.pop %v2157
  %v2159 = vmul.f32 %v2034, 1.442695
  %v2160 = vpow.pop %v2159
  %v2161 = vmul.f32 %v2035, 1.442695
  %v2162 = vpow.pop %v2161
  %v2163 = vmul.f32 %v2036, 1.442695
  %v2164 = vpow.pop %v2163
  %v2165 = vmul.f32 %v2037, 1.442695
  %v2166 = vpow.pop %v2165
  %v2167 = vmul.f32 %v2038, 1.442695
  %v2168 = vpow.pop %v2167
  %v2169 = vmul.f32 %v2039, 1.442695
  %v2170 = vpow.pop %v2169
  %v2171 = vmul.f32 %v2040, 1.442695
  %v2172 = vpow.pop %v2171
  %v2173 = vmul.f32 %v2041, 1.442695
  %v2174 = vpow.pop %v2173
  %v2175 = vmul.f32 %v2042, 1.442695
  %v2176 = vpow.pop %v2175
  %v2177 = vmul.f32 %v2043, 1.442695
  %v2178 = vpow.pop %v2177
  %v2179 = vmul.f32 %v2044, 1.442695
  %v2180 = vpow.pop %v2179
  %v2181 = vmul.f32 %v2045, 1.442695
  %v2182 = vpow.pop %v2181
  %v2183 = vmul.f32 %v2046, 1.442695
  %v2184 = vpow.pop %v2183
  %v2185 = vmul.f32 %v2047, 1.442695
  %v2186 = vpow.pop %v2185
  %v2187 = vmul.f32 %v2048, 1.442695
  %v2188 = vpow.pop %v2187
  %v2189 = vmul.f32 %v2049, 1.442695
  %v2190 = vpow.pop %v2189
  %v2191 = vmul.f32 %v2050, 1.442695
  %v2192 = vpow.pop %v2191
  %v2193 = vmul.f32 %v2051, 1.442695
  %v2194 = vpow.pop %v2193
  %v2195 = vmul.f32 %v2052, 1.442695
  %v2196 = vpow.pop %v2195
  %v2197 = vmul.f32 %v2053, 1.442695
  %v2198 = vpow.pop %v2197
  %v2199 = vmul.f32 %v2054, 1.442695
  %v2200 = vpow.pop %v2199
  %v2201 = vmul.f32 %v2055, 1.442695
  %v2202 = vpow.pop %v2201
  %v2203 = vmul.f32 %v2056, 1.442695
  %v2204 = vpow.pop %v2203
  %v2205 = vmul.f32 %v2057, 1.442695
  %v2206 = vpow.pop %v2205
  %v2207 = vmul.f32 %v2058, 1.442695
  %v2208 = vpow.pop %v2207
  %v2209 = vmul.f32 %v2059, 1.442695
  %v2210 = vpow.pop %v2209
  %v2211 = vmul.f32 %v2060, 1.442695
  %v2212 = vpow.pop %v2211
  %v2213 = vmul.f32 %v2061, 1.442695
  %v2214 = vpow.pop %v2213
  %v2215 = vmul.f32 %v2062, 1.442695
  %v2216 = vpow.pop %v2215
  %v2217 = vmul.f32 %v2063, 1.442695
  %v2218 = vpow.pop %v2217
  %v2219 = vmul.f32 %v2064, 1.442695
  %v2220 = vpow.pop %v2219
  %v2221 = vmul.f32 %v2065, 1.442695
  %v2222 = vpow.pop %v2221
  %v2223 = vmul.f32 %v2066, 1.442695
  %v2224 = vpow.pop %v2223
  %v2225 = vmul.f32 %v2067, 1.442695
  %v2226 = vpow.pop %v2225
  %v2227 = vmul.f32 %v2068, 1.442695
  %v2228 = vpow.pop %v2227
  %v2229 = vmul.f32 %v2069, 1.442695
  %v2230 = vpow.pop %v2229
  %v2231 = vmul.f32 %v2070, 1.442695
  %v2232 = vpow.pop %v2231
  %v2233 = vmul.f32 %v2071, 1.442695
  %v2234 = vpow.pop %v2233
  %v2235 = vmul.f32 %v2072, 1.442695
  %v2236 = vpow.pop %v2235
  %v2237 = vmul.f32 %v2073, 1.442695
  %v2238 = vpow.pop %v2237
  %v2239 = vmul.f32 %v2074, 1.442695
  %v2240 = vpow.pop %v2239
  %v2241 = vmul.f32 %v2075, 1.442695
  %v2242 = vpow.pop %v2241
  %v2243 = vmul.f32 %v2076, 1.442695
  %v2244 = vpow.pop %v2243
  %v2245 = vmul.f32 %v2077, 1.442695
  %v2246 = vpow.pop %v2245
  %v2247 = vmul.f32 %v2078, 1.442695
  %v2248 = vpow.pop %v2247
  %v2249 = vmul.f32 %v2079, 1.442695
  %v2250 = vpow.pop %v2249
  %v2251 = vmul.f32 %v2080, 1.442695
  %v2252 = vpow.pop %v2251
  %v2253 = vmul.f32 %v2081, 1.442695
  %v2254 = vpow.pop %v2253
  %v2255 = vmul.f32 %v2082, 1.442695
  %v2256 = vpow.pop %v2255
  %v2257 = vmul.f32 %v2083, 1.442695
  %v2258 = vpow.pop %v2257
  %v2259 = vmul.f32 %v2084, 1.442695
  %v2260 = vpow.pop %v2259
  %v2261 = vmul.f32 %v2086, %v1513
  %v2262 = vmul.f32 %v2088, %v1514
  %v2263 = vmul.f32 %v2090, %v1515
  %v2264 = vmul.f32 %v2092, %v1516
  %v2265 = vmul.f32 %v2094, %v1517
  %v2266 = vmul.f32 %v2096, %v1518
  %v2267 = vmul.f32 %v2098, %v1519
  %v2268 = vmul.f32 %v2100, %v1520
  %v2269 = vmul.f32 %v2102, %v1521
  %v2270 = vmul.f32 %v2104, %v1522
  %v2271 = vmul.f32 %v2106, %v1523
  %v2272 = vmul.f32 %v2108, %v1524
  %v2273 = vmul.f32 %v2110, %v1525
  %v2274 = vmul.f32 %v2112, %v1526
  %v2275 = vmul.f32 %v2114, %v1527
  %v2276 = vmul.f32 %v2116, %v1528
  %v2277 = vmul.f32 %v2118, %v1529
  %v2278 = vmul.f32 %v2120, %v1530
  %v2279 = vmul.f32 %v2122, %v1531
  %v2280 = vmul.f32 %v2124, %v1532
  %v2281 = vmul.f32 %v2126, %v1533
  %v2282 = vmul.f32 %v2128, %v1534
  %v2283 = vmul.f32 %v2130, %v1535
  %v2284 = vmul.f32 %v2132, %v1536
  %v2285 = vmul.f32 %v2134, %v1537
  %v2286 = vmul.f32 %v2136, %v1538
  %v2287 = vmul.f32 %v2138, %v1539
  %v2288 = vmul.f32 %v2140, %v1540
  %v2289 = vmul.f32 %v2142, %v1541
  %v2290 = vmul.f32 %v2144, %v1542
  %v2291 = vmul.f32 %v2146, %v1543
  %v2292 = vmul.f32 %v2148, %v1544
  %v2293 = vmul.f32 %v2150, %v1545
  %v2294 = vmul.f32 %v2152, %v1546
  %v2295 = vmul.f32 %v2154, %v1547
  %v2296 = vmul.f32 %v2156, %v1548
  %v2297 = vmul.f32 %v2158, %v1549
  %v2298 = vmul.f32 %v2160, %v1550
  %v2299 = vmul.f32 %v2162, %v1551
  %v2300 = vmul.f32 %v2164, %v1552
  %v2301 = vmul.f32 %v2166, %v1553
  %v2302 = vmul.f32 %v2168, %v1554
  %v2303 = vmul.f32 %v2170, %v1555
  %v2304 = vmul.f32 %v2172, %v1556
  %v2305 = vmul.f32 %v2174, %v1513
  %v2306 = vmul.f32 %v2176, %v1514
  %v2307 = vmul.f32 %v2178, %v1515
  %v2308 = vmul.f32 %v2180, %v1516
  %v2309 = vmul.f32 %v2182, %v1517
  %v2310 = vmul.f32 %v2184, %v1518
  %v2311 = vmul.f32 %v2186, %v1519
  %v2312 = vmul.f32 %v2188, %v1520
  %v2313 = vmul.f32 %v2190, %v1521
  %v2314 = vmul.f32 %v2192, %v1522
  %v2315 = vmul.f32 %v2194, %v1523
  %v2316 = vmul.f32 %v2196, %v1524
  %v2317 = vmul.f32 %v2198, %v1525
  %v2318 = vmul.f32 %v2200, %v1526
  %v2319 = vmul.f32 %v2202, %v1527
  %v2320 = vmul.f32 %v2204, %v1528
  %v2321 = vmul.f32 %v2206, %v1529
  %v2322 = vmul.f32 %v2208, %v1530
  %v2323 = vmul.f32 %v2210, %v1531
  %v2324 = vmul.f32 %v2212, %v1532
  %v2325 = vmul.f32 %v2214, %v1533
  %v2326 = vmul.f32 %v2216, %v1534
  %v2327 = vmul.f32 %v2218, %v1535
  %v2328 = vmul.f32 %v2220, %v1536
  %v2329 = vmul.f32 %v2222, %v1537
  %v2330 = vmul.f32 %v2224, %v1538
  %v2331 = vmul.f32 %v2226, %v1539
  %v2332 = vmul.f32 %v2228, %v1540
  %v2333 = vmul.f32 %v2230, %v1541
  %v2334 = vmul.f32 %v2232, %v1542
  %v2335 = vmul.f32 %v2234, %v1543
  %v2336 = vmul.f32 %v2236, %v1544
  %v2337 = vmul.f32 %v2238, %v1545
  %v2338 = vmul.f32 %v2240, %v1546
  %v2339 = vmul.f32 %v2242, %v1547
  %v2340 = vmul.f32 %v2244, %v1548
  %v2341 = vmul.f32 %v2246, %v1549
  %v2342 = vmul.f32 %v2248, %v1550
  %v2343 = vmul.f32 %v2250, %v1551
  %v2344 = vmul.f32 %v2252, %v1552
  %v2345 = vmul.f32 %v2254, %v1553
  %v2346 = vmul.f32 %v2256, %v1554
  %v2347 = vmul.f32 %v2258, %v1555
  %v2348 = vmul.f32 %v2260, %v1556
  %v2349 = vmul.f32 %v2261, 0.5
  %v2350 = vmul.f32 %v2262, 0.5
  %v2351 = vmul.f32 %v2263, 0.5
  %v2352 = vmul.f32 %v2264, 0.5
  %v2353 = vmul.f32 %v2265, 0.5
  %v2354 = vmul.f32 %v2266, 0.5
  %v2355 = vmul.f32 %v2267, 0.5
  %v2356 = vmul.f32 %v2268, 0.5
  %v2357 = vmul.f32 %v2269, 0.5
  %v2358 = vmul.f32 %v2270, 0.5
  %v2359 = vmul.f32 %v2271, 0.5
  %v2360 = vmul.f32 %v2272, 0.5
  %v2361 = vmul.f32 %v2273, 0.5
  %v2362 = vmul.f32 %v2274, 0.5
  %v2363 = vmul.f32 %v2275, 0.5
  %v2364 = vmul.f32 %v2276, 0.5
  %v2365 = vmul.f32 %v2277, 0.5
  %v2366 = vmul.f32 %v2278, 0.5
  %v2367 = vmul.f32 %v2279, 0.5
  %v2368 = vmul.f32 %v2280, 0.5
  %v2369 = vmul.f32 %v2281, 0.5
  %v2370 = vmul.f32 %v2282, 0.5
  %v2371 = vmul.f32 %v2283, 0.5
  %v2372 = vmul.f32 %v2284, 0.5
  %v2373 = vmul.f32 %v2285, 0.5
  %v2374 = vmul.f32 %v2286, 0.5
  %v2375 = vmul.f32 %v2287, 0.5
  %v2376 = vmul.f32 %v2288, 0.5
  %v2377 = vmul.f32 %v2289, 0.5
  %v2378 = vmul.f32 %v2290, 0.5
  %v2379 = vmul.f32 %v2291, 0.5
  %v2380 = vmul.f32 %v2292, 0.5
  %v2381 = vmul.f32 %v2293, 0.5
  %v2382 = vmul.f32 %v2294, 0.5
  %v2383 = vmul.f32 %v2295, 0.5
  %v2384 = vmul.f32 %v2296, 0.5
  %v2385 = vmul.f32 %v2297, 0.5
  %v2386 = vmul.f32 %v2298, 0.5
  %v2387 = vmul.f32 %v2299, 0.5
  %v2388 = vmul.f32 %v2300, 0.5
  %v2389 = vmul.f32 %v2301, 0.5
  %v2390 = vmul.f32 %v2302, 0.5
  %v2391 = vmul.f32 %v2303, 0.5
  %v2392 = vmul.f32 %v2304, 0.5
  %v2393 = vmul.f32 %v2305, 0.5
  %v2394 = vmul.f32 %v2306, 0.5
  %v2395 = vmul.f32 %v2307, 0.5
  %v2396 = vmul.f32 %v2308, 0.5
  %v2397 = vmul.f32 %v2309, 0.5
  %v2398 = vmul.f32 %v2310, 0.5
  %v2399 = vmul.f32 %v2311, 0.5
  %v2400 = vmul.f32 %v2312, 0.5
  %v2401 = vmul.f32 %v2313, 0.5
  %v2402 = vmul.f32 %v2314, 0.5
  %v2403 = vmul.f32 %v2315, 0.5
  %v2404 = vmul.f32 %v2316, 0.5
  %v2405 = vmul.f32 %v2317, 0.5
  %v2406 = vmul.f32 %v2318, 0.5
  %v2407 = vmul.f32 %v2319, 0.5
  %v2408 = vmul.f32 %v2320, 0.5
  %v2409 = vmul.f32 %v2321, 0.5
  %v2410 = vmul.f32 %v2322, 0.5
  %v2411 = vmul.f32 %v2323, 0.5
  %v2412 = vmul.f32 %v2324, 0.5
  %v2413 = vmul.f32 %v2325, 0.5
  %v2414 = vmul.f32 %v2326, 0.5
  %v2415 = vmul.f32 %v2327, 0.5
  %v2416 = vmul.f32 %v2328, 0.5
  %v2417 = vmul.f32 %v2329, 0.5
  %v2418 = vmul.f32 %v2330, 0.5
  %v2419 = vmul.f32 %v2331, 0.5
  %v2420 = vmul.f32 %v2332, 0.5
  %v2421 = vmul.f32 %v2333, 0.5
  %v2422 = vmul.f32 %v2334, 0.5
  %v2423 = vmul.f32 %v2335, 0.5
  %v2424 = vmul.f32 %v2336, 0.5
  %v2425 = vmul.f32 %v2337, 0.5
  %v2426 = vmul.f32 %v2338, 0.5
  %v2427 = vmul.f32 %v2339, 0.5
  %v2428 = vmul.f32 %v2340, 0.5
  %v2429 = vmul.f32 %v2341, 0.5
  %v2430 = vmul.f32 %v2342, 0.5
  %v2431 = vmul.f32 %v2343, 0.5
  %v2432 = vmul.f32 %v2344, 0.5
  %v2433 = vmul.f32 %v2345, 0.5
  %v2434 = vmul.f32 %v2346, 0.5
  %v2435 = vmul.f32 %v2347, 0.5
  %v2436 = vmul.f32 %v2348, 0.5
  %2525 = vrot.lane.b32.xlu0 %v2349, 126
  %v2526 = vpop.permute.xlu0 %2525
  %2527 = vrot.lane.b32.xlu0 %v2350, 126
  %v2528 = vpop.permute.xlu0 %2527
  %2529 = vrot.lane.b32.xlu0 %v2351, 126
  %v2530 = vpop.permute.xlu0 %2529
  %2531 = vrot.lane.b32.xlu0 %v2352, 126
  %v2532 = vpop.permute.xlu0 %2531
  %2533 = vrot.lane.b32.xlu0 %v2353, 126
  %v2534 = vpop.permute.xlu0 %2533
  %2535 = vrot.lane.b32.xlu0 %v2354, 126
  %v2536 = vpop.permute.xlu0 %2535
  %2537 = vrot.lane.b32.xlu0 %v2355, 126
  %v2538 = vpop.permute.xlu0 %2537
  %2539 = vrot.lane.b32.xlu0 %v2356, 126
  %v2540 = vpop.permute.xlu0 %2539
  %2541 = vrot.lane.b32.xlu0 %v2357, 126
  %v2542 = vpop.permute.xlu0 %2541
  %2543 = vrot.lane.b32.xlu0 %v2358, 126
  %v2544 = vpop.permute.xlu0 %2543
  %2545 = vrot.lane.b32.xlu0 %v2359, 126
  %v2546 = vpop.permute.xlu0 %2545
  %2547 = vrot.lane.b32.xlu0 %v2360, 126
  %v2548 = vpop.permute.xlu0 %2547
  %2549 = vrot.lane.b32.xlu0 %v2361, 126
  %v2550 = vpop.permute.xlu0 %2549
  %2551 = vrot.lane.b32.xlu0 %v2362, 126
  %v2552 = vpop.permute.xlu0 %2551
  %2553 = vrot.lane.b32.xlu0 %v2363, 126
  %v2554 = vpop.permute.xlu0 %2553
  %2555 = vrot.lane.b32.xlu0 %v2364, 126
  %v2556 = vpop.permute.xlu0 %2555
  %2557 = vrot.lane.b32.xlu0 %v2365, 126
  %v2558 = vpop.permute.xlu0 %2557
  %2559 = vrot.lane.b32.xlu0 %v2366, 126
  %v2560 = vpop.permute.xlu0 %2559
  %2561 = vrot.lane.b32.xlu0 %v2367, 126
  %v2562 = vpop.permute.xlu0 %2561
  %2563 = vrot.lane.b32.xlu0 %v2368, 126
  %v2564 = vpop.permute.xlu0 %2563
  %2565 = vrot.lane.b32.xlu0 %v2369, 126
  %v2566 = vpop.permute.xlu0 %2565
  %2567 = vrot.lane.b32.xlu0 %v2370, 126
  %v2568 = vpop.permute.xlu0 %2567
  %2569 = vrot.lane.b32.xlu0 %v2371, 126
  %v2570 = vpop.permute.xlu0 %2569
  %2571 = vrot.lane.b32.xlu0 %v2372, 126
  %v2572 = vpop.permute.xlu0 %2571
  %2573 = vrot.lane.b32.xlu0 %v2373, 126
  %v2574 = vpop.permute.xlu0 %2573
  %2575 = vrot.lane.b32.xlu0 %v2374, 126
  %v2576 = vpop.permute.xlu0 %2575
  %2577 = vrot.lane.b32.xlu0 %v2375, 126
  %v2578 = vpop.permute.xlu0 %2577
  %2579 = vrot.lane.b32.xlu0 %v2376, 126
  %v2580 = vpop.permute.xlu0 %2579
  %2581 = vrot.lane.b32.xlu0 %v2377, 126
  %v2582 = vpop.permute.xlu0 %2581
  %2583 = vrot.lane.b32.xlu0 %v2378, 126
  %v2584 = vpop.permute.xlu0 %2583
  %2585 = vrot.lane.b32.xlu0 %v2379, 126
  %v2586 = vpop.permute.xlu0 %2585
  %2587 = vrot.lane.b32.xlu0 %v2380, 126
  %v2588 = vpop.permute.xlu0 %2587
  %2589 = vrot.lane.b32.xlu0 %v2381, 126
  %v2590 = vpop.permute.xlu0 %2589
  %2591 = vrot.lane.b32.xlu0 %v2382, 126
  %v2592 = vpop.permute.xlu0 %2591
  %2593 = vrot.lane.b32.xlu0 %v2383, 126
  %v2594 = vpop.permute.xlu0 %2593
  %2595 = vrot.lane.b32.xlu0 %v2384, 126
  %v2596 = vpop.permute.xlu0 %2595
  %2597 = vrot.lane.b32.xlu0 %v2385, 126
  %v2598 = vpop.permute.xlu0 %2597
  %2599 = vrot.lane.b32.xlu0 %v2386, 126
  %v2600 = vpop.permute.xlu0 %2599
  %2601 = vrot.lane.b32.xlu0 %v2387, 126
  %v2602 = vpop.permute.xlu0 %2601
  %2603 = vrot.lane.b32.xlu0 %v2388, 126
  %v2604 = vpop.permute.xlu0 %2603
  %2605 = vrot.lane.b32.xlu0 %v2389, 126
  %v2606 = vpop.permute.xlu0 %2605
  %2607 = vrot.lane.b32.xlu0 %v2390, 126
  %v2608 = vpop.permute.xlu0 %2607
  %2609 = vrot.lane.b32.xlu0 %v2391, 126
  %v2610 = vpop.permute.xlu0 %2609
  %2611 = vrot.lane.b32.xlu0 %v2392, 126
  %v2612 = vpop.permute.xlu0 %2611
  %2613 = vrot.lane.b32.xlu0 %v2393, 126
  %v2614 = vpop.permute.xlu0 %2613
  %2615 = vrot.lane.b32.xlu0 %v2394, 126
  %v2616 = vpop.permute.xlu0 %2615
  %2617 = vrot.lane.b32.xlu0 %v2395, 126
  %v2618 = vpop.permute.xlu0 %2617
  %2619 = vrot.lane.b32.xlu0 %v2396, 126
  %v2620 = vpop.permute.xlu0 %2619
  %2621 = vrot.lane.b32.xlu0 %v2397, 126
  %v2622 = vpop.permute.xlu0 %2621
  %2623 = vrot.lane.b32.xlu0 %v2398, 126
  %v2624 = vpop.permute.xlu0 %2623
  %2625 = vrot.lane.b32.xlu0 %v2399, 126
  %v2626 = vpop.permute.xlu0 %2625
  %2627 = vrot.lane.b32.xlu0 %v2400, 126
  %v2628 = vpop.permute.xlu0 %2627
  %2629 = vrot.lane.b32.xlu0 %v2401, 126
  %v2630 = vpop.permute.xlu0 %2629
  %2631 = vrot.lane.b32.xlu0 %v2402, 126
  %v2632 = vpop.permute.xlu0 %2631
  %2633 = vrot.lane.b32.xlu0 %v2403, 126
  %v2634 = vpop.permute.xlu0 %2633
  %2635 = vrot.lane.b32.xlu0 %v2404, 126
  %v2636 = vpop.permute.xlu0 %2635
  %2637 = vrot.lane.b32.xlu0 %v2405, 126
  %v2638 = vpop.permute.xlu0 %2637
  %2639 = vrot.lane.b32.xlu0 %v2406, 126
  %v2640 = vpop.permute.xlu0 %2639
  %2641 = vrot.lane.b32.xlu0 %v2407, 126
  %v2642 = vpop.permute.xlu0 %2641
  %2643 = vrot.lane.b32.xlu0 %v2408, 126
  %v2644 = vpop.permute.xlu0 %2643
  %2645 = vrot.lane.b32.xlu0 %v2409, 126
  %v2646 = vpop.permute.xlu0 %2645
  %2647 = vrot.lane.b32.xlu0 %v2410, 126
  %v2648 = vpop.permute.xlu0 %2647
  %2649 = vrot.lane.b32.xlu0 %v2411, 126
  %v2650 = vpop.permute.xlu0 %2649
  %2651 = vrot.lane.b32.xlu0 %v2412, 126
  %v2652 = vpop.permute.xlu0 %2651
  %2653 = vrot.lane.b32.xlu0 %v2413, 126
  %v2654 = vpop.permute.xlu0 %2653
  %2655 = vrot.lane.b32.xlu0 %v2414, 126
  %v2656 = vpop.permute.xlu0 %2655
  %2657 = vrot.lane.b32.xlu0 %v2415, 126
  %v2658 = vpop.permute.xlu0 %2657
  %2659 = vrot.lane.b32.xlu0 %v2416, 126
  %v2660 = vpop.permute.xlu0 %2659
  %2661 = vrot.lane.b32.xlu0 %v2417, 126
  %v2662 = vpop.permute.xlu0 %2661
  %2663 = vrot.lane.b32.xlu0 %v2418, 126
  %v2664 = vpop.permute.xlu0 %2663
  %2665 = vrot.lane.b32.xlu0 %v2419, 126
  %v2666 = vpop.permute.xlu0 %2665
  %2667 = vrot.lane.b32.xlu0 %v2420, 126
  %v2668 = vpop.permute.xlu0 %2667
  %2669 = vrot.lane.b32.xlu0 %v2421, 126
  %v2670 = vpop.permute.xlu0 %2669
  %2671 = vrot.lane.b32.xlu0 %v2422, 126
  %v2672 = vpop.permute.xlu0 %2671
  %2673 = vrot.lane.b32.xlu0 %v2423, 126
  %v2674 = vpop.permute.xlu0 %2673
  %2675 = vrot.lane.b32.xlu0 %v2424, 126
  %v2676 = vpop.permute.xlu0 %2675
  %2677 = vrot.lane.b32.xlu0 %v2425, 126
  %v2678 = vpop.permute.xlu0 %2677
  %2679 = vrot.lane.b32.xlu0 %v2426, 126
  %v2680 = vpop.permute.xlu0 %2679
  %2681 = vrot.lane.b32.xlu0 %v2427, 126
  %v2682 = vpop.permute.xlu0 %2681
  %2683 = vrot.lane.b32.xlu0 %v2428, 126
  %v2684 = vpop.permute.xlu0 %2683
  %2685 = vrot.lane.b32.xlu0 %v2429, 126
  %v2686 = vpop.permute.xlu0 %2685
  %2687 = vrot.lane.b32.xlu0 %v2430, 126
  %v2688 = vpop.permute.xlu0 %2687
  %2689 = vrot.lane.b32.xlu0 %v2431, 126
  %v2690 = vpop.permute.xlu0 %2689
  %2691 = vrot.lane.b32.xlu0 %v2432, 126
  %v2692 = vpop.permute.xlu0 %2691
  %2693 = vrot.lane.b32.xlu0 %v2433, 126
  %v2694 = vpop.permute.xlu0 %2693
  %2695 = vrot.lane.b32.xlu0 %v2434, 126
  %v2696 = vpop.permute.xlu0 %2695
  %2697 = vrot.lane.b32.xlu0 %v2435, 126
  %v2698 = vpop.permute.xlu0 %2697
  %2699 = vrot.lane.b32.xlu0 %v2436, 126
  %v2700 = vpop.permute.xlu0 %2699
  %v2789 = vsub.f32 %v1909, %v2526
  %v2790 = vsub.f32 %v1910, %v2528
  %v2791 = vsub.f32 %v1911, %v2530
  %v2792 = vsub.f32 %v1912, %v2532
  %v2793 = vsub.f32 %v1913, %v2534
  %v2794 = vsub.f32 %v1914, %v2536
  %v2795 = vsub.f32 %v1915, %v2538
  %v2796 = vsub.f32 %v1916, %v2540
  %v2797 = vsub.f32 %v1917, %v2542
  %v2798 = vsub.f32 %v1918, %v2544
  %v2799 = vsub.f32 %v1919, %v2546
  %v2800 = vsub.f32 %v1920, %v2548
  %v2801 = vsub.f32 %v1921, %v2550
  %v2802 = vsub.f32 %v1922, %v2552
  %v2803 = vsub.f32 %v1923, %v2554
  %v2804 = vsub.f32 %v1924, %v2556
  %v2805 = vsub.f32 %v1925, %v2558
  %v2806 = vsub.f32 %v1926, %v2560
  %v2807 = vsub.f32 %v1927, %v2562
  %v2808 = vsub.f32 %v1928, %v2564
  %v2809 = vsub.f32 %v1929, %v2566
  %v2810 = vsub.f32 %v1930, %v2568
  %v2811 = vsub.f32 %v1931, %v2570
  %v2812 = vsub.f32 %v1932, %v2572
  %v2813 = vsub.f32 %v1933, %v2574
  %v2814 = vsub.f32 %v1934, %v2576
  %v2815 = vsub.f32 %v1935, %v2578
  %v2816 = vsub.f32 %v1936, %v2580
  %v2817 = vsub.f32 %v1937, %v2582
  %v2818 = vsub.f32 %v1938, %v2584
  %v2819 = vsub.f32 %v1939, %v2586
  %v2820 = vsub.f32 %v1940, %v2588
  %v2821 = vsub.f32 %v1941, %v2590
  %v2822 = vsub.f32 %v1942, %v2592
  %v2823 = vsub.f32 %v1943, %v2594
  %v2824 = vsub.f32 %v1944, %v2596
  %v2825 = vsub.f32 %v1945, %v2598
  %v2826 = vsub.f32 %v1946, %v2600
  %v2827 = vsub.f32 %v1947, %v2602
  %v2828 = vsub.f32 %v1948, %v2604
  %v2829 = vsub.f32 %v1949, %v2606
  %v2830 = vsub.f32 %v1950, %v2608
  %v2831 = vsub.f32 %v1951, %v2610
  %v2832 = vsub.f32 %v1952, %v2612
  %v2833 = vsub.f32 %v1953, %v2614
  %v2834 = vsub.f32 %v1954, %v2616
  %v2835 = vsub.f32 %v1955, %v2618
  %v2836 = vsub.f32 %v1956, %v2620
  %v2837 = vsub.f32 %v1957, %v2622
  %v2838 = vsub.f32 %v1958, %v2624
  %v2839 = vsub.f32 %v1959, %v2626
  %v2840 = vsub.f32 %v1960, %v2628
  %v2841 = vsub.f32 %v1961, %v2630
  %v2842 = vsub.f32 %v1962, %v2632
  %v2843 = vsub.f32 %v1963, %v2634
  %v2844 = vsub.f32 %v1964, %v2636
  %v2845 = vsub.f32 %v1965, %v2638
  %v2846 = vsub.f32 %v1966, %v2640
  %v2847 = vsub.f32 %v1967, %v2642
  %v2848 = vsub.f32 %v1968, %v2644
  %v2849 = vsub.f32 %v1969, %v2646
  %v2850 = vsub.f32 %v1970, %v2648
  %v2851 = vsub.f32 %v1971, %v2650
  %v2852 = vsub.f32 %v1972, %v2652
  %v2853 = vsub.f32 %v1973, %v2654
  %v2854 = vsub.f32 %v1974, %v2656
  %v2855 = vsub.f32 %v1975, %v2658
  %v2856 = vsub.f32 %v1976, %v2660
  %v2857 = vsub.f32 %v1977, %v2662
  %v2858 = vsub.f32 %v1978, %v2664
  %v2859 = vsub.f32 %v1979, %v2666
  %v2860 = vsub.f32 %v1980, %v2668
  %v2861 = vsub.f32 %v1981, %v2670
  %v2862 = vsub.f32 %v1982, %v2672
  %v2863 = vsub.f32 %v1983, %v2674
  %v2864 = vsub.f32 %v1984, %v2676
  %v2865 = vsub.f32 %v1985, %v2678
  %v2866 = vsub.f32 %v1986, %v2680
  %v2867 = vsub.f32 %v1987, %v2682
  %v2868 = vsub.f32 %v1988, %v2684
  %v2869 = vsub.f32 %v1989, %v2686
  %v2870 = vsub.f32 %v1990, %v2688
  %v2871 = vsub.f32 %v1991, %v2690
  %v2872 = vsub.f32 %v1992, %v2692
  %v2873 = vsub.f32 %v1993, %v2694
  %v2874 = vsub.f32 %v1994, %v2696
  %v2875 = vsub.f32 %v1995, %v2698
  %v2876 = vsub.f32 %v1996, %v2700
  %v2877 = vadd.f32 %v1909, %v2526
  %v2878 = vadd.f32 %v1910, %v2528
  %v2879 = vadd.f32 %v1911, %v2530
  %v2880 = vadd.f32 %v1912, %v2532
  %v2881 = vadd.f32 %v1913, %v2534
  %v2882 = vadd.f32 %v1914, %v2536
  %v2883 = vadd.f32 %v1915, %v2538
  %v2884 = vadd.f32 %v1916, %v2540
  %v2885 = vadd.f32 %v1917, %v2542
  %v2886 = vadd.f32 %v1918, %v2544
  %v2887 = vadd.f32 %v1919, %v2546
  %v2888 = vadd.f32 %v1920, %v2548
  %v2889 = vadd.f32 %v1921, %v2550
  %v2890 = vadd.f32 %v1922, %v2552
  %v2891 = vadd.f32 %v1923, %v2554
  %v2892 = vadd.f32 %v1924, %v2556
  %v2893 = vadd.f32 %v1925, %v2558
  %v2894 = vadd.f32 %v1926, %v2560
  %v2895 = vadd.f32 %v1927, %v2562
  %v2896 = vadd.f32 %v1928, %v2564
  %v2897 = vadd.f32 %v1929, %v2566
  %v2898 = vadd.f32 %v1930, %v2568
  %v2899 = vadd.f32 %v1931, %v2570
  %v2900 = vadd.f32 %v1932, %v2572
  %v2901 = vadd.f32 %v1933, %v2574
  %v2902 = vadd.f32 %v1934, %v2576
  %v2903 = vadd.f32 %v1935, %v2578
  %v2904 = vadd.f32 %v1936, %v2580
  %v2905 = vadd.f32 %v1937, %v2582
  %v2906 = vadd.f32 %v1938, %v2584
  %v2907 = vadd.f32 %v1939, %v2586
  %v2908 = vadd.f32 %v1940, %v2588
  %v2909 = vadd.f32 %v1941, %v2590
  %v2910 = vadd.f32 %v1942, %v2592
  %v2911 = vadd.f32 %v1943, %v2594
  %v2912 = vadd.f32 %v1944, %v2596
  %v2913 = vadd.f32 %v1945, %v2598
  %v2914 = vadd.f32 %v1946, %v2600
  %v2915 = vadd.f32 %v1947, %v2602
  %v2916 = vadd.f32 %v1948, %v2604
  %v2917 = vadd.f32 %v1949, %v2606
  %v2918 = vadd.f32 %v1950, %v2608
  %v2919 = vadd.f32 %v1951, %v2610
  %v2920 = vadd.f32 %v1952, %v2612
  %v2921 = vadd.f32 %v1953, %v2614
  %v2922 = vadd.f32 %v1954, %v2616
  %v2923 = vadd.f32 %v1955, %v2618
  %v2924 = vadd.f32 %v1956, %v2620
  %v2925 = vadd.f32 %v1957, %v2622
  %v2926 = vadd.f32 %v1958, %v2624
  %v2927 = vadd.f32 %v1959, %v2626
  %v2928 = vadd.f32 %v1960, %v2628
  %v2929 = vadd.f32 %v1961, %v2630
  %v2930 = vadd.f32 %v1962, %v2632
  %v2931 = vadd.f32 %v1963, %v2634
  %v2932 = vadd.f32 %v1964, %v2636
  %v2933 = vadd.f32 %v1965, %v2638
  %v2934 = vadd.f32 %v1966, %v2640
  %v2935 = vadd.f32 %v1967, %v2642
  %v2936 = vadd.f32 %v1968, %v2644
  %v2937 = vadd.f32 %v1969, %v2646
  %v2938 = vadd.f32 %v1970, %v2648
  %v2939 = vadd.f32 %v1971, %v2650
  %v2940 = vadd.f32 %v1972, %v2652
  %v2941 = vadd.f32 %v1973, %v2654
  %v2942 = vadd.f32 %v1974, %v2656
  %v2943 = vadd.f32 %v1975, %v2658
  %v2944 = vadd.f32 %v1976, %v2660
  %v2945 = vadd.f32 %v1977, %v2662
  %v2946 = vadd.f32 %v1978, %v2664
  %v2947 = vadd.f32 %v1979, %v2666
  %v2948 = vadd.f32 %v1980, %v2668
  %v2949 = vadd.f32 %v1981, %v2670
  %v2950 = vadd.f32 %v1982, %v2672
  %v2951 = vadd.f32 %v1983, %v2674
  %v2952 = vadd.f32 %v1984, %v2676
  %v2953 = vadd.f32 %v1985, %v2678
  %v2954 = vadd.f32 %v1986, %v2680
  %v2955 = vadd.f32 %v1987, %v2682
  %v2956 = vadd.f32 %v1988, %v2684
  %v2957 = vadd.f32 %v1989, %v2686
  %v2958 = vadd.f32 %v1990, %v2688
  %v2959 = vadd.f32 %v1991, %v2690
  %v2960 = vadd.f32 %v1992, %v2692
  %v2961 = vadd.f32 %v1993, %v2694
  %v2962 = vadd.f32 %v1994, %v2696
  %v2963 = vadd.f32 %v1995, %v2698
  %v2964 = vadd.f32 %v1996, %v2700
  %3053 = vrot.lane.b32.xlu0 %v2877, 2
  %v3054 = vpop.permute.xlu0 %3053
  %3055 = vrot.lane.b32.xlu0 %v2878, 2
  %v3056 = vpop.permute.xlu0 %3055
  %3057 = vrot.lane.b32.xlu0 %v2879, 2
  %v3058 = vpop.permute.xlu0 %3057
  %3059 = vrot.lane.b32.xlu0 %v2880, 2
  %v3060 = vpop.permute.xlu0 %3059
  %3061 = vrot.lane.b32.xlu0 %v2881, 2
  %v3062 = vpop.permute.xlu0 %3061
  %3063 = vrot.lane.b32.xlu0 %v2882, 2
  %v3064 = vpop.permute.xlu0 %3063
  %3065 = vrot.lane.b32.xlu0 %v2883, 2
  %v3066 = vpop.permute.xlu0 %3065
  %3067 = vrot.lane.b32.xlu0 %v2884, 2
  %v3068 = vpop.permute.xlu0 %3067
  %3069 = vrot.lane.b32.xlu0 %v2885, 2
  %v3070 = vpop.permute.xlu0 %3069
  %3071 = vrot.lane.b32.xlu0 %v2886, 2
  %v3072 = vpop.permute.xlu0 %3071
  %3073 = vrot.lane.b32.xlu0 %v2887, 2
  %v3074 = vpop.permute.xlu0 %3073
  %3075 = vrot.lane.b32.xlu0 %v2888, 2
  %v3076 = vpop.permute.xlu0 %3075
  %3077 = vrot.lane.b32.xlu0 %v2889, 2
  %v3078 = vpop.permute.xlu0 %3077
  %3079 = vrot.lane.b32.xlu0 %v2890, 2
  %v3080 = vpop.permute.xlu0 %3079
  %3081 = vrot.lane.b32.xlu0 %v2891, 2
  %v3082 = vpop.permute.xlu0 %3081
  %3083 = vrot.lane.b32.xlu0 %v2892, 2
  %v3084 = vpop.permute.xlu0 %3083
  %3085 = vrot.lane.b32.xlu0 %v2893, 2
  %v3086 = vpop.permute.xlu0 %3085
  %3087 = vrot.lane.b32.xlu0 %v2894, 2
  %v3088 = vpop.permute.xlu0 %3087
  %3089 = vrot.lane.b32.xlu0 %v2895, 2
  %v3090 = vpop.permute.xlu0 %3089
  %3091 = vrot.lane.b32.xlu0 %v2896, 2
  %v3092 = vpop.permute.xlu0 %3091
  %3093 = vrot.lane.b32.xlu0 %v2897, 2
  %v3094 = vpop.permute.xlu0 %3093
  %3095 = vrot.lane.b32.xlu0 %v2898, 2
  %v3096 = vpop.permute.xlu0 %3095
  %3097 = vrot.lane.b32.xlu0 %v2899, 2
  %v3098 = vpop.permute.xlu0 %3097
  %3099 = vrot.lane.b32.xlu0 %v2900, 2
  %v3100 = vpop.permute.xlu0 %3099
  %3101 = vrot.lane.b32.xlu0 %v2901, 2
  %v3102 = vpop.permute.xlu0 %3101
  %3103 = vrot.lane.b32.xlu0 %v2902, 2
  %v3104 = vpop.permute.xlu0 %3103
  %3105 = vrot.lane.b32.xlu0 %v2903, 2
  %v3106 = vpop.permute.xlu0 %3105
  %3107 = vrot.lane.b32.xlu0 %v2904, 2
  %v3108 = vpop.permute.xlu0 %3107
  %3109 = vrot.lane.b32.xlu0 %v2905, 2
  %v3110 = vpop.permute.xlu0 %3109
  %3111 = vrot.lane.b32.xlu0 %v2906, 2
  %v3112 = vpop.permute.xlu0 %3111
  %3113 = vrot.lane.b32.xlu0 %v2907, 2
  %v3114 = vpop.permute.xlu0 %3113
  %3115 = vrot.lane.b32.xlu0 %v2908, 2
  %v3116 = vpop.permute.xlu0 %3115
  %3117 = vrot.lane.b32.xlu0 %v2909, 2
  %v3118 = vpop.permute.xlu0 %3117
  %3119 = vrot.lane.b32.xlu0 %v2910, 2
  %v3120 = vpop.permute.xlu0 %3119
  %3121 = vrot.lane.b32.xlu0 %v2911, 2
  %v3122 = vpop.permute.xlu0 %3121
  %3123 = vrot.lane.b32.xlu0 %v2912, 2
  %v3124 = vpop.permute.xlu0 %3123
  %3125 = vrot.lane.b32.xlu0 %v2913, 2
  %v3126 = vpop.permute.xlu0 %3125
  %3127 = vrot.lane.b32.xlu0 %v2914, 2
  %v3128 = vpop.permute.xlu0 %3127
  %3129 = vrot.lane.b32.xlu0 %v2915, 2
  %v3130 = vpop.permute.xlu0 %3129
  %3131 = vrot.lane.b32.xlu0 %v2916, 2
  %v3132 = vpop.permute.xlu0 %3131
  %3133 = vrot.lane.b32.xlu0 %v2917, 2
  %v3134 = vpop.permute.xlu0 %3133
  %3135 = vrot.lane.b32.xlu0 %v2918, 2
  %v3136 = vpop.permute.xlu0 %3135
  %3137 = vrot.lane.b32.xlu0 %v2919, 2
  %v3138 = vpop.permute.xlu0 %3137
  %3139 = vrot.lane.b32.xlu0 %v2920, 2
  %v3140 = vpop.permute.xlu0 %3139
  %3141 = vrot.lane.b32.xlu0 %v2921, 2
  %v3142 = vpop.permute.xlu0 %3141
  %3143 = vrot.lane.b32.xlu0 %v2922, 2
  %v3144 = vpop.permute.xlu0 %3143
  %3145 = vrot.lane.b32.xlu0 %v2923, 2
  %v3146 = vpop.permute.xlu0 %3145
  %3147 = vrot.lane.b32.xlu0 %v2924, 2
  %v3148 = vpop.permute.xlu0 %3147
  %3149 = vrot.lane.b32.xlu0 %v2925, 2
  %v3150 = vpop.permute.xlu0 %3149
  %3151 = vrot.lane.b32.xlu0 %v2926, 2
  %v3152 = vpop.permute.xlu0 %3151
  %3153 = vrot.lane.b32.xlu0 %v2927, 2
  %v3154 = vpop.permute.xlu0 %3153
  %3155 = vrot.lane.b32.xlu0 %v2928, 2
  %v3156 = vpop.permute.xlu0 %3155
  %3157 = vrot.lane.b32.xlu0 %v2929, 2
  %v3158 = vpop.permute.xlu0 %3157
  %3159 = vrot.lane.b32.xlu0 %v2930, 2
  %v3160 = vpop.permute.xlu0 %3159
  %3161 = vrot.lane.b32.xlu0 %v2931, 2
  %v3162 = vpop.permute.xlu0 %3161
  %3163 = vrot.lane.b32.xlu0 %v2932, 2
  %v3164 = vpop.permute.xlu0 %3163
  %3165 = vrot.lane.b32.xlu0 %v2933, 2
  %v3166 = vpop.permute.xlu0 %3165
  %3167 = vrot.lane.b32.xlu0 %v2934, 2
  %v3168 = vpop.permute.xlu0 %3167
  %3169 = vrot.lane.b32.xlu0 %v2935, 2
  %v3170 = vpop.permute.xlu0 %3169
  %3171 = vrot.lane.b32.xlu0 %v2936, 2
  %v3172 = vpop.permute.xlu0 %3171
  %3173 = vrot.lane.b32.xlu0 %v2937, 2
  %v3174 = vpop.permute.xlu0 %3173
  %3175 = vrot.lane.b32.xlu0 %v2938, 2
  %v3176 = vpop.permute.xlu0 %3175
  %3177 = vrot.lane.b32.xlu0 %v2939, 2
  %v3178 = vpop.permute.xlu0 %3177
  %3179 = vrot.lane.b32.xlu0 %v2940, 2
  %v3180 = vpop.permute.xlu0 %3179
  %3181 = vrot.lane.b32.xlu0 %v2941, 2
  %v3182 = vpop.permute.xlu0 %3181
  %3183 = vrot.lane.b32.xlu0 %v2942, 2
  %v3184 = vpop.permute.xlu0 %3183
  %3185 = vrot.lane.b32.xlu0 %v2943, 2
  %v3186 = vpop.permute.xlu0 %3185
  %3187 = vrot.lane.b32.xlu0 %v2944, 2
  %v3188 = vpop.permute.xlu0 %3187
  %3189 = vrot.lane.b32.xlu0 %v2945, 2
  %v3190 = vpop.permute.xlu0 %3189
  %3191 = vrot.lane.b32.xlu0 %v2946, 2
  %v3192 = vpop.permute.xlu0 %3191
  %3193 = vrot.lane.b32.xlu0 %v2947, 2
  %v3194 = vpop.permute.xlu0 %3193
  %3195 = vrot.lane.b32.xlu0 %v2948, 2
  %v3196 = vpop.permute.xlu0 %3195
  %3197 = vrot.lane.b32.xlu0 %v2949, 2
  %v3198 = vpop.permute.xlu0 %3197
  %3199 = vrot.lane.b32.xlu0 %v2950, 2
  %v3200 = vpop.permute.xlu0 %3199
  %3201 = vrot.lane.b32.xlu0 %v2951, 2
  %v3202 = vpop.permute.xlu0 %3201
  %3203 = vrot.lane.b32.xlu0 %v2952, 2
  %v3204 = vpop.permute.xlu0 %3203
  %3205 = vrot.lane.b32.xlu0 %v2953, 2
  %v3206 = vpop.permute.xlu0 %3205
  %3207 = vrot.lane.b32.xlu0 %v2954, 2
  %v3208 = vpop.permute.xlu0 %3207
  %3209 = vrot.lane.b32.xlu0 %v2955, 2
  %v3210 = vpop.permute.xlu0 %3209
  %3211 = vrot.lane.b32.xlu0 %v2956, 2
  %v3212 = vpop.permute.xlu0 %3211
  %3213 = vrot.lane.b32.xlu0 %v2957, 2
  %v3214 = vpop.permute.xlu0 %3213
  %3215 = vrot.lane.b32.xlu0 %v2958, 2
  %v3216 = vpop.permute.xlu0 %3215
  %3217 = vrot.lane.b32.xlu0 %v2959, 2
  %v3218 = vpop.permute.xlu0 %3217
  %3219 = vrot.lane.b32.xlu0 %v2960, 2
  %v3220 = vpop.permute.xlu0 %3219
  %3221 = vrot.lane.b32.xlu0 %v2961, 2
  %v3222 = vpop.permute.xlu0 %3221
  %3223 = vrot.lane.b32.xlu0 %v2962, 2
  %v3224 = vpop.permute.xlu0 %3223
  %3225 = vrot.lane.b32.xlu0 %v2963, 2
  %v3226 = vpop.permute.xlu0 %3225
  %3227 = vrot.lane.b32.xlu0 %v2964, 2
  %v3228 = vpop.permute.xlu0 %3227
  %vm3317 = vcmask 15360
  %v3318 = vsel %vm3317, %v2789, %v3054
  %v3319 = vsel %vm3317, %v2790, %v3056
  %v3320 = vsel %vm3317, %v2791, %v3058
  %v3321 = vsel %vm3317, %v2792, %v3060
  %v3322 = vsel %vm3317, %v2793, %v3062
  %v3323 = vsel %vm3317, %v2794, %v3064
  %v3324 = vsel %vm3317, %v2795, %v3066
  %v3325 = vsel %vm3317, %v2796, %v3068
  %v3326 = vsel %vm3317, %v2797, %v3070
  %v3327 = vsel %vm3317, %v2798, %v3072
  %v3328 = vsel %vm3317, %v2799, %v3074
  %v3329 = vsel %vm3317, %v2800, %v3076
  %v3330 = vsel %vm3317, %v2801, %v3078
  %v3331 = vsel %vm3317, %v2802, %v3080
  %v3332 = vsel %vm3317, %v2803, %v3082
  %v3333 = vsel %vm3317, %v2804, %v3084
  %v3334 = vsel %vm3317, %v2805, %v3086
  %v3335 = vsel %vm3317, %v2806, %v3088
  %v3336 = vsel %vm3317, %v2807, %v3090
  %v3337 = vsel %vm3317, %v2808, %v3092
  %v3338 = vsel %vm3317, %v2809, %v3094
  %v3339 = vsel %vm3317, %v2810, %v3096
  %v3340 = vsel %vm3317, %v2811, %v3098
  %v3341 = vsel %vm3317, %v2812, %v3100
  %v3342 = vsel %vm3317, %v2813, %v3102
  %v3343 = vsel %vm3317, %v2814, %v3104
  %v3344 = vsel %vm3317, %v2815, %v3106
  %v3345 = vsel %vm3317, %v2816, %v3108
  %v3346 = vsel %vm3317, %v2817, %v3110
  %v3347 = vsel %vm3317, %v2818, %v3112
  %v3348 = vsel %vm3317, %v2819, %v3114
  %v3349 = vsel %vm3317, %v2820, %v3116
  %v3350 = vsel %vm3317, %v2821, %v3118
  %v3351 = vsel %vm3317, %v2822, %v3120
  %v3352 = vsel %vm3317, %v2823, %v3122
  %v3353 = vsel %vm3317, %v2824, %v3124
  %v3354 = vsel %vm3317, %v2825, %v3126
  %v3355 = vsel %vm3317, %v2826, %v3128
  %v3356 = vsel %vm3317, %v2827, %v3130
  %v3357 = vsel %vm3317, %v2828, %v3132
  %v3358 = vsel %vm3317, %v2829, %v3134
  %v3359 = vsel %vm3317, %v2830, %v3136
  %v3360 = vsel %vm3317, %v2831, %v3138
  %v3361 = vsel %vm3317, %v2832, %v3140
  %v3362 = vsel %vm3317, %v2833, %v3142
  %v3363 = vsel %vm3317, %v2834, %v3144
  %v3364 = vsel %vm3317, %v2835, %v3146
  %v3365 = vsel %vm3317, %v2836, %v3148
  %v3366 = vsel %vm3317, %v2837, %v3150
  %v3367 = vsel %vm3317, %v2838, %v3152
  %v3368 = vsel %vm3317, %v2839, %v3154
  %v3369 = vsel %vm3317, %v2840, %v3156
  %v3370 = vsel %vm3317, %v2841, %v3158
  %v3371 = vsel %vm3317, %v2842, %v3160
  %v3372 = vsel %vm3317, %v2843, %v3162
  %v3373 = vsel %vm3317, %v2844, %v3164
  %v3374 = vsel %vm3317, %v2845, %v3166
  %v3375 = vsel %vm3317, %v2846, %v3168
  %v3376 = vsel %vm3317, %v2847, %v3170
  %v3377 = vsel %vm3317, %v2848, %v3172
  %v3378 = vsel %vm3317, %v2849, %v3174
  %v3379 = vsel %vm3317, %v2850, %v3176
  %v3380 = vsel %vm3317, %v2851, %v3178
  %v3381 = vsel %vm3317, %v2852, %v3180
  %v3382 = vsel %vm3317, %v2853, %v3182
  %v3383 = vsel %vm3317, %v2854, %v3184
  %v3384 = vsel %vm3317, %v2855, %v3186
  %v3385 = vsel %vm3317, %v2856, %v3188
  %v3386 = vsel %vm3317, %v2857, %v3190
  %v3387 = vsel %vm3317, %v2858, %v3192
  %v3388 = vsel %vm3317, %v2859, %v3194
  %v3389 = vsel %vm3317, %v2860, %v3196
  %v3390 = vsel %vm3317, %v2861, %v3198
  %v3391 = vsel %vm3317, %v2862, %v3200
  %v3392 = vsel %vm3317, %v2863, %v3202
  %v3393 = vsel %vm3317, %v2864, %v3204
  %v3394 = vsel %vm3317, %v2865, %v3206
  %v3395 = vsel %vm3317, %v2866, %v3208
  %v3396 = vsel %vm3317, %v2867, %v3210
  %v3397 = vsel %vm3317, %v2868, %v3212
  %v3398 = vsel %vm3317, %v2869, %v3214
  %v3399 = vsel %vm3317, %v2870, %v3216
  %v3400 = vsel %vm3317, %v2871, %v3218
  %v3401 = vsel %vm3317, %v2872, %v3220
  %v3402 = vsel %vm3317, %v2873, %v3222
  %v3403 = vsel %vm3317, %v2874, %v3224
  %v3404 = vsel %vm3317, %v2875, %v3226
  %v3405 = vsel %vm3317, %v2876, %v3228
  %vm3406 = vcmask 31744
  %3407 = vst.msk [vmem:[%s4] sm:$0xff] %vm3406, %v3318
  %3408 = vst.msk [vmem:[%s4 + $0x8] sm:$0xff] %vm3406, %v3319
  %3409 = vst.msk [vmem:[%s4 + $0x10] sm:$0xff] %vm3406, %v3320
  %3410 = vst.msk [vmem:[%s4 + $0x18] sm:$0xff] %vm3406, %v3321
  %3411 = vst.msk [vmem:[%s4 + $0x20] sm:$0xff] %vm3406, %v3322
  %3412 = vst.msk [vmem:[%s4 + $0x28] sm:$0xff] %vm3406, %v3323
  %3413 = vst.msk [vmem:[%s4 + $0x30] sm:$0xff] %vm3406, %v3324
  %3414 = vst.msk [vmem:[%s4 + $0x38] sm:$0xff] %vm3406, %v3325
  %3415 = vst.msk [vmem:[%s4 + $0x40] sm:$0xff] %vm3406, %v3326
  %3416 = vst.msk [vmem:[%s4 + $0x48] sm:$0xff] %vm3406, %v3327
  %3417 = vst.msk [vmem:[%s4 + $0x50] sm:$0xff] %vm3406, %v3328
  %3418 = vst.msk [vmem:[%s4 + $0x58] sm:$0xff] %vm3406, %v3329
  %3419 = vst.msk [vmem:[%s4 + $0x60] sm:$0xff] %vm3406, %v3330
  %3420 = vst.msk [vmem:[%s4 + $0x68] sm:$0xff] %vm3406, %v3331
  %3421 = vst.msk [vmem:[%s4 + $0x70] sm:$0xff] %vm3406, %v3332
  %3422 = vst.msk [vmem:[%s4 + $0x78] sm:$0xff] %vm3406, %v3333
  %3423 = vst.msk [vmem:[%s4 + $0x80] sm:$0xff] %vm3406, %v3334
  %3424 = vst.msk [vmem:[%s4 + $0x88] sm:$0xff] %vm3406, %v3335
  %3425 = vst.msk [vmem:[%s4 + $0x90] sm:$0xff] %vm3406, %v3336
  %3426 = vst.msk [vmem:[%s4 + $0x98] sm:$0xff] %vm3406, %v3337
  %3427 = vst.msk [vmem:[%s4 + $0xa0] sm:$0xff] %vm3406, %v3338
  %3428 = vst.msk [vmem:[%s4 + $0xa8] sm:$0xff] %vm3406, %v3339
  %3429 = vst.msk [vmem:[%s4 + $0xb0] sm:$0xff] %vm3406, %v3340
  %3430 = vst.msk [vmem:[%s4 + $0xb8] sm:$0xff] %vm3406, %v3341
  %3431 = vst.msk [vmem:[%s4 + $0xc0] sm:$0xff] %vm3406, %v3342
  %3432 = vst.msk [vmem:[%s4 + $0xc8] sm:$0xff] %vm3406, %v3343
  %3433 = vst.msk [vmem:[%s4 + $0xd0] sm:$0xff] %vm3406, %v3344
  %3434 = vst.msk [vmem:[%s4 + $0xd8] sm:$0xff] %vm3406, %v3345
  %3435 = vst.msk [vmem:[%s4 + $0xe0] sm:$0xff] %vm3406, %v3346
  %3436 = vst.msk [vmem:[%s4 + $0xe8] sm:$0xff] %vm3406, %v3347
  %3437 = vst.msk [vmem:[%s4 + $0xf0] sm:$0xff] %vm3406, %v3348
  %3438 = vst.msk [vmem:[%s4 + $0xf8] sm:$0xff] %vm3406, %v3349
  %3439 = vst.msk [vmem:[%s4 + $0x100] sm:$0xff] %vm3406, %v3350
  %3440 = vst.msk [vmem:[%s4 + $0x108] sm:$0xff] %vm3406, %v3351
  %3441 = vst.msk [vmem:[%s4 + $0x110] sm:$0xff] %vm3406, %v3352
  %3442 = vst.msk [vmem:[%s4 + $0x118] sm:$0xff] %vm3406, %v3353
  %3443 = vst.msk [vmem:[%s4 + $0x120] sm:$0xff] %vm3406, %v3354
  %3444 = vst.msk [vmem:[%s4 + $0x128] sm:$0xff] %vm3406, %v3355
  %3445 = vst.msk [vmem:[%s4 + $0x130] sm:$0xff] %vm3406, %v3356
  %3446 = vst.msk [vmem:[%s4 + $0x138] sm:$0xff] %vm3406, %v3357
  %3447 = vst.msk [vmem:[%s4 + $0x140] sm:$0xff] %vm3406, %v3358
  %3448 = vst.msk [vmem:[%s4 + $0x148] sm:$0xff] %vm3406, %v3359
  %3449 = vst.msk [vmem:[%s4 + $0x150] sm:$0xff] %vm3406, %v3360
  %3450 = vst.msk [vmem:[%s4 + $0x158] sm:$0xff] %vm3406, %v3361
  %3451 = vst.msk [vmem:[%s4 + $0x160] sm:$0xff] %vm3406, %v3362
  %3452 = vst.msk [vmem:[%s4 + $0x168] sm:$0xff] %vm3406, %v3363
  %3453 = vst.msk [vmem:[%s4 + $0x170] sm:$0xff] %vm3406, %v3364
  %3454 = vst.msk [vmem:[%s4 + $0x178] sm:$0xff] %vm3406, %v3365
  %3455 = vst.msk [vmem:[%s4 + $0x180] sm:$0xff] %vm3406, %v3366
  %3456 = vst.msk [vmem:[%s4 + $0x188] sm:$0xff] %vm3406, %v3367
  %3457 = vst.msk [vmem:[%s4 + $0x190] sm:$0xff] %vm3406, %v3368
  %3458 = vst.msk [vmem:[%s4 + $0x198] sm:$0xff] %vm3406, %v3369
  %3459 = vst.msk [vmem:[%s4 + $0x1a0] sm:$0xff] %vm3406, %v3370
  %3460 = vst.msk [vmem:[%s4 + $0x1a8] sm:$0xff] %vm3406, %v3371
  %3461 = vst.msk [vmem:[%s4 + $0x1b0] sm:$0xff] %vm3406, %v3372
  %3462 = vst.msk [vmem:[%s4 + $0x1b8] sm:$0xff] %vm3406, %v3373
  %3463 = vst.msk [vmem:[%s4 + $0x1c0] sm:$0xff] %vm3406, %v3374
  %3464 = vst.msk [vmem:[%s4 + $0x1c8] sm:$0xff] %vm3406, %v3375
  %3465 = vst.msk [vmem:[%s4 + $0x1d0] sm:$0xff] %vm3406, %v3376
  %3466 = vst.msk [vmem:[%s4 + $0x1d8] sm:$0xff] %vm3406, %v3377
  %3467 = vst.msk [vmem:[%s4 + $0x1e0] sm:$0xff] %vm3406, %v3378
  %3468 = vst.msk [vmem:[%s4 + $0x1e8] sm:$0xff] %vm3406, %v3379
  %3469 = vst.msk [vmem:[%s4 + $0x1f0] sm:$0xff] %vm3406, %v3380
  %3470 = vst.msk [vmem:[%s4 + $0x1f8] sm:$0xff] %vm3406, %v3381
  %3471 = vst.msk [vmem:[%s4 + $0x200] sm:$0xff] %vm3406, %v3382
  %3472 = vst.msk [vmem:[%s4 + $0x208] sm:$0xff] %vm3406, %v3383
  %3473 = vst.msk [vmem:[%s4 + $0x210] sm:$0xff] %vm3406, %v3384
  %3474 = vst.msk [vmem:[%s4 + $0x218] sm:$0xff] %vm3406, %v3385
  %3475 = vst.msk [vmem:[%s4 + $0x220] sm:$0xff] %vm3406, %v3386
  %3476 = vst.msk [vmem:[%s4 + $0x228] sm:$0xff] %vm3406, %v3387
  %3477 = vst.msk [vmem:[%s4 + $0x230] sm:$0xff] %vm3406, %v3388
  %3478 = vst.msk [vmem:[%s4 + $0x238] sm:$0xff] %vm3406, %v3389
  %3479 = vst.msk [vmem:[%s4 + $0x240] sm:$0xff] %vm3406, %v3390
  %3480 = vst.msk [vmem:[%s4 + $0x248] sm:$0xff] %vm3406, %v3391
  %3481 = vst.msk [vmem:[%s4 + $0x250] sm:$0xff] %vm3406, %v3392
  %3482 = vst.msk [vmem:[%s4 + $0x258] sm:$0xff] %vm3406, %v3393
  %3483 = vst.msk [vmem:[%s4 + $0x260] sm:$0xff] %vm3406, %v3394
  %3484 = vst.msk [vmem:[%s4 + $0x268] sm:$0xff] %vm3406, %v3395
  %3485 = vst.msk [vmem:[%s4 + $0x270] sm:$0xff] %vm3406, %v3396
  %3486 = vst.msk [vmem:[%s4 + $0x278] sm:$0xff] %vm3406, %v3397
  %3487 = vst.msk [vmem:[%s4 + $0x280] sm:$0xff] %vm3406, %v3398
  %3488 = vst.msk [vmem:[%s4 + $0x288] sm:$0xff] %vm3406, %v3399
  %3489 = vst.msk [vmem:[%s4 + $0x290] sm:$0xff] %vm3406, %v3400
  %3490 = vst.msk [vmem:[%s4 + $0x298] sm:$0xff] %vm3406, %v3401
  %3491 = vst.msk [vmem:[%s4 + $0x2a0] sm:$0xff] %vm3406, %v3402
  %3492 = vst.msk [vmem:[%s4 + $0x2a8] sm:$0xff] %vm3406, %v3403
  %3493 = vst.msk [vmem:[%s4 + $0x2b0] sm:$0xff] %vm3406, %v3404
  %3494 = vst.msk [vmem:[%s4 + $0x2b8] sm:$0xff] %vm3406, %v3405
  // Predicated region
  $region14: #{ssd_box_head_forward.3} parent=0 // pred_check
    _
  $region15: #{ssd_box_head_forward.3} parent=0 // pred_check_branch
    %3496 = sbr.rel (0) target = $region17
  $region16: #{ssd_box_head_forward.3} parent=0 // pred_region
    _
  $region17: #{ssd_box_head_forward.3} parent=0 // pred_fallthru
    _
  // Predicated region
  $region18: #{ssd_box_head_forward.3} parent=0 // pred_check
    _
  $region19: #{ssd_box_head_forward.3} parent=0 // pred_check_branch
    %3498 = sbr.rel (0) target = $region21
  $region20: #{ssd_box_head_forward.3} parent=0 // pred_region
    _
  $region21: #{ssd_box_head_forward.3} parent=0 // pred_fallthru
    _
  // Predicated region
  $region22: #{ssd_box_head_forward.3} parent=0 // pred_check
    _
  $region23: #{ssd_box_head_forward.3} parent=0 // pred_check_branch
    %3500 = sbr.rel (0) target = $region25
  $region24: #{ssd_box_head_forward.3} parent=0 // pred_region
    _
  $region25: #{ssd_box_head_forward.3} parent=0 // pred_fallthru
    _
  // Predicated region
  $region26: #{ssd_box_head_forward.3} parent=0 // pred_check
    _
  $region27: #{ssd_box_head_forward.3} parent=0 // pred_check_branch
    %3502 = sbr.rel (0) target = $region29
  $region28: #{ssd_box_head_forward.3} parent=0 // pred_region
    _
  $region29: #{ssd_box_head_forward.3} parent=0 // pred_fallthru
    _

</llo_original>
